<compile_context>
chip_gen: v7x
topology: tpu7x:2x2x1
jax: 0.10.0
libtpu: 0.0.40
codegen_flags: <defaults>
</compile_context>

<pallas_src>
import jax
import jax.numpy as jnp
import numpy as np
from jax import lax
from jax.experimental import pallas as pl
from jax.experimental.pallas import tpu as pltpu

LN_EPS = 1e-5  # nn.LayerNorm default


def residual_rnn_kernel(z_ref, gamma_ref, beta_ref,
                        wih_ref, bih_ref, whh_f_ref, whh_b_ref,
                        wfc_ref, bfc_ref,
                        out_ref,
                        xg_f_ref, xg_b_ref, hs_ref):
    T, TN, E = z_ref.shape          # time-major block: (n_across, tile_n, emb_dim)
    H = whh_f_ref.shape[0]
    G = 4 * H                       # per-direction gate width
    H2, H3 = 2 * H, 3 * H

    # ---- LayerNorm over the embedding dim (f32) ----
    z0 = z_ref[...].astype(jnp.float32)                      # (T, tn, E)
    mean = jnp.mean(z0, axis=-1, keepdims=True)
    var = jnp.mean(jnp.square(z0 - mean), axis=-1, keepdims=True)
    zn = (z0 - mean) * lax.rsqrt(var + LN_EPS) * gamma_ref[...] + beta_ref[...]

    # ---- merged hoisted input projection: ONE (T*tn, E) @ (E, 8H) bf16 matmul ----
    znb = zn.astype(jnp.bfloat16).reshape(T * TN, E)
    xg = jnp.dot(znb, wih_ref[...], preferred_element_type=jnp.float32) + bih_ref[...]
    xg_f_ref[...] = xg[:, :G].reshape(T, TN, G)               # lane-aligned halves
    xg_b_ref[...] = xg[:, G:].reshape(T, TN, G)

    whh_f = whh_f_ref[...]          # (H, 4H) bf16, loaded once
    whh_b = whh_b_ref[...]

    def lstm_cell(gates, c_prev):
        # gate columns pre-ordered [i, f, o | g] at wrapper time:
        # one contiguous sigmoid slab + one contiguous tanh slab per step.
        sig = jax.nn.sigmoid(gates[:, :H3])
        g = jnp.tanh(gates[:, H3:])
        i = sig[:, :H]
        f = sig[:, H:H2]
        o = sig[:, H2:H3]
        c_new = f * c_prev + i * g
        h_new = o * jnp.tanh(c_new)
        return h_new, c_new

    # ---- fused fwd/bwd recurrence: only h @ W_hh remains on the serial path ----
    def step(t, carry):
        h_f, c_f, h_b, c_b = carry
        tb = T - 1 - t
        g_f = xg_f_ref[t] + jnp.dot(h_f.astype(jnp.bfloat16), whh_f,
                                    preferred_element_type=jnp.float32)
        g_b = xg_b_ref[tb] + jnp.dot(h_b.astype(jnp.bfloat16), whh_b,
                                     preferred_element_type=jnp.float32)
        h_f, c_f = lstm_cell(g_f, c_f)
        h_b, c_b = lstm_cell(g_b, c_b)
        # bf16 history stores (lossless for the result: only consumed as bf16),
        # fwd and bwd packed into one (T, tn, 2H) scratch for the fused epilogue.
        hs_ref[t, :, :H] = h_f.astype(jnp.bfloat16)
        hs_ref[tb, :, H:] = h_b.astype(jnp.bfloat16)
        return h_f, c_f, h_b, c_b

    zeros = jnp.zeros((TN, H), jnp.float32)
    lax.fori_loop(0, T, step, (zeros, zeros, zeros, zeros),
                  unroll=(True if T <= 16 else 4))

    # ---- fused fc + bias + residual epilogue: ONE (T*tn, 2H) @ (2H, E) matmul ----
    h_all = hs_ref[...].reshape(T * TN, 2 * H)                 # already bf16
    proj = jnp.dot(h_all, wfc_ref[...], preferred_element_type=jnp.float32)
    out = proj.reshape(T, TN, E) + bfc_ref[...] + z_ref[...].astype(jnp.float32)
    out_ref[...] = out.astype(out_ref.dtype)


def _round_up(x, m):
    return ((x + m - 1) // m) * m


def _pick_tile_n(N, T, E, H, block_n):
    """Generation-aware tile-N + VMEM budget (guarded hardware query)."""
    try:
        vmem_cap = int(pltpu.get_tpu_info().vmem_capacity_bytes)
    except Exception:
        vmem_cap = 64 * 1024 * 1024        # conservative v7x-style fallback
    budget = int(vmem_cap * 0.6)

    G = 4 * H
    lane = lambda d: _round_up(d, 128)     # account for lane padding of refs

    def footprint(tn):
        io = 2 * 2 * T * tn * lane(E) * 4              # z + out blocks, double-buffered
        xg = 2 * T * tn * lane(G) * 4                  # f32 x-gate scratches
        hs = T * tn * lane(2 * H) * 2                  # bf16 h history
        w = 2 * 2 * (E * 2 * G + 2 * H * G + 2 * H * E)  # bf16 weights, double-buffered
        return io + xg + hs + w + (2 << 20)            # + slack

    # Prefer >= 2 grid points so ("parallel",) can shard across TensorCores,
    # round to 16 sublanes (bf16 tiling), then shrink until it fits VMEM.
    tn = max(16, min(_round_up(block_n, 16), _round_up(-(-N // 2), 16)))
    while tn > 16 and footprint(tn) > budget:
        tn -= 16
    return tn, footprint(tn), vmem_cap


def residual_rnn_forward(z, params, *, block_n=128):
    B, U, A, E = z.shape
    N, T = B * U, A
    H = params['whh_f'].shape[0]
    G = 4 * H

    tn, needed_bytes, vmem_cap = _pick_tile_n(N, T, E, H, block_n)
    n_pad = pl.cdiv(N, tn) * tn
    vmem_limit = int(min(vmem_cap, max(needed_bytes, 32 * 1024 * 1024)))

    # Batch trick + time-major layout so per-step data is contiguous.
    # (Kept wrapper-side: the in-kernel (1,0,2) transpose is a lowering risk and
    #  the kernel is compute/latency-bound at these arithmetic intensities.)
    z_tm = jnp.transpose(z.reshape(N, T, E), (1, 0, 2))      # (T, N, E)
    if n_pad != N:
        z_tm = jnp.pad(z_tm, ((0, 0), (0, n_pad - N), (0, 0)))

    # --- wrapper-side weight prep (one-time, tiny) ---
    def reorder(w):  # gate columns [i | f | g | o] -> [i | f | o | g]
        return jnp.concatenate([w[..., :2 * H], w[..., 3 * H:], w[..., 2 * H:3 * H]],
                               axis=-1)

    bf16 = lambda w: w.astype(jnp.bfloat16)
    wih_cat = bf16(jnp.concatenate([reorder(params['wih_f']),
                                    reorder(params['wih_b'])], axis=-1))   # (E, 8H)
    b_cat = jnp.concatenate([reorder(params['b_f']),
                             reorder(params['b_b'])], axis=-1)             # (1, 8H)
    whh_f = bf16(reorder(params['whh_f']))                                 # (H, 4H)
    whh_b = bf16(reorder(params['whh_b']))
    wfc = bf16(params['wfc'])                                              # (2H, E)

    def full_spec(shape):
        return pl.BlockSpec(shape, lambda i, _n=len(shape): (0,) * _n)

    data_spec = pl.BlockSpec((T, tn, E), lambda i: (0, i, 0))

    out_tm = pl.pallas_call(
        residual_rnn_kernel,
        out_shape=jax.ShapeDtypeStruct((T, n_pad, E), z.dtype),
        grid=(n_pad // tn,),
        in_specs=[data_spec,
                  full_spec((1, E)), full_spec((1, E)),
                  full_spec((E, 2 * G)), full_spec((1, 2 * G)),
                  full_spec((H, G)), full_spec((H, G)),
                  full_spec((2 * H, E)), full_spec((1, E))],
        out_specs=data_spec,
        scratch_shapes=[
            pltpu.VMEM((T, tn, G), jnp.float32),       # hoisted x-gates, forward
            pltpu.VMEM((T, tn, G), jnp.float32),       # hoisted x-gates, backward
            pltpu.VMEM((T, tn, 2 * H), jnp.bfloat16),  # packed fwd|bwd h history
        ],
        compiler_params=pltpu.CompilerParams(
            dimension_semantics=("parallel",),
            vmem_limit_bytes=vmem_limit),
    )(z_tm,
      params['gamma'], params['beta'],
      wih_cat, b_cat, whh_f, whh_b, wfc, params['bfc'])

    out = jnp.transpose(out_tm[:, :N, :], (1, 0, 2)).reshape(B, U, A, E)
    return out


def init_params(key, emb_dim, rnn_dim):
    """Deterministic synthetic parameters matching the PyTorch module's shapes
    (LSTM weights pre-transposed so the kernel right-multiplies)."""
    ks = jax.random.split(key, 8)
    kr = 1.0 / np.sqrt(rnn_dim)
    kf = 1.0 / np.sqrt(2 * rnn_dim)
    u = lambda k, shape, s: jax.random.uniform(k, shape, jnp.float32, -s, s)
    return dict(
        gamma=jnp.ones((1, emb_dim), jnp.float32),
        beta=jnp.zeros((1, emb_dim), jnp.float32),
        wih_f=u(ks[0], (emb_dim, 4 * rnn_dim), kr),   # weight_ih_l0.T
        whh_f=u(ks[1], (rnn_dim, 4 * rnn_dim), kr),   # weight_hh_l0.T
        b_f=u(ks[2], (1, 4 * rnn_dim), kr),           # bias_ih_l0 + bias_hh_l0
        wih_b=u(ks[3], (emb_dim, 4 * rnn_dim), kr),   # reverse direction
        whh_b=u(ks[4], (rnn_dim, 4 * rnn_dim), kr),
        b_b=u(ks[5], (1, 4 * rnn_dim), kr),
        wfc=u(ks[6], (2 * rnn_dim, emb_dim), kf),     # fc.weight.T
        bfc=u(ks[7], (1, emb_dim), kf),               # fc.bias
    )


def reference_forward(z, params):
    """Pure-JAX f32 reference mirroring the PyTorch forward (for verification)."""
    B, U, A, E = z.shape
    H = params['whh_f'].shape[0]
    z0 = z
    mean = jnp.mean(z, axis=-1, keepdims=True)
    var = jnp.mean(jnp.square(z - mean), axis=-1, keepdims=True)
    zn = (z - mean) / jnp.sqrt(var + LN_EPS) * params['gamma'][0] + params['beta'][0]
    zn = zn.reshape(B * U, A, E)

    def run_dir(wih, whh, b, reverse):
        xg = jnp.einsum('nte,eg->ntg', zn, wih) + b

        def step(carry, xg_t):
            h, c = carry
            g = xg_t + h @ whh
            i = jax.nn.sigmoid(g[:, :H]); f = jax.nn.sigmoid(g[:, H:2 * H])
            gg = jnp.tanh(g[:, 2 * H:3 * H]); o = jax.nn.sigmoid(g[:, 3 * H:])
            c = f * c + i * gg
            h = o * jnp.tanh(c)
            return (h, c), h

        h0 = jnp.zeros((B * U, H), jnp.float32)
        _, hs = lax.scan(step, (h0, h0), jnp.swapaxes(xg, 0, 1), reverse=reverse)
        return jnp.swapaxes(hs, 0, 1)

    hf = run_dir(params['wih_f'], params['whh_f'], params['b_f'], False)
    hb = run_dir(params['wih_b'], params['whh_b'], params['b_b'], True)
    h = jnp.concatenate([hf, hb], axis=-1)
    out = h @ params['wfc'] + params['bfc'][0]
    return out.reshape(B, U, A, E) + z0


if __name__ == "__main__":
    batch, n_uncrossed, n_across, emb_dim, rnn_dim = 2, 4, 8, 16, 32
    key = jax.random.PRNGKey(0)
    kz, kp = jax.random.split(key)
    z = jax.random.normal(kz, (batch, n_uncrossed, n_across, emb_dim), jnp.float32)
    params = init_params(kp, emb_dim, rnn_dim)

    out = jax.jit(residual_rnn_forward)(z, params)
    out = jax.block_until_ready(out)

    assert out.shape == z.shape
    assert bool(jnp.all(jnp.isfinite(out)))
    ref = reference_forward(z, params)
    # bf16 matmul operands (f32 accumulation) vs. the pure-f32 reference:
    # tolerance set accordingly.
    np.testing.assert_allclose(np.asarray(out), np.asarray(ref), rtol=5e-2, atol=5e-2)
    print("KERNEL_OK")
</pallas_src>

<mosaic_0001>
module attributes {stable_mosaic.version = 11 : i64} {
  func.func @residual_rnn_kernel(%arg0: i32, %arg1: memref<8x16x16xf32, #tpu.memory_space<vmem>>, %arg2: memref<1x16xf32, #tpu.memory_space<vmem>>, %arg3: memref<1x16xf32, #tpu.memory_space<vmem>>, %arg4: memref<16x256xbf16, #tpu.memory_space<vmem>>, %arg5: memref<1x256xf32, #tpu.memory_space<vmem>>, %arg6: memref<32x128xbf16, #tpu.memory_space<vmem>>, %arg7: memref<32x128xbf16, #tpu.memory_space<vmem>>, %arg8: memref<64x16xbf16, #tpu.memory_space<vmem>>, %arg9: memref<1x16xf32, #tpu.memory_space<vmem>>, %arg10: memref<8x16x16xf32, #tpu.memory_space<vmem>>, %arg11: memref<8x16x128xf32, #tpu.memory_space<vmem>>, %arg12: memref<8x16x128xf32, #tpu.memory_space<vmem>>, %arg13: memref<8x16x64xbf16, #tpu.memory_space<vmem>>) attributes {dimension_semantics = [#tpu.dimension_semantics<parallel>], iteration_bounds = array<i64: 1>, scalar_prefetch = 0 : i64, scratch_operands = 3 : i64, tpu.core_type = #tpu.core_type<tc>, window_params = [{transform_indices = @transform_0, window_bounds = array<i64: 8, 16, 16>}, {pipeline_mode = #tpu.pipeline_mode<synchronous>, transform_indices = @transform_1, window_bounds = array<i64: 1, 16>}, {pipeline_mode = #tpu.pipeline_mode<synchronous>, transform_indices = @transform_2, window_bounds = array<i64: 1, 16>}, {pipeline_mode = #tpu.pipeline_mode<synchronous>, transform_indices = @transform_3, window_bounds = array<i64: 16, 256>}, {pipeline_mode = #tpu.pipeline_mode<synchronous>, transform_indices = @transform_4, window_bounds = array<i64: 1, 256>}, {pipeline_mode = #tpu.pipeline_mode<synchronous>, transform_indices = @transform_5, window_bounds = array<i64: 32, 128>}, {pipeline_mode = #tpu.pipeline_mode<synchronous>, transform_indices = @transform_6, window_bounds = array<i64: 32, 128>}, {pipeline_mode = #tpu.pipeline_mode<synchronous>, transform_indices = @transform_7, window_bounds = array<i64: 64, 16>}, {pipeline_mode = #tpu.pipeline_mode<synchronous>, transform_indices = @transform_8, window_bounds = array<i64: 1, 16>}, {transform_indices = @transform_9, window_bounds = array<i64: 8, 16, 16>}]} {
    %c0 = arith.constant 0 : index
    %c0_0 = arith.constant 0 : index
    %c0_1 = arith.constant 0 : index
    %0 = vector.load %arg1[%c0, %c0_0, %c0_1] : memref<8x16x16xf32, #tpu.memory_space<vmem>>, vector<8x16x16xf32>
    %cst = arith.constant dense<0.000000e+00> : vector<8x16xf32>
    %1 = vector.multi_reduction <add>, %0, %cst [2] : vector<8x16x16xf32> to vector<8x16xf32>
    %2 = vector.shape_cast %1 : vector<8x16xf32> to vector<8x16x1xf32>
    %cst_2 = arith.constant 1.600000e+01 : f32
    %3 = vector.broadcast %cst_2 : f32 to vector<8x16x1xf32>
    %4 = arith.divf %2, %3 : vector<8x16x1xf32>
    %5 = vector.broadcast %4 : vector<8x16x1xf32> to vector<8x16x16xf32>
    %6 = arith.subf %0, %5 : vector<8x16x16xf32>
    %7 = arith.mulf %6, %6 : vector<8x16x16xf32>
    %cst_3 = arith.constant dense<0.000000e+00> : vector<8x16xf32>
    %8 = vector.multi_reduction <add>, %7, %cst_3 [2] : vector<8x16x16xf32> to vector<8x16xf32>
    %9 = vector.shape_cast %8 : vector<8x16xf32> to vector<8x16x1xf32>
    %cst_4 = arith.constant 1.600000e+01 : f32
    %10 = vector.broadcast %cst_4 : f32 to vector<8x16x1xf32>
    %11 = arith.divf %9, %10 : vector<8x16x1xf32>
    %12 = vector.broadcast %4 : vector<8x16x1xf32> to vector<8x16x16xf32>
    %13 = arith.subf %0, %12 : vector<8x16x16xf32>
    %cst_5 = arith.constant 9.99999974E-6 : f32
    %14 = vector.broadcast %cst_5 : f32 to vector<8x16x1xf32>
    %15 = arith.addf %11, %14 : vector<8x16x1xf32>
    %16 = math.rsqrt %15 : vector<8x16x1xf32>
    %17 = vector.broadcast %16 : vector<8x16x1xf32> to vector<8x16x16xf32>
    %18 = arith.mulf %13, %17 : vector<8x16x16xf32>
    %c0_6 = arith.constant 0 : index
    %c0_7 = arith.constant 0 : index
    %19 = vector.load %arg2[%c0_6, %c0_7] : memref<1x16xf32, #tpu.memory_space<vmem>>, vector<1x16xf32>
    %20 = vector.shape_cast %19 : vector<1x16xf32> to vector<1x1x16xf32>
    %21 = vector.broadcast %20 : vector<1x1x16xf32> to vector<8x16x16xf32>
    %22 = arith.mulf %18, %21 : vector<8x16x16xf32>
    %c0_8 = arith.constant 0 : index
    %c0_9 = arith.constant 0 : index
    %23 = vector.load %arg3[%c0_8, %c0_9] : memref<1x16xf32, #tpu.memory_space<vmem>>, vector<1x16xf32>
    %24 = vector.shape_cast %23 : vector<1x16xf32> to vector<1x1x16xf32>
    %25 = vector.broadcast %24 : vector<1x1x16xf32> to vector<8x16x16xf32>
    %26 = arith.addf %22, %25 : vector<8x16x16xf32>
    %27 = arith.truncf %26 : vector<8x16x16xf32> to vector<8x16x16xbf16>
    %28 = vector.shape_cast %27 : vector<8x16x16xbf16> to vector<128x16xbf16>
    %c0_10 = arith.constant 0 : index
    %c0_11 = arith.constant 0 : index
    %29 = vector.load %arg4[%c0_10, %c0_11] : memref<16x256xbf16, #tpu.memory_space<vmem>>, vector<16x256xbf16>
    %cst_12 = arith.constant dense<0.000000e+00> : vector<128x256xf32>
    %30 = tpu.matmul %28, %29, %cst_12 {dimension_numbers = #tpu.dot_dimension_numbers<[1], [0], [0], [1], [0, 0, 1, 1], [], []>} : vector<128x16xbf16>, vector<16x256xbf16>, vector<128x256xf32> -> vector<128x256xf32>
    %c0_13 = arith.constant 0 : index
    %c0_14 = arith.constant 0 : index
    %31 = vector.load %arg5[%c0_13, %c0_14] : memref<1x256xf32, #tpu.memory_space<vmem>>, vector<1x256xf32>
    %32 = vector.broadcast %31 : vector<1x256xf32> to vector<128x256xf32>
    %33 = arith.addf %30, %32 : vector<128x256xf32>
    %34 = vector.extract_strided_slice %33 {offsets = [0, 0], sizes = [128, 128], strides = [1, 1]} : vector<128x256xf32> to vector<128x128xf32>
    %35 = vector.shape_cast %34 : vector<128x128xf32> to vector<8x16x128xf32>
    %c0_15 = arith.constant 0 : index
    %c0_16 = arith.constant 0 : index
    %c0_17 = arith.constant 0 : index
    %36 = vector.load %arg11[%c0_15, %c0_16, %c0_17] : memref<8x16x128xf32, #tpu.memory_space<vmem>>, vector<8x16x128xf32>
    tpu.vector_store %arg11[%c0_15, %c0_16, %c0_17], %35 {strides = array<i32>} : memref<8x16x128xf32, #tpu.memory_space<vmem>>, vector<8x16x128xf32>,
    %37 = vector.extract_strided_slice %33 {offsets = [0, 128], sizes = [128, 128], strides = [1, 1]} : vector<128x256xf32> to vector<128x128xf32>
    %38 = vector.shape_cast %37 : vector<128x128xf32> to vector<8x16x128xf32>
    %c0_18 = arith.constant 0 : index
    %c0_19 = arith.constant 0 : index
    %c0_20 = arith.constant 0 : index
    %39 = vector.load %arg12[%c0_18, %c0_19, %c0_20] : memref<8x16x128xf32, #tpu.memory_space<vmem>>, vector<8x16x128xf32>
    tpu.vector_store %arg12[%c0_18, %c0_19, %c0_20], %38 {strides = array<i32>} : memref<8x16x128xf32, #tpu.memory_space<vmem>>, vector<8x16x128xf32>,
    %c0_21 = arith.constant 0 : index
    %c0_22 = arith.constant 0 : index
    %40 = vector.load %arg6[%c0_21, %c0_22] : memref<32x128xbf16, #tpu.memory_space<vmem>>, vector<32x128xbf16>
    %c0_23 = arith.constant 0 : index
    %c0_24 = arith.constant 0 : index
    %41 = vector.load %arg7[%c0_23, %c0_24] : memref<32x128xbf16, #tpu.memory_space<vmem>>, vector<32x128xbf16>
    %cst_25 = arith.constant 0.000000e+00 : f32
    %42 = vector.broadcast %cst_25 : f32 to vector<16x32xf32>
    %c0_i32 = arith.constant 0 : i32
    %c7_i32 = arith.constant 7 : i32
    %43 = arith.subi %c7_i32, %c0_i32 : i32
    %44 = arith.index_cast %c0_i32 : i32 to index
    %c0_26 = arith.constant 0 : index
    %c0_27 = arith.constant 0 : index
    %45 = vector.load %arg11[%44, %c0_26, %c0_27] : memref<8x16x128xf32, #tpu.memory_space<vmem>>, vector<1x16x128xf32>
    %46 = vector.shape_cast %45 : vector<1x16x128xf32> to vector<16x128xf32>
    %47 = arith.truncf %42 : vector<16x32xf32> to vector<16x32xbf16>
    %cst_28 = arith.constant dense<0.000000e+00> : vector<16x128xf32>
    %48 = tpu.matmul %47, %40, %cst_28 {dimension_numbers = #tpu.dot_dimension_numbers<[1], [0], [0], [1], [0, 0, 1, 1], [], []>} : vector<16x32xbf16>, vector<32x128xbf16>, vector<16x128xf32> -> vector<16x128xf32>
    %49 = arith.addf %46, %48 : vector<16x128xf32>
    %50 = arith.index_cast %43 : i32 to index
    %c0_29 = arith.constant 0 : index
    %c0_30 = arith.constant 0 : index
    %51 = vector.load %arg12[%50, %c0_29, %c0_30] : memref<8x16x128xf32, #tpu.memory_space<vmem>>, vector<1x16x128xf32>
    %52 = vector.shape_cast %51 : vector<1x16x128xf32> to vector<16x128xf32>
    %53 = arith.truncf %42 : vector<16x32xf32> to vector<16x32xbf16>
    %cst_31 = arith.constant dense<0.000000e+00> : vector<16x128xf32>
    %54 = tpu.matmul %53, %41, %cst_31 {dimension_numbers = #tpu.dot_dimension_numbers<[1], [0], [0], [1], [0, 0, 1, 1], [], []>} : vector<16x32xbf16>, vector<32x128xbf16>, vector<16x128xf32> -> vector<16x128xf32>
    %55 = arith.addf %52, %54 : vector<16x128xf32>
    %56 = vector.extract_strided_slice %49 {offsets = [0, 0], sizes = [16, 96], strides = [1, 1]} : vector<16x128xf32> to vector<16x96xf32>
    %57 = arith.negf %56 : vector<16x96xf32>
    %58 = math.exp %57 : vector<16x96xf32>
    %cst_32 = arith.constant 1.000000e+00 : f32
    %59 = vector.broadcast %cst_32 : f32 to vector<16x96xf32>
    %60 = arith.addf %59, %58 : vector<16x96xf32>
    %61 = arith.divf %59, %60 : vector<16x96xf32>
    %62 = vector.extract_strided_slice %49 {offsets = [0, 96], sizes = [16, 32], strides = [1, 1]} : vector<16x128xf32> to vector<16x32xf32>
    %63 = math.tanh %62 : vector<16x32xf32>
    %64 = vector.extract_strided_slice %61 {offsets = [0, 0], sizes = [16, 32], strides = [1, 1]} : vector<16x96xf32> to vector<16x32xf32>
    %65 = vector.extract_strided_slice %61 {offsets = [0, 32], sizes = [16, 32], strides = [1, 1]} : vector<16x96xf32> to vector<16x32xf32>
    %66 = vector.extract_strided_slice %61 {offsets = [0, 64], sizes = [16, 32], strides = [1, 1]} : vector<16x96xf32> to vector<16x32xf32>
    %67 = arith.mulf %65, %42 : vector<16x32xf32>
    %68 = arith.mulf %64, %63 : vector<16x32xf32>
    %69 = arith.addf %67, %68 : vector<16x32xf32>
    %70 = math.tanh %69 : vector<16x32xf32>
    %71 = arith.mulf %66, %70 : vector<16x32xf32>
    %72 = vector.extract_strided_slice %55 {offsets = [0, 0], sizes = [16, 96], strides = [1, 1]} : vector<16x128xf32> to vector<16x96xf32>
    %73 = arith.negf %72 : vector<16x96xf32>
    %74 = math.exp %73 : vector<16x96xf32>
    %cst_33 = arith.constant 1.000000e+00 : f32
    %75 = vector.broadcast %cst_33 : f32 to vector<16x96xf32>
    %76 = arith.addf %75, %74 : vector<16x96xf32>
    %77 = arith.divf %75, %76 : vector<16x96xf32>
    %78 = vector.extract_strided_slice %55 {offsets = [0, 96], sizes = [16, 32], strides = [1, 1]} : vector<16x128xf32> to vector<16x32xf32>
    %79 = math.tanh %78 : vector<16x32xf32>
    %80 = vector.extract_strided_slice %77 {offsets = [0, 0], sizes = [16, 32], strides = [1, 1]} : vector<16x96xf32> to vector<16x32xf32>
    %81 = vector.extract_strided_slice %77 {offsets = [0, 32], sizes = [16, 32], strides = [1, 1]} : vector<16x96xf32> to vector<16x32xf32>
    %82 = vector.extract_strided_slice %77 {offsets = [0, 64], sizes = [16, 32], strides = [1, 1]} : vector<16x96xf32> to vector<16x32xf32>
    %83 = arith.mulf %81, %42 : vector<16x32xf32>
    %84 = arith.mulf %80, %79 : vector<16x32xf32>
    %85 = arith.addf %83, %84 : vector<16x32xf32>
    %86 = math.tanh %85 : vector<16x32xf32>
    %87 = arith.mulf %82, %86 : vector<16x32xf32>
    %88 = arith.truncf %71 : vector<16x32xf32> to vector<16x32xbf16>
    %89 = arith.index_cast %c0_i32 : i32 to index
    %c0_34 = arith.constant 0 : index
    %c0_35 = arith.constant 0 : index
    %90 = vector.load %arg13[%89, %c0_34, %c0_35] : memref<8x16x64xbf16, #tpu.memory_space<vmem>>, vector<1x16x32xbf16>
    %91 = vector.shape_cast %90 : vector<1x16x32xbf16> to vector<16x32xbf16>
    %92 = vector.shape_cast %88 : vector<16x32xbf16> to vector<1x16x32xbf16>
    tpu.vector_store %arg13[%89, %c0_34, %c0_35], %92 {strides = array<i32>} : memref<8x16x64xbf16, #tpu.memory_space<vmem>>, vector<1x16x32xbf16>,
    %93 = arith.truncf %87 : vector<16x32xf32> to vector<16x32xbf16>
    %94 = arith.index_cast %43 : i32 to index
    %c0_36 = arith.constant 0 : index
    %c32 = arith.constant 32 : index
    %95 = vector.load %arg13[%94, %c0_36, %c32] : memref<8x16x64xbf16, #tpu.memory_space<vmem>>, vector<1x16x32xbf16>
    %96 = vector.shape_cast %95 : vector<1x16x32xbf16> to vector<16x32xbf16>
    %97 = vector.shape_cast %93 : vector<16x32xbf16> to vector<1x16x32xbf16>
    tpu.vector_store %arg13[%94, %c0_36, %c32], %97 {strides = array<i32>} : memref<8x16x64xbf16, #tpu.memory_space<vmem>>, vector<1x16x32xbf16>,
    %c1_i32 = arith.constant 1 : i32
    %c7_i32_37 = arith.constant 7 : i32
    %98 = arith.subi %c7_i32_37, %c1_i32 : i32
    %99 = arith.index_cast %c1_i32 : i32 to index
    %c0_38 = arith.constant 0 : index
    %c0_39 = arith.constant 0 : index
    %100 = vector.load %arg11[%99, %c0_38, %c0_39] : memref<8x16x128xf32, #tpu.memory_space<vmem>>, vector<1x16x128xf32>
    %101 = vector.shape_cast %100 : vector<1x16x128xf32> to vector<16x128xf32>
    %102 = arith.truncf %71 : vector<16x32xf32> to vector<16x32xbf16>
    %cst_40 = arith.constant dense<0.000000e+00> : vector<16x128xf32>
    %103 = tpu.matmul %102, %40, %cst_40 {dimension_numbers = #tpu.dot_dimension_numbers<[1], [0], [0], [1], [0, 0, 1, 1], [], []>} : vector<16x32xbf16>, vector<32x128xbf16>, vector<16x128xf32> -> vector<16x128xf32>
    %104 = arith.addf %101, %103 : vector<16x128xf32>
    %105 = arith.index_cast %98 : i32 to index
    %c0_41 = arith.constant 0 : index
    %c0_42 = arith.constant 0 : index
    %106 = vector.load %arg12[%105, %c0_41, %c0_42] : memref<8x16x128xf32, #tpu.memory_space<vmem>>, vector<1x16x128xf32>
    %107 = vector.shape_cast %106 : vector<1x16x128xf32> to vector<16x128xf32>
    %108 = arith.truncf %87 : vector<16x32xf32> to vector<16x32xbf16>
    %cst_43 = arith.constant dense<0.000000e+00> : vector<16x128xf32>
    %109 = tpu.matmul %108, %41, %cst_43 {dimension_numbers = #tpu.dot_dimension_numbers<[1], [0], [0], [1], [0, 0, 1, 1], [], []>} : vector<16x32xbf16>, vector<32x128xbf16>, vector<16x128xf32> -> vector<16x128xf32>
    %110 = arith.addf %107, %109 : vector<16x128xf32>
    %111 = vector.extract_strided_slice %104 {offsets = [0, 0], sizes = [16, 96], strides = [1, 1]} : vector<16x128xf32> to vector<16x96xf32>
    %112 = arith.negf %111 : vector<16x96xf32>
    %113 = math.exp %112 : vector<16x96xf32>
    %cst_44 = arith.constant 1.000000e+00 : f32
    %114 = vector.broadcast %cst_44 : f32 to vector<16x96xf32>
    %115 = arith.addf %114, %113 : vector<16x96xf32>
    %116 = arith.divf %114, %115 : vector<16x96xf32>
    %117 = vector.extract_strided_slice %104 {offsets = [0, 96], sizes = [16, 32], strides = [1, 1]} : vector<16x128xf32> to vector<16x32xf32>
    %118 = math.tanh %117 : vector<16x32xf32>
    %119 = vector.extract_strided_slice %116 {offsets = [0, 0], sizes = [16, 32], strides = [1, 1]} : vector<16x96xf32> to vector<16x32xf32>
    %120 = vector.extract_strided_slice %116 {offsets = [0, 32], sizes = [16, 32], strides = [1, 1]} : vector<16x96xf32> to vector<16x32xf32>
    %121 = vector.extract_strided_slice %116 {offsets = [0, 64], sizes = [16, 32], strides = [1, 1]} : vector<16x96xf32> to vector<16x32xf32>
    %122 = arith.mulf %120, %69 : vector<16x32xf32>
    %123 = arith.mulf %119, %118 : vector<16x32xf32>
    %124 = arith.addf %122, %123 : vector<16x32xf32>
    %125 = math.tanh %124 : vector<16x32xf32>
    %126 = arith.mulf %121, %125 : vector<16x32xf32>
    %127 = vector.extract_strided_slice %110 {offsets = [0, 0], sizes = [16, 96], strides = [1, 1]} : vector<16x128xf32> to vector<16x96xf32>
    %128 = arith.negf %127 : vector<16x96xf32>
    %129 = math.exp %128 : vector<16x96xf32>
    %cst_45 = arith.constant 1.000000e+00 : f32
    %130 = vector.broadcast %cst_45 : f32 to vector<16x96xf32>
    %131 = arith.addf %130, %129 : vector<16x96xf32>
    %132 = arith.divf %130, %131 : vector<16x96xf32>
    %133 = vector.extract_strided_slice %110 {offsets = [0, 96], sizes = [16, 32], strides = [1, 1]} : vector<16x128xf32> to vector<16x32xf32>
    %134 = math.tanh %133 : vector<16x32xf32>
    %135 = vector.extract_strided_slice %132 {offsets = [0, 0], sizes = [16, 32], strides = [1, 1]} : vector<16x96xf32> to vector<16x32xf32>
    %136 = vector.extract_strided_slice %132 {offsets = [0, 32], sizes = [16, 32], strides = [1, 1]} : vector<16x96xf32> to vector<16x32xf32>
    %137 = vector.extract_strided_slice %132 {offsets = [0, 64], sizes = [16, 32], strides = [1, 1]} : vector<16x96xf32> to vector<16x32xf32>
    %138 = arith.mulf %136, %85 : vector<16x32xf32>
    %139 = arith.mulf %135, %134 : vector<16x32xf32>
    %140 = arith.addf %138, %139 : vector<16x32xf32>
    %141 = math.tanh %140 : vector<16x32xf32>
    %142 = arith.mulf %137, %141 : vector<16x32xf32>
    %143 = arith.truncf %126 : vector<16x32xf32> to vector<16x32xbf16>
    %144 = arith.index_cast %c1_i32 : i32 to index
    %c0_46 = arith.constant 0 : index
    %c0_47 = arith.constant 0 : index
    %145 = vector.load %arg13[%144, %c0_46, %c0_47] : memref<8x16x64xbf16, #tpu.memory_space<vmem>>, vector<1x16x32xbf16>
    %146 = vector.shape_cast %145 : vector<1x16x32xbf16> to vector<16x32xbf16>
    %147 = vector.shape_cast %143 : vector<16x32xbf16> to vector<1x16x32xbf16>
    tpu.vector_store %arg13[%144, %c0_46, %c0_47], %147 {strides = array<i32>} : memref<8x16x64xbf16, #tpu.memory_space<vmem>>, vector<1x16x32xbf16>,
    %148 = arith.truncf %142 : vector<16x32xf32> to vector<16x32xbf16>
    %149 = arith.index_cast %98 : i32 to index
    %c0_48 = arith.constant 0 : index
    %c32_49 = arith.constant 32 : index
    %150 = vector.load %arg13[%149, %c0_48, %c32_49] : memref<8x16x64xbf16, #tpu.memory_space<vmem>>, vector<1x16x32xbf16>
    %151 = vector.shape_cast %150 : vector<1x16x32xbf16> to vector<16x32xbf16>
    %152 = vector.shape_cast %148 : vector<16x32xbf16> to vector<1x16x32xbf16>
    tpu.vector_store %arg13[%149, %c0_48, %c32_49], %152 {strides = array<i32>} : memref<8x16x64xbf16, #tpu.memory_space<vmem>>, vector<1x16x32xbf16>,
    %c2_i32 = arith.constant 2 : i32
    %c7_i32_50 = arith.constant 7 : i32
    %153 = arith.subi %c7_i32_50, %c2_i32 : i32
    %154 = arith.index_cast %c2_i32 : i32 to index
    %c0_51 = arith.constant 0 : index
    %c0_52 = arith.constant 0 : index
    %155 = vector.load %arg11[%154, %c0_51, %c0_52] : memref<8x16x128xf32, #tpu.memory_space<vmem>>, vector<1x16x128xf32>
    %156 = vector.shape_cast %155 : vector<1x16x128xf32> to vector<16x128xf32>
    %157 = arith.truncf %126 : vector<16x32xf32> to vector<16x32xbf16>
    %cst_53 = arith.constant dense<0.000000e+00> : vector<16x128xf32>
    %158 = tpu.matmul %157, %40, %cst_53 {dimension_numbers = #tpu.dot_dimension_numbers<[1], [0], [0], [1], [0, 0, 1, 1], [], []>} : vector<16x32xbf16>, vector<32x128xbf16>, vector<16x128xf32> -> vector<16x128xf32>
    %159 = arith.addf %156, %158 : vector<16x128xf32>
    %160 = arith.index_cast %153 : i32 to index
    %c0_54 = arith.constant 0 : index
    %c0_55 = arith.constant 0 : index
    %161 = vector.load %arg12[%160, %c0_54, %c0_55] : memref<8x16x128xf32, #tpu.memory_space<vmem>>, vector<1x16x128xf32>
    %162 = vector.shape_cast %161 : vector<1x16x128xf32> to vector<16x128xf32>
    %163 = arith.truncf %142 : vector<16x32xf32> to vector<16x32xbf16>
    %cst_56 = arith.constant dense<0.000000e+00> : vector<16x128xf32>
    %164 = tpu.matmul %163, %41, %cst_56 {dimension_numbers = #tpu.dot_dimension_numbers<[1], [0], [0], [1], [0, 0, 1, 1], [], []>} : vector<16x32xbf16>, vector<32x128xbf16>, vector<16x128xf32> -> vector<16x128xf32>
    %165 = arith.addf %162, %164 : vector<16x128xf32>
    %166 = vector.extract_strided_slice %159 {offsets = [0, 0], sizes = [16, 96], strides = [1, 1]} : vector<16x128xf32> to vector<16x96xf32>
    %167 = arith.negf %166 : vector<16x96xf32>
    %168 = math.exp %167 : vector<16x96xf32>
    %cst_57 = arith.constant 1.000000e+00 : f32
    %169 = vector.broadcast %cst_57 : f32 to vector<16x96xf32>
    %170 = arith.addf %169, %168 : vector<16x96xf32>
    %171 = arith.divf %169, %170 : vector<16x96xf32>
    %172 = vector.extract_strided_slice %159 {offsets = [0, 96], sizes = [16, 32], strides = [1, 1]} : vector<16x128xf32> to vector<16x32xf32>
    %173 = math.tanh %172 : vector<16x32xf32>
    %174 = vector.extract_strided_slice %171 {offsets = [0, 0], sizes = [16, 32], strides = [1, 1]} : vector<16x96xf32> to vector<16x32xf32>
    %175 = vector.extract_strided_slice %171 {offsets = [0, 32], sizes = [16, 32], strides = [1, 1]} : vector<16x96xf32> to vector<16x32xf32>
    %176 = vector.extract_strided_slice %171 {offsets = [0, 64], sizes = [16, 32], strides = [1, 1]} : vector<16x96xf32> to vector<16x32xf32>
    %177 = arith.mulf %175, %124 : vector<16x32xf32>
    %178 = arith.mulf %174, %173 : vector<16x32xf32>
    %179 = arith.addf %177, %178 : vector<16x32xf32>
    %180 = math.tanh %179 : vector<16x32xf32>
    %181 = arith.mulf %176, %180 : vector<16x32xf32>
    %182 = vector.extract_strided_slice %165 {offsets = [0, 0], sizes = [16, 96], strides = [1, 1]} : vector<16x128xf32> to vector<16x96xf32>
    %183 = arith.negf %182 : vector<16x96xf32>
    %184 = math.exp %183 : vector<16x96xf32>
    %cst_58 = arith.constant 1.000000e+00 : f32
    %185 = vector.broadcast %cst_58 : f32 to vector<16x96xf32>
    %186 = arith.addf %185, %184 : vector<16x96xf32>
    %187 = arith.divf %185, %186 : vector<16x96xf32>
    %188 = vector.extract_strided_slice %165 {offsets = [0, 96], sizes = [16, 32], strides = [1, 1]} : vector<16x128xf32> to vector<16x32xf32>
    %189 = math.tanh %188 : vector<16x32xf32>
    %190 = vector.extract_strided_slice %187 {offsets = [0, 0], sizes = [16, 32], strides = [1, 1]} : vector<16x96xf32> to vector<16x32xf32>
    %191 = vector.extract_strided_slice %187 {offsets = [0, 32], sizes = [16, 32], strides = [1, 1]} : vector<16x96xf32> to vector<16x32xf32>
    %192 = vector.extract_strided_slice %187 {offsets = [0, 64], sizes = [16, 32], strides = [1, 1]} : vector<16x96xf32> to vector<16x32xf32>
    %193 = arith.mulf %191, %140 : vector<16x32xf32>
    %194 = arith.mulf %190, %189 : vector<16x32xf32>
    %195 = arith.addf %193, %194 : vector<16x32xf32>
    %196 = math.tanh %195 : vector<16x32xf32>
    %197 = arith.mulf %192, %196 : vector<16x32xf32>
    %198 = arith.truncf %181 : vector<16x32xf32> to vector<16x32xbf16>
    %199 = arith.index_cast %c2_i32 : i32 to index
    %c0_59 = arith.constant 0 : index
    %c0_60 = arith.constant 0 : index
    %200 = vector.load %arg13[%199, %c0_59, %c0_60] : memref<8x16x64xbf16, #tpu.memory_space<vmem>>, vector<1x16x32xbf16>
    %201 = vector.shape_cast %200 : vector<1x16x32xbf16> to vector<16x32xbf16>
    %202 = vector.shape_cast %198 : vector<16x32xbf16> to vector<1x16x32xbf16>
    tpu.vector_store %arg13[%199, %c0_59, %c0_60], %202 {strides = array<i32>} : memref<8x16x64xbf16, #tpu.memory_space<vmem>>, vector<1x16x32xbf16>,
    %203 = arith.truncf %197 : vector<16x32xf32> to vector<16x32xbf16>
    %204 = arith.index_cast %153 : i32 to index
    %c0_61 = arith.constant 0 : index
    %c32_62 = arith.constant 32 : index
    %205 = vector.load %arg13[%204, %c0_61, %c32_62] : memref<8x16x64xbf16, #tpu.memory_space<vmem>>, vector<1x16x32xbf16>
    %206 = vector.shape_cast %205 : vector<1x16x32xbf16> to vector<16x32xbf16>
    %207 = vector.shape_cast %203 : vector<16x32xbf16> to vector<1x16x32xbf16>
    tpu.vector_store %arg13[%204, %c0_61, %c32_62], %207 {strides = array<i32>} : memref<8x16x64xbf16, #tpu.memory_space<vmem>>, vector<1x16x32xbf16>,
    %c3_i32 = arith.constant 3 : i32
    %c7_i32_63 = arith.constant 7 : i32
    %208 = arith.subi %c7_i32_63, %c3_i32 : i32
    %209 = arith.index_cast %c3_i32 : i32 to index
    %c0_64 = arith.constant 0 : index
    %c0_65 = arith.constant 0 : index
    %210 = vector.load %arg11[%209, %c0_64, %c0_65] : memref<8x16x128xf32, #tpu.memory_space<vmem>>, vector<1x16x128xf32>
    %211 = vector.shape_cast %210 : vector<1x16x128xf32> to vector<16x128xf32>
    %212 = arith.truncf %181 : vector<16x32xf32> to vector<16x32xbf16>
    %cst_66 = arith.constant dense<0.000000e+00> : vector<16x128xf32>
    %213 = tpu.matmul %212, %40, %cst_66 {dimension_numbers = #tpu.dot_dimension_numbers<[1], [0], [0], [1], [0, 0, 1, 1], [], []>} : vector<16x32xbf16>, vector<32x128xbf16>, vector<16x128xf32> -> vector<16x128xf32>
    %214 = arith.addf %211, %213 : vector<16x128xf32>
    %215 = arith.index_cast %208 : i32 to index
    %c0_67 = arith.constant 0 : index
    %c0_68 = arith.constant 0 : index
    %216 = vector.load %arg12[%215, %c0_67, %c0_68] : memref<8x16x128xf32, #tpu.memory_space<vmem>>, vector<1x16x128xf32>
    %217 = vector.shape_cast %216 : vector<1x16x128xf32> to vector<16x128xf32>
    %218 = arith.truncf %197 : vector<16x32xf32> to vector<16x32xbf16>
    %cst_69 = arith.constant dense<0.000000e+00> : vector<16x128xf32>
    %219 = tpu.matmul %218, %41, %cst_69 {dimension_numbers = #tpu.dot_dimension_numbers<[1], [0], [0], [1], [0, 0, 1, 1], [], []>} : vector<16x32xbf16>, vector<32x128xbf16>, vector<16x128xf32> -> vector<16x128xf32>
    %220 = arith.addf %217, %219 : vector<16x128xf32>
    %221 = vector.extract_strided_slice %214 {offsets = [0, 0], sizes = [16, 96], strides = [1, 1]} : vector<16x128xf32> to vector<16x96xf32>
    %222 = arith.negf %221 : vector<16x96xf32>
    %223 = math.exp %222 : vector<16x96xf32>
    %cst_70 = arith.constant 1.000000e+00 : f32
    %224 = vector.broadcast %cst_70 : f32 to vector<16x96xf32>
    %225 = arith.addf %224, %223 : vector<16x96xf32>
    %226 = arith.divf %224, %225 : vector<16x96xf32>
    %227 = vector.extract_strided_slice %214 {offsets = [0, 96], sizes = [16, 32], strides = [1, 1]} : vector<16x128xf32> to vector<16x32xf32>
    %228 = math.tanh %227 : vector<16x32xf32>
    %229 = vector.extract_strided_slice %226 {offsets = [0, 0], sizes = [16, 32], strides = [1, 1]} : vector<16x96xf32> to vector<16x32xf32>
    %230 = vector.extract_strided_slice %226 {offsets = [0, 32], sizes = [16, 32], strides = [1, 1]} : vector<16x96xf32> to vector<16x32xf32>
    %231 = vector.extract_strided_slice %226 {offsets = [0, 64], sizes = [16, 32], strides = [1, 1]} : vector<16x96xf32> to vector<16x32xf32>
    %232 = arith.mulf %230, %179 : vector<16x32xf32>
    %233 = arith.mulf %229, %228 : vector<16x32xf32>
    %234 = arith.addf %232, %233 : vector<16x32xf32>
    %235 = math.tanh %234 : vector<16x32xf32>
    %236 = arith.mulf %231, %235 : vector<16x32xf32>
    %237 = vector.extract_strided_slice %220 {offsets = [0, 0], sizes = [16, 96], strides = [1, 1]} : vector<16x128xf32> to vector<16x96xf32>
    %238 = arith.negf %237 : vector<16x96xf32>
    %239 = math.exp %238 : vector<16x96xf32>
    %cst_71 = arith.constant 1.000000e+00 : f32
    %240 = vector.broadcast %cst_71 : f32 to vector<16x96xf32>
    %241 = arith.addf %240, %239 : vector<16x96xf32>
    %242 = arith.divf %240, %241 : vector<16x96xf32>
    %243 = vector.extract_strided_slice %220 {offsets = [0, 96], sizes = [16, 32], strides = [1, 1]} : vector<16x128xf32> to vector<16x32xf32>
    %244 = math.tanh %243 : vector<16x32xf32>
    %245 = vector.extract_strided_slice %242 {offsets = [0, 0], sizes = [16, 32], strides = [1, 1]} : vector<16x96xf32> to vector<16x32xf32>
    %246 = vector.extract_strided_slice %242 {offsets = [0, 32], sizes = [16, 32], strides = [1, 1]} : vector<16x96xf32> to vector<16x32xf32>
    %247 = vector.extract_strided_slice %242 {offsets = [0, 64], sizes = [16, 32], strides = [1, 1]} : vector<16x96xf32> to vector<16x32xf32>
    %248 = arith.mulf %246, %195 : vector<16x32xf32>
    %249 = arith.mulf %245, %244 : vector<16x32xf32>
    %250 = arith.addf %248, %249 : vector<16x32xf32>
    %251 = math.tanh %250 : vector<16x32xf32>
    %252 = arith.mulf %247, %251 : vector<16x32xf32>
    %253 = arith.truncf %236 : vector<16x32xf32> to vector<16x32xbf16>
    %254 = arith.index_cast %c3_i32 : i32 to index
    %c0_72 = arith.constant 0 : index
    %c0_73 = arith.constant 0 : index
    %255 = vector.load %arg13[%254, %c0_72, %c0_73] : memref<8x16x64xbf16, #tpu.memory_space<vmem>>, vector<1x16x32xbf16>
    %256 = vector.shape_cast %255 : vector<1x16x32xbf16> to vector<16x32xbf16>
    %257 = vector.shape_cast %253 : vector<16x32xbf16> to vector<1x16x32xbf16>
    tpu.vector_store %arg13[%254, %c0_72, %c0_73], %257 {strides = array<i32>} : memref<8x16x64xbf16, #tpu.memory_space<vmem>>, vector<1x16x32xbf16>,
    %258 = arith.truncf %252 : vector<16x32xf32> to vector<16x32xbf16>
    %259 = arith.index_cast %208 : i32 to index
    %c0_74 = arith.constant 0 : index
    %c32_75 = arith.constant 32 : index
    %260 = vector.load %arg13[%259, %c0_74, %c32_75] : memref<8x16x64xbf16, #tpu.memory_space<vmem>>, vector<1x16x32xbf16>
    %261 = vector.shape_cast %260 : vector<1x16x32xbf16> to vector<16x32xbf16>
    %262 = vector.shape_cast %258 : vector<16x32xbf16> to vector<1x16x32xbf16>
    tpu.vector_store %arg13[%259, %c0_74, %c32_75], %262 {strides = array<i32>} : memref<8x16x64xbf16, #tpu.memory_space<vmem>>, vector<1x16x32xbf16>,
    %c4_i32 = arith.constant 4 : i32
    %c7_i32_76 = arith.constant 7 : i32
    %263 = arith.subi %c7_i32_76, %c4_i32 : i32
    %264 = arith.index_cast %c4_i32 : i32 to index
    %c0_77 = arith.constant 0 : index
    %c0_78 = arith.constant 0 : index
    %265 = vector.load %arg11[%264, %c0_77, %c0_78] : memref<8x16x128xf32, #tpu.memory_space<vmem>>, vector<1x16x128xf32>
    %266 = vector.shape_cast %265 : vector<1x16x128xf32> to vector<16x128xf32>
    %267 = arith.truncf %236 : vector<16x32xf32> to vector<16x32xbf16>
    %cst_79 = arith.constant dense<0.000000e+00> : vector<16x128xf32>
    %268 = tpu.matmul %267, %40, %cst_79 {dimension_numbers = #tpu.dot_dimension_numbers<[1], [0], [0], [1], [0, 0, 1, 1], [], []>} : vector<16x32xbf16>, vector<32x128xbf16>, vector<16x128xf32> -> vector<16x128xf32>
    %269 = arith.addf %266, %268 : vector<16x128xf32>
    %270 = arith.index_cast %263 : i32 to index
    %c0_80 = arith.constant 0 : index
    %c0_81 = arith.constant 0 : index
    %271 = vector.load %arg12[%270, %c0_80, %c0_81] : memref<8x16x128xf32, #tpu.memory_space<vmem>>, vector<1x16x128xf32>
    %272 = vector.shape_cast %271 : vector<1x16x128xf32> to vector<16x128xf32>
    %273 = arith.truncf %252 : vector<16x32xf32> to vector<16x32xbf16>
    %cst_82 = arith.constant dense<0.000000e+00> : vector<16x128xf32>
    %274 = tpu.matmul %273, %41, %cst_82 {dimension_numbers = #tpu.dot_dimension_numbers<[1], [0], [0], [1], [0, 0, 1, 1], [], []>} : vector<16x32xbf16>, vector<32x128xbf16>, vector<16x128xf32> -> vector<16x128xf32>
    %275 = arith.addf %272, %274 : vector<16x128xf32>
    %276 = vector.extract_strided_slice %269 {offsets = [0, 0], sizes = [16, 96], strides = [1, 1]} : vector<16x128xf32> to vector<16x96xf32>
    %277 = arith.negf %276 : vector<16x96xf32>
    %278 = math.exp %277 : vector<16x96xf32>
    %cst_83 = arith.constant 1.000000e+00 : f32
    %279 = vector.broadcast %cst_83 : f32 to vector<16x96xf32>
    %280 = arith.addf %279, %278 : vector<16x96xf32>
    %281 = arith.divf %279, %280 : vector<16x96xf32>
    %282 = vector.extract_strided_slice %269 {offsets = [0, 96], sizes = [16, 32], strides = [1, 1]} : vector<16x128xf32> to vector<16x32xf32>
    %283 = math.tanh %282 : vector<16x32xf32>
    %284 = vector.extract_strided_slice %281 {offsets = [0, 0], sizes = [16, 32], strides = [1, 1]} : vector<16x96xf32> to vector<16x32xf32>
    %285 = vector.extract_strided_slice %281 {offsets = [0, 32], sizes = [16, 32], strides = [1, 1]} : vector<16x96xf32> to vector<16x32xf32>
    %286 = vector.extract_strided_slice %281 {offsets = [0, 64], sizes = [16, 32], strides = [1, 1]} : vector<16x96xf32> to vector<16x32xf32>
    %287 = arith.mulf %285, %234 : vector<16x32xf32>
    %288 = arith.mulf %284, %283 : vector<16x32xf32>
    %289 = arith.addf %287, %288 : vector<16x32xf32>
    %290 = math.tanh %289 : vector<16x32xf32>
    %291 = arith.mulf %286, %290 : vector<16x32xf32>
    %292 = vector.extract_strided_slice %275 {offsets = [0, 0], sizes = [16, 96], strides = [1, 1]} : vector<16x128xf32> to vector<16x96xf32>
    %293 = arith.negf %292 : vector<16x96xf32>
    %294 = math.exp %293 : vector<16x96xf32>
    %cst_84 = arith.constant 1.000000e+00 : f32
    %295 = vector.broadcast %cst_84 : f32 to vector<16x96xf32>
    %296 = arith.addf %295, %294 : vector<16x96xf32>
    %297 = arith.divf %295, %296 : vector<16x96xf32>
    %298 = vector.extract_strided_slice %275 {offsets = [0, 96], sizes = [16, 32], strides = [1, 1]} : vector<16x128xf32> to vector<16x32xf32>
    %299 = math.tanh %298 : vector<16x32xf32>
    %300 = vector.extract_strided_slice %297 {offsets = [0, 0], sizes = [16, 32], strides = [1, 1]} : vector<16x96xf32> to vector<16x32xf32>
    %301 = vector.extract_strided_slice %297 {offsets = [0, 32], sizes = [16, 32], strides = [1, 1]} : vector<16x96xf32> to vector<16x32xf32>
    %302 = vector.extract_strided_slice %297 {offsets = [0, 64], sizes = [16, 32], strides = [1, 1]} : vector<16x96xf32> to vector<16x32xf32>
    %303 = arith.mulf %301, %250 : vector<16x32xf32>
    %304 = arith.mulf %300, %299 : vector<16x32xf32>
    %305 = arith.addf %303, %304 : vector<16x32xf32>
    %306 = math.tanh %305 : vector<16x32xf32>
    %307 = arith.mulf %302, %306 : vector<16x32xf32>
    %308 = arith.truncf %291 : vector<16x32xf32> to vector<16x32xbf16>
    %309 = arith.index_cast %c4_i32 : i32 to index
    %c0_85 = arith.constant 0 : index
    %c0_86 = arith.constant 0 : index
    %310 = vector.load %arg13[%309, %c0_85, %c0_86] : memref<8x16x64xbf16, #tpu.memory_space<vmem>>, vector<1x16x32xbf16>
    %311 = vector.shape_cast %310 : vector<1x16x32xbf16> to vector<16x32xbf16>
    %312 = vector.shape_cast %308 : vector<16x32xbf16> to vector<1x16x32xbf16>
    tpu.vector_store %arg13[%309, %c0_85, %c0_86], %312 {strides = array<i32>} : memref<8x16x64xbf16, #tpu.memory_space<vmem>>, vector<1x16x32xbf16>,
    %313 = arith.truncf %307 : vector<16x32xf32> to vector<16x32xbf16>
    %314 = arith.index_cast %263 : i32 to index
    %c0_87 = arith.constant 0 : index
    %c32_88 = arith.constant 32 : index
    %315 = vector.load %arg13[%314, %c0_87, %c32_88] : memref<8x16x64xbf16, #tpu.memory_space<vmem>>, vector<1x16x32xbf16>
    %316 = vector.shape_cast %315 : vector<1x16x32xbf16> to vector<16x32xbf16>
    %317 = vector.shape_cast %313 : vector<16x32xbf16> to vector<1x16x32xbf16>
    tpu.vector_store %arg13[%314, %c0_87, %c32_88], %317 {strides = array<i32>} : memref<8x16x64xbf16, #tpu.memory_space<vmem>>, vector<1x16x32xbf16>,
    %c5_i32 = arith.constant 5 : i32
    %c7_i32_89 = arith.constant 7 : i32
    %318 = arith.subi %c7_i32_89, %c5_i32 : i32
    %319 = arith.index_cast %c5_i32 : i32 to index
    %c0_90 = arith.constant 0 : index
    %c0_91 = arith.constant 0 : index
    %320 = vector.load %arg11[%319, %c0_90, %c0_91] : memref<8x16x128xf32, #tpu.memory_space<vmem>>, vector<1x16x128xf32>
    %321 = vector.shape_cast %320 : vector<1x16x128xf32> to vector<16x128xf32>
    %322 = arith.truncf %291 : vector<16x32xf32> to vector<16x32xbf16>
    %cst_92 = arith.constant dense<0.000000e+00> : vector<16x128xf32>
    %323 = tpu.matmul %322, %40, %cst_92 {dimension_numbers = #tpu.dot_dimension_numbers<[1], [0], [0], [1], [0, 0, 1, 1], [], []>} : vector<16x32xbf16>, vector<32x128xbf16>, vector<16x128xf32> -> vector<16x128xf32>
    %324 = arith.addf %321, %323 : vector<16x128xf32>
    %325 = arith.index_cast %318 : i32 to index
    %c0_93 = arith.constant 0 : index
    %c0_94 = arith.constant 0 : index
    %326 = vector.load %arg12[%325, %c0_93, %c0_94] : memref<8x16x128xf32, #tpu.memory_space<vmem>>, vector<1x16x128xf32>
    %327 = vector.shape_cast %326 : vector<1x16x128xf32> to vector<16x128xf32>
    %328 = arith.truncf %307 : vector<16x32xf32> to vector<16x32xbf16>
    %cst_95 = arith.constant dense<0.000000e+00> : vector<16x128xf32>
    %329 = tpu.matmul %328, %41, %cst_95 {dimension_numbers = #tpu.dot_dimension_numbers<[1], [0], [0], [1], [0, 0, 1, 1], [], []>} : vector<16x32xbf16>, vector<32x128xbf16>, vector<16x128xf32> -> vector<16x128xf32>
    %330 = arith.addf %327, %329 : vector<16x128xf32>
    %331 = vector.extract_strided_slice %324 {offsets = [0, 0], sizes = [16, 96], strides = [1, 1]} : vector<16x128xf32> to vector<16x96xf32>
    %332 = arith.negf %331 : vector<16x96xf32>
    %333 = math.exp %332 : vector<16x96xf32>
    %cst_96 = arith.constant 1.000000e+00 : f32
    %334 = vector.broadcast %cst_96 : f32 to vector<16x96xf32>
    %335 = arith.addf %334, %333 : vector<16x96xf32>
    %336 = arith.divf %334, %335 : vector<16x96xf32>
    %337 = vector.extract_strided_slice %324 {offsets = [0, 96], sizes = [16, 32], strides = [1, 1]} : vector<16x128xf32> to vector<16x32xf32>
    %338 = math.tanh %337 : vector<16x32xf32>
    %339 = vector.extract_strided_slice %336 {offsets = [0, 0], sizes = [16, 32], strides = [1, 1]} : vector<16x96xf32> to vector<16x32xf32>
    %340 = vector.extract_strided_slice %336 {offsets = [0, 32], sizes = [16, 32], strides = [1, 1]} : vector<16x96xf32> to vector<16x32xf32>
    %341 = vector.extract_strided_slice %336 {offsets = [0, 64], sizes = [16, 32], strides = [1, 1]} : vector<16x96xf32> to vector<16x32xf32>
    %342 = arith.mulf %340, %289 : vector<16x32xf32>
    %343 = arith.mulf %339, %338 : vector<16x32xf32>
    %344 = arith.addf %342, %343 : vector<16x32xf32>
    %345 = math.tanh %344 : vector<16x32xf32>
    %346 = arith.mulf %341, %345 : vector<16x32xf32>
    %347 = vector.extract_strided_slice %330 {offsets = [0, 0], sizes = [16, 96], strides = [1, 1]} : vector<16x128xf32> to vector<16x96xf32>
    %348 = arith.negf %347 : vector<16x96xf32>
    %349 = math.exp %348 : vector<16x96xf32>
    %cst_97 = arith.constant 1.000000e+00 : f32
    %350 = vector.broadcast %cst_97 : f32 to vector<16x96xf32>
    %351 = arith.addf %350, %349 : vector<16x96xf32>
    %352 = arith.divf %350, %351 : vector<16x96xf32>
    %353 = vector.extract_strided_slice %330 {offsets = [0, 96], sizes = [16, 32], strides = [1, 1]} : vector<16x128xf32> to vector<16x32xf32>
    %354 = math.tanh %353 : vector<16x32xf32>
    %355 = vector.extract_strided_slice %352 {offsets = [0, 0], sizes = [16, 32], strides = [1, 1]} : vector<16x96xf32> to vector<16x32xf32>
    %356 = vector.extract_strided_slice %352 {offsets = [0, 32], sizes = [16, 32], strides = [1, 1]} : vector<16x96xf32> to vector<16x32xf32>
    %357 = vector.extract_strided_slice %352 {offsets = [0, 64], sizes = [16, 32], strides = [1, 1]} : vector<16x96xf32> to vector<16x32xf32>
    %358 = arith.mulf %356, %305 : vector<16x32xf32>
    %359 = arith.mulf %355, %354 : vector<16x32xf32>
    %360 = arith.addf %358, %359 : vector<16x32xf32>
    %361 = math.tanh %360 : vector<16x32xf32>
    %362 = arith.mulf %357, %361 : vector<16x32xf32>
    %363 = arith.truncf %346 : vector<16x32xf32> to vector<16x32xbf16>
    %364 = arith.index_cast %c5_i32 : i32 to index
    %c0_98 = arith.constant 0 : index
    %c0_99 = arith.constant 0 : index
    %365 = vector.load %arg13[%364, %c0_98, %c0_99] : memref<8x16x64xbf16, #tpu.memory_space<vmem>>, vector<1x16x32xbf16>
    %366 = vector.shape_cast %365 : vector<1x16x32xbf16> to vector<16x32xbf16>
    %367 = vector.shape_cast %363 : vector<16x32xbf16> to vector<1x16x32xbf16>
    tpu.vector_store %arg13[%364, %c0_98, %c0_99], %367 {strides = array<i32>} : memref<8x16x64xbf16, #tpu.memory_space<vmem>>, vector<1x16x32xbf16>,
    %368 = arith.truncf %362 : vector<16x32xf32> to vector<16x32xbf16>
    %369 = arith.index_cast %318 : i32 to index
    %c0_100 = arith.constant 0 : index
    %c32_101 = arith.constant 32 : index
    %370 = vector.load %arg13[%369, %c0_100, %c32_101] : memref<8x16x64xbf16, #tpu.memory_space<vmem>>, vector<1x16x32xbf16>
    %371 = vector.shape_cast %370 : vector<1x16x32xbf16> to vector<16x32xbf16>
    %372 = vector.shape_cast %368 : vector<16x32xbf16> to vector<1x16x32xbf16>
    tpu.vector_store %arg13[%369, %c0_100, %c32_101], %372 {strides = array<i32>} : memref<8x16x64xbf16, #tpu.memory_space<vmem>>, vector<1x16x32xbf16>,
    %c6_i32 = arith.constant 6 : i32
    %c7_i32_102 = arith.constant 7 : i32
    %373 = arith.subi %c7_i32_102, %c6_i32 : i32
    %374 = arith.index_cast %c6_i32 : i32 to index
    %c0_103 = arith.constant 0 : index
    %c0_104 = arith.constant 0 : index
    %375 = vector.load %arg11[%374, %c0_103, %c0_104] : memref<8x16x128xf32, #tpu.memory_space<vmem>>, vector<1x16x128xf32>
    %376 = vector.shape_cast %375 : vector<1x16x128xf32> to vector<16x128xf32>
    %377 = arith.truncf %346 : vector<16x32xf32> to vector<16x32xbf16>
    %cst_105 = arith.constant dense<0.000000e+00> : vector<16x128xf32>
    %378 = tpu.matmul %377, %40, %cst_105 {dimension_numbers = #tpu.dot_dimension_numbers<[1], [0], [0], [1], [0, 0, 1, 1], [], []>} : vector<16x32xbf16>, vector<32x128xbf16>, vector<16x128xf32> -> vector<16x128xf32>
    %379 = arith.addf %376, %378 : vector<16x128xf32>
    %380 = arith.index_cast %373 : i32 to index
    %c0_106 = arith.constant 0 : index
    %c0_107 = arith.constant 0 : index
    %381 = vector.load %arg12[%380, %c0_106, %c0_107] : memref<8x16x128xf32, #tpu.memory_space<vmem>>, vector<1x16x128xf32>
    %382 = vector.shape_cast %381 : vector<1x16x128xf32> to vector<16x128xf32>
    %383 = arith.truncf %362 : vector<16x32xf32> to vector<16x32xbf16>
    %cst_108 = arith.constant dense<0.000000e+00> : vector<16x128xf32>
    %384 = tpu.matmul %383, %41, %cst_108 {dimension_numbers = #tpu.dot_dimension_numbers<[1], [0], [0], [1], [0, 0, 1, 1], [], []>} : vector<16x32xbf16>, vector<32x128xbf16>, vector<16x128xf32> -> vector<16x128xf32>
    %385 = arith.addf %382, %384 : vector<16x128xf32>
    %386 = vector.extract_strided_slice %379 {offsets = [0, 0], sizes = [16, 96], strides = [1, 1]} : vector<16x128xf32> to vector<16x96xf32>
    %387 = arith.negf %386 : vector<16x96xf32>
    %388 = math.exp %387 : vector<16x96xf32>
    %cst_109 = arith.constant 1.000000e+00 : f32
    %389 = vector.broadcast %cst_109 : f32 to vector<16x96xf32>
    %390 = arith.addf %389, %388 : vector<16x96xf32>
    %391 = arith.divf %389, %390 : vector<16x96xf32>
    %392 = vector.extract_strided_slice %379 {offsets = [0, 96], sizes = [16, 32], strides = [1, 1]} : vector<16x128xf32> to vector<16x32xf32>
    %393 = math.tanh %392 : vector<16x32xf32>
    %394 = vector.extract_strided_slice %391 {offsets = [0, 0], sizes = [16, 32], strides = [1, 1]} : vector<16x96xf32> to vector<16x32xf32>
    %395 = vector.extract_strided_slice %391 {offsets = [0, 32], sizes = [16, 32], strides = [1, 1]} : vector<16x96xf32> to vector<16x32xf32>
    %396 = vector.extract_strided_slice %391 {offsets = [0, 64], sizes = [16, 32], strides = [1, 1]} : vector<16x96xf32> to vector<16x32xf32>
    %397 = arith.mulf %395, %344 : vector<16x32xf32>
    %398 = arith.mulf %394, %393 : vector<16x32xf32>
    %399 = arith.addf %397, %398 : vector<16x32xf32>
    %400 = math.tanh %399 : vector<16x32xf32>
    %401 = arith.mulf %396, %400 : vector<16x32xf32>
    %402 = vector.extract_strided_slice %385 {offsets = [0, 0], sizes = [16, 96], strides = [1, 1]} : vector<16x128xf32> to vector<16x96xf32>
    %403 = arith.negf %402 : vector<16x96xf32>
    %404 = math.exp %403 : vector<16x96xf32>
    %cst_110 = arith.constant 1.000000e+00 : f32
    %405 = vector.broadcast %cst_110 : f32 to vector<16x96xf32>
    %406 = arith.addf %405, %404 : vector<16x96xf32>
    %407 = arith.divf %405, %406 : vector<16x96xf32>
    %408 = vector.extract_strided_slice %385 {offsets = [0, 96], sizes = [16, 32], strides = [1, 1]} : vector<16x128xf32> to vector<16x32xf32>
    %409 = math.tanh %408 : vector<16x32xf32>
    %410 = vector.extract_strided_slice %407 {offsets = [0, 0], sizes = [16, 32], strides = [1, 1]} : vector<16x96xf32> to vector<16x32xf32>
    %411 = vector.extract_strided_slice %407 {offsets = [0, 32], sizes = [16, 32], strides = [1, 1]} : vector<16x96xf32> to vector<16x32xf32>
    %412 = vector.extract_strided_slice %407 {offsets = [0, 64], sizes = [16, 32], strides = [1, 1]} : vector<16x96xf32> to vector<16x32xf32>
    %413 = arith.mulf %411, %360 : vector<16x32xf32>
    %414 = arith.mulf %410, %409 : vector<16x32xf32>
    %415 = arith.addf %413, %414 : vector<16x32xf32>
    %416 = math.tanh %415 : vector<16x32xf32>
    %417 = arith.mulf %412, %416 : vector<16x32xf32>
    %418 = arith.truncf %401 : vector<16x32xf32> to vector<16x32xbf16>
    %419 = arith.index_cast %c6_i32 : i32 to index
    %c0_111 = arith.constant 0 : index
    %c0_112 = arith.constant 0 : index
    %420 = vector.load %arg13[%419, %c0_111, %c0_112] : memref<8x16x64xbf16, #tpu.memory_space<vmem>>, vector<1x16x32xbf16>
    %421 = vector.shape_cast %420 : vector<1x16x32xbf16> to vector<16x32xbf16>
    %422 = vector.shape_cast %418 : vector<16x32xbf16> to vector<1x16x32xbf16>
    tpu.vector_store %arg13[%419, %c0_111, %c0_112], %422 {strides = array<i32>} : memref<8x16x64xbf16, #tpu.memory_space<vmem>>, vector<1x16x32xbf16>,
    %423 = arith.truncf %417 : vector<16x32xf32> to vector<16x32xbf16>
    %424 = arith.index_cast %373 : i32 to index
    %c0_113 = arith.constant 0 : index
    %c32_114 = arith.constant 32 : index
    %425 = vector.load %arg13[%424, %c0_113, %c32_114] : memref<8x16x64xbf16, #tpu.memory_space<vmem>>, vector<1x16x32xbf16>
    %426 = vector.shape_cast %425 : vector<1x16x32xbf16> to vector<16x32xbf16>
    %427 = vector.shape_cast %423 : vector<16x32xbf16> to vector<1x16x32xbf16>
    tpu.vector_store %arg13[%424, %c0_113, %c32_114], %427 {strides = array<i32>} : memref<8x16x64xbf16, #tpu.memory_space<vmem>>, vector<1x16x32xbf16>,
    %c7_i32_115 = arith.constant 7 : i32
    %c7_i32_116 = arith.constant 7 : i32
    %428 = arith.subi %c7_i32_116, %c7_i32_115 : i32
    %429 = arith.index_cast %c7_i32_115 : i32 to index
    %c0_117 = arith.constant 0 : index
    %c0_118 = arith.constant 0 : index
    %430 = vector.load %arg11[%429, %c0_117, %c0_118] : memref<8x16x128xf32, #tpu.memory_space<vmem>>, vector<1x16x128xf32>
    %431 = vector.shape_cast %430 : vector<1x16x128xf32> to vector<16x128xf32>
    %432 = arith.truncf %401 : vector<16x32xf32> to vector<16x32xbf16>
    %cst_119 = arith.constant dense<0.000000e+00> : vector<16x128xf32>
    %433 = tpu.matmul %432, %40, %cst_119 {dimension_numbers = #tpu.dot_dimension_numbers<[1], [0], [0], [1], [0, 0, 1, 1], [], []>} : vector<16x32xbf16>, vector<32x128xbf16>, vector<16x128xf32> -> vector<16x128xf32>
    %434 = arith.addf %431, %433 : vector<16x128xf32>
    %435 = arith.index_cast %428 : i32 to index
    %c0_120 = arith.constant 0 : index
    %c0_121 = arith.constant 0 : index
    %436 = vector.load %arg12[%435, %c0_120, %c0_121] : memref<8x16x128xf32, #tpu.memory_space<vmem>>, vector<1x16x128xf32>
    %437 = vector.shape_cast %436 : vector<1x16x128xf32> to vector<16x128xf32>
    %438 = arith.truncf %417 : vector<16x32xf32> to vector<16x32xbf16>
    %cst_122 = arith.constant dense<0.000000e+00> : vector<16x128xf32>
    %439 = tpu.matmul %438, %41, %cst_122 {dimension_numbers = #tpu.dot_dimension_numbers<[1], [0], [0], [1], [0, 0, 1, 1], [], []>} : vector<16x32xbf16>, vector<32x128xbf16>, vector<16x128xf32> -> vector<16x128xf32>
    %440 = arith.addf %437, %439 : vector<16x128xf32>
    %441 = vector.extract_strided_slice %434 {offsets = [0, 0], sizes = [16, 96], strides = [1, 1]} : vector<16x128xf32> to vector<16x96xf32>
    %442 = arith.negf %441 : vector<16x96xf32>
    %443 = math.exp %442 : vector<16x96xf32>
    %cst_123 = arith.constant 1.000000e+00 : f32
    %444 = vector.broadcast %cst_123 : f32 to vector<16x96xf32>
    %445 = arith.addf %444, %443 : vector<16x96xf32>
    %446 = arith.divf %444, %445 : vector<16x96xf32>
    %447 = vector.extract_strided_slice %434 {offsets = [0, 96], sizes = [16, 32], strides = [1, 1]} : vector<16x128xf32> to vector<16x32xf32>
    %448 = math.tanh %447 : vector<16x32xf32>
    %449 = vector.extract_strided_slice %446 {offsets = [0, 0], sizes = [16, 32], strides = [1, 1]} : vector<16x96xf32> to vector<16x32xf32>
    %450 = vector.extract_strided_slice %446 {offsets = [0, 32], sizes = [16, 32], strides = [1, 1]} : vector<16x96xf32> to vector<16x32xf32>
    %451 = vector.extract_strided_slice %446 {offsets = [0, 64], sizes = [16, 32], strides = [1, 1]} : vector<16x96xf32> to vector<16x32xf32>
    %452 = arith.mulf %450, %399 : vector<16x32xf32>
    %453 = arith.mulf %449, %448 : vector<16x32xf32>
    %454 = arith.addf %452, %453 : vector<16x32xf32>
    %455 = math.tanh %454 : vector<16x32xf32>
    %456 = arith.mulf %451, %455 : vector<16x32xf32>
    %457 = vector.extract_strided_slice %440 {offsets = [0, 0], sizes = [16, 96], strides = [1, 1]} : vector<16x128xf32> to vector<16x96xf32>
    %458 = arith.negf %457 : vector<16x96xf32>
    %459 = math.exp %458 : vector<16x96xf32>
    %cst_124 = arith.constant 1.000000e+00 : f32
    %460 = vector.broadcast %cst_124 : f32 to vector<16x96xf32>
    %461 = arith.addf %460, %459 : vector<16x96xf32>
    %462 = arith.divf %460, %461 : vector<16x96xf32>
    %463 = vector.extract_strided_slice %440 {offsets = [0, 96], sizes = [16, 32], strides = [1, 1]} : vector<16x128xf32> to vector<16x32xf32>
    %464 = math.tanh %463 : vector<16x32xf32>
    %465 = vector.extract_strided_slice %462 {offsets = [0, 0], sizes = [16, 32], strides = [1, 1]} : vector<16x96xf32> to vector<16x32xf32>
    %466 = vector.extract_strided_slice %462 {offsets = [0, 32], sizes = [16, 32], strides = [1, 1]} : vector<16x96xf32> to vector<16x32xf32>
    %467 = vector.extract_strided_slice %462 {offsets = [0, 64], sizes = [16, 32], strides = [1, 1]} : vector<16x96xf32> to vector<16x32xf32>
    %468 = arith.mulf %466, %415 : vector<16x32xf32>
    %469 = arith.mulf %465, %464 : vector<16x32xf32>
    %470 = arith.addf %468, %469 : vector<16x32xf32>
    %471 = math.tanh %470 : vector<16x32xf32>
    %472 = arith.mulf %467, %471 : vector<16x32xf32>
    %473 = arith.truncf %456 : vector<16x32xf32> to vector<16x32xbf16>
    %474 = arith.index_cast %c7_i32_115 : i32 to index
    %c0_125 = arith.constant 0 : index
    %c0_126 = arith.constant 0 : index
    %475 = vector.load %arg13[%474, %c0_125, %c0_126] : memref<8x16x64xbf16, #tpu.memory_space<vmem>>, vector<1x16x32xbf16>
    %476 = vector.shape_cast %475 : vector<1x16x32xbf16> to vector<16x32xbf16>
    %477 = vector.shape_cast %473 : vector<16x32xbf16> to vector<1x16x32xbf16>
    tpu.vector_store %arg13[%474, %c0_125, %c0_126], %477 {strides = array<i32>} : memref<8x16x64xbf16, #tpu.memory_space<vmem>>, vector<1x16x32xbf16>,
    %478 = arith.truncf %472 : vector<16x32xf32> to vector<16x32xbf16>
    %479 = arith.index_cast %428 : i32 to index
    %c0_127 = arith.constant 0 : index
    %c32_128 = arith.constant 32 : index
    %480 = vector.load %arg13[%479, %c0_127, %c32_128] : memref<8x16x64xbf16, #tpu.memory_space<vmem>>, vector<1x16x32xbf16>
    %481 = vector.shape_cast %480 : vector<1x16x32xbf16> to vector<16x32xbf16>
    %482 = vector.shape_cast %478 : vector<16x32xbf16> to vector<1x16x32xbf16>
    tpu.vector_store %arg13[%479, %c0_127, %c32_128], %482 {strides = array<i32>} : memref<8x16x64xbf16, #tpu.memory_space<vmem>>, vector<1x16x32xbf16>,
    %c8_i32 = arith.constant 8 : i32
    %c0_129 = arith.constant 0 : index
    %c0_130 = arith.constant 0 : index
    %c0_131 = arith.constant 0 : index
    %483 = vector.load %arg13[%c0_129, %c0_130, %c0_131] : memref<8x16x64xbf16, #tpu.memory_space<vmem>>, vector<8x16x64xbf16>
    %484 = vector.shape_cast %483 : vector<8x16x64xbf16> to vector<128x64xbf16>
    %c0_132 = arith.constant 0 : index
    %c0_133 = arith.constant 0 : index
    %485 = vector.load %arg8[%c0_132, %c0_133] : memref<64x16xbf16, #tpu.memory_space<vmem>>, vector<64x16xbf16>
    %cst_134 = arith.constant dense<0.000000e+00> : vector<128x16xf32>
    %486 = tpu.matmul %484, %485, %cst_134 {dimension_numbers = #tpu.dot_dimension_numbers<[1], [0], [0], [1], [0, 0, 1, 1], [], []>} : vector<128x64xbf16>, vector<64x16xbf16>, vector<128x16xf32> -> vector<128x16xf32>
    %487 = vector.shape_cast %486 : vector<128x16xf32> to vector<8x16x16xf32>
    %c0_135 = arith.constant 0 : index
    %c0_136 = arith.constant 0 : index
    %488 = vector.load %arg9[%c0_135, %c0_136] : memref<1x16xf32, #tpu.memory_space<vmem>>, vector<1x16xf32>
    %489 = vector.shape_cast %488 : vector<1x16xf32> to vector<1x1x16xf32>
    %490 = vector.broadcast %489 : vector<1x1x16xf32> to vector<8x16x16xf32>
    %491 = arith.addf %487, %490 : vector<8x16x16xf32>
    %c0_137 = arith.constant 0 : index
    %c0_138 = arith.constant 0 : index
    %c0_139 = arith.constant 0 : index
    %492 = vector.load %arg1[%c0_137, %c0_138, %c0_139] : memref<8x16x16xf32, #tpu.memory_space<vmem>>, vector<8x16x16xf32>
    %493 = arith.addf %491, %492 : vector<8x16x16xf32>
    %c0_140 = arith.constant 0 : index
    %c0_141 = arith.constant 0 : index
    %c0_142 = arith.constant 0 : index
    %494 = vector.load %arg10[%c0_140, %c0_141, %c0_142] : memref<8x16x16xf32, #tpu.memory_space<vmem>>, vector<8x16x16xf32>
    tpu.vector_store %arg10[%c0_140, %c0_141, %c0_142], %493 {strides = array<i32>} : memref<8x16x16xf32, #tpu.memory_space<vmem>>, vector<8x16x16xf32>,
    return
  }
  func.func @transform_0(%arg0: i32) -> (i32, i32, i32) {
    %c0_i32 = arith.constant 0 : i32
    %c0_i32_0 = arith.constant 0 : i32
    %c0_i32_1 = arith.constant 0 : i32
    return %c0_i32, %arg0, %c0_i32_0 : i32, i32, i32
  }
  func.func @transform_1(%arg0: i32) -> (i32, i32) {
    %c0_i32 = arith.constant 0 : i32
    %c0_i32_0 = arith.constant 0 : i32
    %c0_i32_1 = arith.constant 0 : i32
    return %c0_i32, %c0_i32_0 : i32, i32
  }
  func.func @transform_2(%arg0: i32) -> (i32, i32) {
    %c0_i32 = arith.constant 0 : i32
    %c0_i32_0 = arith.constant 0 : i32
    %c0_i32_1 = arith.constant 0 : i32
    return %c0_i32, %c0_i32_0 : i32, i32
  }
  func.func @transform_3(%arg0: i32) -> (i32, i32) {
    %c0_i32 = arith.constant 0 : i32
    %c0_i32_0 = arith.constant 0 : i32
    %c0_i32_1 = arith.constant 0 : i32
    return %c0_i32, %c0_i32_0 : i32, i32
  }
  func.func @transform_4(%arg0: i32) -> (i32, i32) {
    %c0_i32 = arith.constant 0 : i32
    %c0_i32_0 = arith.constant 0 : i32
    %c0_i32_1 = arith.constant 0 : i32
    return %c0_i32, %c0_i32_0 : i32, i32
  }
  func.func @transform_5(%arg0: i32) -> (i32, i32) {
    %c0_i32 = arith.constant 0 : i32
    %c0_i32_0 = arith.constant 0 : i32
    %c0_i32_1 = arith.constant 0 : i32
    return %c0_i32, %c0_i32_0 : i32, i32
  }
  func.func @transform_6(%arg0: i32) -> (i32, i32) {
    %c0_i32 = arith.constant 0 : i32
    %c0_i32_0 = arith.constant 0 : i32
    %c0_i32_1 = arith.constant 0 : i32
    return %c0_i32, %c0_i32_0 : i32, i32
  }
  func.func @transform_7(%arg0: i32) -> (i32, i32) {
    %c0_i32 = arith.constant 0 : i32
    %c0_i32_0 = arith.constant 0 : i32
    %c0_i32_1 = arith.constant 0 : i32
    return %c0_i32, %c0_i32_0 : i32, i32
  }
  func.func @transform_8(%arg0: i32) -> (i32, i32) {
    %c0_i32 = arith.constant 0 : i32
    %c0_i32_0 = arith.constant 0 : i32
    %c0_i32_1 = arith.constant 0 : i32
    return %c0_i32, %c0_i32_0 : i32, i32
  }
  func.func @transform_9(%arg0: i32) -> (i32, i32, i32) {
    %c0_i32 = arith.constant 0 : i32
    %c0_i32_0 = arith.constant 0 : i32
    %c0_i32_1 = arith.constant 0 : i32
    return %c0_i32, %arg0, %c0_i32_0 : i32, i32, i32
  }
}

</mosaic_0001>

<llo_original>
// kernel: residual_rnn_forward.1
$region0: #{residual_rnn_forward.1}
  #allocation0 [shape = 'u32[]', space=smem, size = 0x4, offset = 0x4, fixed_abs, tag = 'smem constant byte address 0x4 - core index']
  #allocation1 [shape = 'u32[144,128]{1,0:T(1,128)}', space=vmem, size = 0x12000, scoped, tag = 'internal scratch']
  #allocation2 [shape = 'f32[8,16,128]{2,1,0:T(8,128)}', space=vmem, size = 0x10000, scoped, tag = 'scratch operand']
  #allocation3 [shape = 'f32[8,16,128]{2,1,0:T(8,128)}', space=vmem, size = 0x10000, scoped, tag = 'scratch operand']
  #allocation4 [shape = 'bf16[8,16,64]{2,1,0:T(16,128)(2,1)}', space=vmem, size = 0x8000, scoped, tag = 'scratch operand']
  %s0 = inlined_call_operand.vmem [shape: f32[8,16,16], index: 0, kind: input, shape index: {}]
  %s1 = inlined_call_operand.vmem [shape: f32[1,16], index: 1, kind: input, shape index: {}]
  %s2 = inlined_call_operand.vmem [shape: f32[1,16], index: 2, kind: input, shape index: {}]
  %s3 = inlined_call_operand.vmem [shape: bf16[16,256], index: 3, kind: input, shape index: {}]
  %s4 = inlined_call_operand.vmem [shape: f32[1,256], index: 4, kind: input, shape index: {}]
  %s5 = inlined_call_operand.vmem [shape: bf16[32,128], index: 5, kind: input, shape index: {}]
  %s6 = inlined_call_operand.vmem [shape: bf16[32,128], index: 6, kind: input, shape index: {}]
  %s7 = inlined_call_operand.vmem [shape: bf16[64,16], index: 7, kind: input, shape index: {}]
  %s8 = inlined_call_operand.vmem [shape: f32[1,16], index: 8, kind: input, shape index: {}]
  %s9 = inlined_call_operand.vmem [shape: f32[8,16,16], index: 9, kind: output, shape index: {}]
  %s10 = sld [smem:[#allocation0]]
  $region46: #{residual_rnn_forward.1} parent=0
    _
  %s12 = ssub.s32 1, %s10
  %s13 = scalar_select 0, %s12, %s10
  // Predicated region
  $region2: #{residual_rnn_forward.1} parent=0 // pred_check
    _
  $region3: #{residual_rnn_forward.1} parent=0 // pred_check_branch
    %15 = sbr.rel (0) target = $region5
  $region4: #{residual_rnn_forward.1} parent=0 // pred_region
    _
  $region5: #{residual_rnn_forward.1} parent=0 // pred_fallthru
    _
  // Predicated region
  $region6: #{residual_rnn_forward.1} parent=0 // pred_check
    _
  $region7: #{residual_rnn_forward.1} parent=0 // pred_check_branch
    %17 = sbr.rel (0) target = $region9
  $region8: #{residual_rnn_forward.1} parent=0 // pred_region
    _
  $region9: #{residual_rnn_forward.1} parent=0 // pred_fallthru
    _
  // Predicated region
  $region10: #{residual_rnn_forward.1} parent=0 // pred_check
    _
  $region11: #{residual_rnn_forward.1} parent=0 // pred_check_branch
    %19 = sbr.rel (0) target = $region13
  $region12: #{residual_rnn_forward.1} parent=0 // pred_region
    _
  $region13: #{residual_rnn_forward.1} parent=0 // pred_fallthru
    _
  // Predicated region
  $region14: #{residual_rnn_forward.1} parent=0 // pred_check
    _
  $region15: #{residual_rnn_forward.1} parent=0 // pred_check_branch
    %21 = sbr.rel (0) target = $region17
  $region16: #{residual_rnn_forward.1} parent=0 // pred_region
    _
  $region17: #{residual_rnn_forward.1} parent=0 // pred_fallthru
    _
  // Predicated region
  $region18: #{residual_rnn_forward.1} parent=0 // pred_check
    _
  $region19: #{residual_rnn_forward.1} parent=0 // pred_check_branch
    %23 = sbr.rel (0) target = $region21
  $region20: #{residual_rnn_forward.1} parent=0 // pred_region
    _
  $region21: #{residual_rnn_forward.1} parent=0 // pred_fallthru
    _
  // Predicated region
  $region22: #{residual_rnn_forward.1} parent=0 // pred_check
    _
  $region23: #{residual_rnn_forward.1} parent=0 // pred_check_branch
    %25 = sbr.rel (0) target = $region25
  $region24: #{residual_rnn_forward.1} parent=0 // pred_region
    _
  $region25: #{residual_rnn_forward.1} parent=0 // pred_fallthru
    _
  // Predicated region
  $region26: #{residual_rnn_forward.1} parent=0 // pred_check
    _
  $region27: #{residual_rnn_forward.1} parent=0 // pred_check_branch
    %27 = sbr.rel (0) target = $region29
  $region28: #{residual_rnn_forward.1} parent=0 // pred_region
    _
  $region29: #{residual_rnn_forward.1} parent=0 // pred_fallthru
    _
  // Predicated region
  $region30: #{residual_rnn_forward.1} parent=0 // pred_check
    _
  $region31: #{residual_rnn_forward.1} parent=0 // pred_check_branch
    %29 = sbr.rel (0) target = $region33
  $region32: #{residual_rnn_forward.1} parent=0 // pred_region
    _
  $region33: #{residual_rnn_forward.1} parent=0 // pred_fallthru
    _
  // Predicated region
  $region34: #{residual_rnn_forward.1} parent=0 // pred_check
    _
  $region35: #{residual_rnn_forward.1} parent=0 // pred_check_branch
    %31 = sbr.rel (0) target = $region37
  $region36: #{residual_rnn_forward.1} parent=0 // pred_region
    _
  $region37: #{residual_rnn_forward.1} parent=0 // pred_fallthru
    _
  %v33 = vld [vmem:[%s0] sm:$0xff]
  %v34 = vld [vmem:[%s0 + $0x8] sm:$0xff]
  %v35 = vld [vmem:[%s0 + $0x10] sm:$0xff]
  %v36 = vld [vmem:[%s0 + $0x18] sm:$0xff]
  %v37 = vld [vmem:[%s0 + $0x20] sm:$0xff]
  %v38 = vld [vmem:[%s0 + $0x28] sm:$0xff]
  %v39 = vld [vmem:[%s0 + $0x30] sm:$0xff]
  %v40 = vld [vmem:[%s0 + $0x38] sm:$0xff]
  %v41 = vld [vmem:[%s0 + $0x40] sm:$0xff]
  %v42 = vld [vmem:[%s0 + $0x48] sm:$0xff]
  %v43 = vld [vmem:[%s0 + $0x50] sm:$0xff]
  %v44 = vld [vmem:[%s0 + $0x58] sm:$0xff]
  %v45 = vld [vmem:[%s0 + $0x60] sm:$0xff]
  %v46 = vld [vmem:[%s0 + $0x68] sm:$0xff]
  %v47 = vld [vmem:[%s0 + $0x70] sm:$0xff]
  %v48 = vld [vmem:[%s0 + $0x78] sm:$0xff]
  %vm49 = vcmask 130048
  %v50 = vsel %vm49, %v33, 0.0
  %51 = vadd.xlane.f32.xlu0 %v50
  %v52 = vpop.xlane.xlu0 %51
  %v53 = vsel %vm49, %v34, 0.0
  %54 = vadd.xlane.f32.xlu0 %v53
  %v55 = vpop.xlane.xlu0 %54
  %v56 = vsel %vm49, %v35, 0.0
  %57 = vadd.xlane.f32.xlu0 %v56
  %v58 = vpop.xlane.xlu0 %57
  %v59 = vsel %vm49, %v36, 0.0
  %60 = vadd.xlane.f32.xlu0 %v59
  %v61 = vpop.xlane.xlu0 %60
  %v62 = vsel %vm49, %v37, 0.0
  %63 = vadd.xlane.f32.xlu0 %v62
  %v64 = vpop.xlane.xlu0 %63
  %v65 = vsel %vm49, %v38, 0.0
  %66 = vadd.xlane.f32.xlu0 %v65
  %v67 = vpop.xlane.xlu0 %66
  %v68 = vsel %vm49, %v39, 0.0
  %69 = vadd.xlane.f32.xlu0 %v68
  %v70 = vpop.xlane.xlu0 %69
  %v71 = vsel %vm49, %v40, 0.0
  %72 = vadd.xlane.f32.xlu0 %v71
  %v73 = vpop.xlane.xlu0 %72
  %v74 = vsel %vm49, %v41, 0.0
  %75 = vadd.xlane.f32.xlu0 %v74
  %v76 = vpop.xlane.xlu0 %75
  %v77 = vsel %vm49, %v42, 0.0
  %78 = vadd.xlane.f32.xlu0 %v77
  %v79 = vpop.xlane.xlu0 %78
  %v80 = vsel %vm49, %v43, 0.0
  %81 = vadd.xlane.f32.xlu0 %v80
  %v82 = vpop.xlane.xlu0 %81
  %v83 = vsel %vm49, %v44, 0.0
  %84 = vadd.xlane.f32.xlu0 %v83
  %v85 = vpop.xlane.xlu0 %84
  %v86 = vsel %vm49, %v45, 0.0
  %87 = vadd.xlane.f32.xlu0 %v86
  %v88 = vpop.xlane.xlu0 %87
  %v89 = vsel %vm49, %v46, 0.0
  %90 = vadd.xlane.f32.xlu0 %v89
  %v91 = vpop.xlane.xlu0 %90
  %v92 = vsel %vm49, %v47, 0.0
  %93 = vadd.xlane.f32.xlu0 %v92
  %v94 = vpop.xlane.xlu0 %93
  %v95 = vsel %vm49, %v48, 0.0
  %96 = vadd.xlane.f32.xlu0 %v95
  %v97 = vpop.xlane.xlu0 %96
  %v98 = vrcp.pop 16.0
  %v99 = vmul.f32 %v52, %v98
  %v100 = vmul.f32 %v55, %v98
  %v101 = vmul.f32 %v58, %v98
  %v102 = vmul.f32 %v61, %v98
  %v103 = vmul.f32 %v64, %v98
  %v104 = vmul.f32 %v67, %v98
  %v105 = vmul.f32 %v70, %v98
  %v106 = vmul.f32 %v73, %v98
  %v107 = vmul.f32 %v76, %v98
  %v108 = vmul.f32 %v79, %v98
  %v109 = vmul.f32 %v82, %v98
  %v110 = vmul.f32 %v85, %v98
  %v111 = vmul.f32 %v88, %v98
  %v112 = vmul.f32 %v91, %v98
  %v113 = vmul.f32 %v94, %v98
  %v114 = vmul.f32 %v97, %v98
  %v115 = vsub.f32 %v33, %v99
  %v116 = vsub.f32 %v34, %v100
  %v117 = vsub.f32 %v35, %v101
  %v118 = vsub.f32 %v36, %v102
  %v119 = vsub.f32 %v37, %v103
  %v120 = vsub.f32 %v38, %v104
  %v121 = vsub.f32 %v39, %v105
  %v122 = vsub.f32 %v40, %v106
  %v123 = vsub.f32 %v41, %v107
  %v124 = vsub.f32 %v42, %v108
  %v125 = vsub.f32 %v43, %v109
  %v126 = vsub.f32 %v44, %v110
  %v127 = vsub.f32 %v45, %v111
  %v128 = vsub.f32 %v46, %v112
  %v129 = vsub.f32 %v47, %v113
  %v130 = vsub.f32 %v48, %v114
  %v131 = vmul.f32 %v115, %v115
  %v132 = vmul.f32 %v116, %v116
  %v133 = vmul.f32 %v117, %v117
  %v134 = vmul.f32 %v118, %v118
  %v135 = vmul.f32 %v119, %v119
  %v136 = vmul.f32 %v120, %v120
  %v137 = vmul.f32 %v121, %v121
  %v138 = vmul.f32 %v122, %v122
  %v139 = vmul.f32 %v123, %v123
  %v140 = vmul.f32 %v124, %v124
  %v141 = vmul.f32 %v125, %v125
  %v142 = vmul.f32 %v126, %v126
  %v143 = vmul.f32 %v127, %v127
  %v144 = vmul.f32 %v128, %v128
  %v145 = vmul.f32 %v129, %v129
  %v146 = vmul.f32 %v130, %v130
  %v147 = vsel %vm49, %v131, 0.0
  %148 = vadd.xlane.f32.xlu0 %v147
  %v149 = vpop.xlane.xlu0 %148
  %v150 = vsel %vm49, %v132, 0.0
  %151 = vadd.xlane.f32.xlu0 %v150
  %v152 = vpop.xlane.xlu0 %151
  %v153 = vsel %vm49, %v133, 0.0
  %154 = vadd.xlane.f32.xlu0 %v153
  %v155 = vpop.xlane.xlu0 %154
  %v156 = vsel %vm49, %v134, 0.0
  %157 = vadd.xlane.f32.xlu0 %v156
  %v158 = vpop.xlane.xlu0 %157
  %v159 = vsel %vm49, %v135, 0.0
  %160 = vadd.xlane.f32.xlu0 %v159
  %v161 = vpop.xlane.xlu0 %160
  %v162 = vsel %vm49, %v136, 0.0
  %163 = vadd.xlane.f32.xlu0 %v162
  %v164 = vpop.xlane.xlu0 %163
  %v165 = vsel %vm49, %v137, 0.0
  %166 = vadd.xlane.f32.xlu0 %v165
  %v167 = vpop.xlane.xlu0 %166
  %v168 = vsel %vm49, %v138, 0.0
  %169 = vadd.xlane.f32.xlu0 %v168
  %v170 = vpop.xlane.xlu0 %169
  %v171 = vsel %vm49, %v139, 0.0
  %172 = vadd.xlane.f32.xlu0 %v171
  %v173 = vpop.xlane.xlu0 %172
  %v174 = vsel %vm49, %v140, 0.0
  %175 = vadd.xlane.f32.xlu0 %v174
  %v176 = vpop.xlane.xlu0 %175
  %v177 = vsel %vm49, %v141, 0.0
  %178 = vadd.xlane.f32.xlu0 %v177
  %v179 = vpop.xlane.xlu0 %178
  %v180 = vsel %vm49, %v142, 0.0
  %181 = vadd.xlane.f32.xlu0 %v180
  %v182 = vpop.xlane.xlu0 %181
  %v183 = vsel %vm49, %v143, 0.0
  %184 = vadd.xlane.f32.xlu0 %v183
  %v185 = vpop.xlane.xlu0 %184
  %v186 = vsel %vm49, %v144, 0.0
  %187 = vadd.xlane.f32.xlu0 %v186
  %v188 = vpop.xlane.xlu0 %187
  %v189 = vsel %vm49, %v145, 0.0
  %190 = vadd.xlane.f32.xlu0 %v189
  %v191 = vpop.xlane.xlu0 %190
  %v192 = vsel %vm49, %v146, 0.0
  %193 = vadd.xlane.f32.xlu0 %v192
  %v194 = vpop.xlane.xlu0 %193
  %v195 = vmul.f32 %v149, %v98
  %v196 = vmul.f32 %v152, %v98
  %v197 = vmul.f32 %v155, %v98
  %v198 = vmul.f32 %v158, %v98
  %v199 = vmul.f32 %v161, %v98
  %v200 = vmul.f32 %v164, %v98
  %v201 = vmul.f32 %v167, %v98
  %v202 = vmul.f32 %v170, %v98
  %v203 = vmul.f32 %v173, %v98
  %v204 = vmul.f32 %v176, %v98
  %v205 = vmul.f32 %v179, %v98
  %v206 = vmul.f32 %v182, %v98
  %v207 = vmul.f32 %v185, %v98
  %v208 = vmul.f32 %v188, %v98
  %v209 = vmul.f32 %v191, %v98
  %v210 = vmul.f32 %v194, %v98
  %v211 = vadd.f32 %v195, 1e-05
  %v212 = vadd.f32 %v196, 1e-05
  %v213 = vadd.f32 %v197, 1e-05
  %v214 = vadd.f32 %v198, 1e-05
  %v215 = vadd.f32 %v199, 1e-05
  %v216 = vadd.f32 %v200, 1e-05
  %v217 = vadd.f32 %v201, 1e-05
  %v218 = vadd.f32 %v202, 1e-05
  %v219 = vadd.f32 %v203, 1e-05
  %v220 = vadd.f32 %v204, 1e-05
  %v221 = vadd.f32 %v205, 1e-05
  %v222 = vadd.f32 %v206, 1e-05
  %v223 = vadd.f32 %v207, 1e-05
  %v224 = vadd.f32 %v208, 1e-05
  %v225 = vadd.f32 %v209, 1e-05
  %v226 = vadd.f32 %v210, 1e-05
  %v227 = vrsqrt.pop %v211
  %v228 = vrsqrt.pop %v212
  %v229 = vrsqrt.pop %v213
  %v230 = vrsqrt.pop %v214
  %v231 = vrsqrt.pop %v215
  %v232 = vrsqrt.pop %v216
  %v233 = vrsqrt.pop %v217
  %v234 = vrsqrt.pop %v218
  %v235 = vrsqrt.pop %v219
  %v236 = vrsqrt.pop %v220
  %v237 = vrsqrt.pop %v221
  %v238 = vrsqrt.pop %v222
  %v239 = vrsqrt.pop %v223
  %v240 = vrsqrt.pop %v224
  %v241 = vrsqrt.pop %v225
  %v242 = vrsqrt.pop %v226
  %v243 = vmul.f32 %v115, %v227
  %v244 = vmul.f32 %v116, %v228
  %v245 = vmul.f32 %v117, %v229
  %v246 = vmul.f32 %v118, %v230
  %v247 = vmul.f32 %v119, %v231
  %v248 = vmul.f32 %v120, %v232
  %v249 = vmul.f32 %v121, %v233
  %v250 = vmul.f32 %v122, %v234
  %v251 = vmul.f32 %v123, %v235
  %v252 = vmul.f32 %v124, %v236
  %v253 = vmul.f32 %v125, %v237
  %v254 = vmul.f32 %v126, %v238
  %v255 = vmul.f32 %v127, %v239
  %v256 = vmul.f32 %v128, %v240
  %v257 = vmul.f32 %v129, %v241
  %v258 = vmul.f32 %v130, %v242
  %v259 = vld [vmem:[%s1] sm:$0x1]
  %v261 = vlaneseq
  %v262 = vshrl.u32 %v261, 7
  %v263 = vsub.s32 0, %v262
  %v264 = vrot.slane %v259, %v263
  %v266 = vmul.f32 %v243, %v264
  %v267 = vmul.f32 %v244, %v264
  %v268 = vmul.f32 %v245, %v264
  %v269 = vmul.f32 %v246, %v264
  %v270 = vmul.f32 %v247, %v264
  %v271 = vmul.f32 %v248, %v264
  %v272 = vmul.f32 %v249, %v264
  %v273 = vmul.f32 %v250, %v264
  %v274 = vmul.f32 %v251, %v264
  %v275 = vmul.f32 %v252, %v264
  %v276 = vmul.f32 %v253, %v264
  %v277 = vmul.f32 %v254, %v264
  %v278 = vmul.f32 %v255, %v264
  %v279 = vmul.f32 %v256, %v264
  %v280 = vmul.f32 %v257, %v264
  %v281 = vmul.f32 %v258, %v264
  %v282 = vld [vmem:[%s2] sm:$0x1]
  %v284 = vlaneseq
  %v285 = vshrl.u32 %v284, 7
  %v286 = vsub.s32 0, %v285
  %v287 = vrot.slane %v282, %v286
  %v289 = vadd.f32 %v266, %v287
  %v290 = vadd.f32 %v267, %v287
  %v291 = vadd.f32 %v268, %v287
  %v292 = vadd.f32 %v269, %v287
  %v293 = vadd.f32 %v270, %v287
  %v294 = vadd.f32 %v271, %v287
  %v295 = vadd.f32 %v272, %v287
  %v296 = vadd.f32 %v273, %v287
  %v297 = vadd.f32 %v274, %v287
  %v298 = vadd.f32 %v275, %v287
  %v299 = vadd.f32 %v276, %v287
  %v300 = vadd.f32 %v277, %v287
  %v301 = vadd.f32 %v278, %v287
  %v302 = vadd.f32 %v279, %v287
  %v303 = vadd.f32 %v280, %v287
  %v304 = vadd.f32 %v281, %v287
  %v305 = vpack.c.bf16 %v290, %v289
  %v306 = vpack.c.bf16 %v292, %v291
  %v307 = vpack.c.bf16 %v294, %v293
  %v308 = vpack.c.bf16 %v296, %v295
  %v309 = vpack.c.bf16 %v298, %v297
  %v310 = vpack.c.bf16 %v300, %v299
  %v311 = vpack.c.bf16 %v302, %v301
  %v312 = vpack.c.bf16 %v304, %v303
  %v313 = vld [vmem:[%s3] sm:$0xff]
  %v314 = vld [vmem:[%s3 + $0x8] sm:$0xff]
  %v315 = vld [vmem:[%s4] sm:$0x3]
  %v317 = vlaneseq
  %v318 = vshrl.u32 %v317, 7
  %v319 = vsub.s32 0, %v318
  %v320 = vrot.slane %v315, %v319
  %v321 = vlaneseq
  %v322 = vshrl.u32 %v321, 7
  %v323 = vsub.s32 1, %v322
  %v324 = vrot.slane %v315, %v323
  %v329 = vunpack.c.l.b16 %v313
  %v330 = vunpack.c.h.b16 %v313
  %v331 = vunpack.c.l.b16 %v314
  %v332 = vunpack.c.h.b16 %v314
  %v333 = vpack.c.b16 %v331, %v329
  %v334 = vpack.c.b16 %v332, %v330
  %v338 = vsel %vm49, %v305, 0
  %v341 = vsel %vm49, %v306, 0
  %v344 = vsel %vm49, %v307, 0
  %v347 = vsel %vm49, %v308, 0
  %v350 = vsel %vm49, %v309, 0
  %v353 = vsel %vm49, %v310, 0
  %v356 = vsel %vm49, %v311, 0
  %v359 = vsel %vm49, %v312, 0
  %361 = vmatprep.subr.bf16.mxu0 %v334
  %362 = vmatpush1.bf16.msra.mxu0 %v333
  %363 = vmatprep.subr.bf16.mxu0 0
  %364 = vmatpush1.bf16.msra.mxu0 0
  %365 = vmatprep.subr.bf16.mxu0 0
  %366 = vmatpush1.bf16.msra.mxu0 0
  %367 = vmatprep.subr.bf16.mxu0 0
  %368 = vmatpush1.bf16.msra.mxu0 0
  %369 = vmatprep.subr.bf16.mxu0 0
  %370 = vmatpush1.bf16.msra.mxu0 0
  %371 = vmatprep.subr.bf16.mxu0 0
  %372 = vmatpush1.bf16.msra.mxu0 0
  %373 = vmatprep.subr.bf16.mxu0 0
  %374 = vmatpush1.bf16.msra.mxu0 0
  %375 = vmatprep.subr.bf16.mxu0 0
  %376 = vmatpush1.bf16.msra.mxu0 0
  %377 = vmatprep.subr.bf16.mxu0 0
  %378 = vmatpush1.bf16.msra.mxu0 0
  %379 = vmatprep.subr.bf16.mxu0 0
  %380 = vmatpush1.bf16.msra.mxu0 0
  %381 = vmatprep.subr.bf16.mxu0 0
  %382 = vmatpush1.bf16.msra.mxu0 0
  %383 = vmatprep.subr.bf16.mxu0 0
  %384 = vmatpush1.bf16.msra.mxu0 0
  %385 = vmatprep.subr.bf16.mxu0 0
  %386 = vmatpush1.bf16.msra.mxu0 0
  %387 = vmatprep.subr.bf16.mxu0 0
  %388 = vmatpush1.bf16.msra.mxu0 0
  %389 = vmatprep.subr.bf16.mxu0 0
  %390 = vmatpush1.bf16.msra.mxu0 0
  %391 = vmatprep.subr.bf16.mxu0 0
  %392 = vmatpush1.bf16.msra.mxu0 0
  %393 = vmatprep.mubr.bf16.mxu0 0
  %394 = vmatmul.mubr.bf16.gmra.mrb[0].mxu0 %v338
  %v395 = vpop.f32.mrb[0].mxu0
  %v396 = vadd.f32 %v320, %v395
  %v397 = vpop.f32.mrb[0].mxu0
  %v398 = vadd.f32 %v324, %v397
  %v399 = vpop.f32.mrb[0].mxu0
  %v400 = vadd.f32 %v320, %v399
  %v401 = vpop.f32.mrb[0].mxu0
  %v402 = vadd.f32 %v324, %v401
  %403 = vmatprep.mubr.bf16.mxu0 0
  %404 = vmatmul.mubr.bf16.gmra.mrb[0].mxu0 %v341
  %v405 = vpop.f32.mrb[0].mxu0
  %v406 = vadd.f32 %v320, %v405
  %v407 = vpop.f32.mrb[0].mxu0
  %v408 = vadd.f32 %v324, %v407
  %v409 = vpop.f32.mrb[0].mxu0
  %v410 = vadd.f32 %v320, %v409
  %v411 = vpop.f32.mrb[0].mxu0
  %v412 = vadd.f32 %v324, %v411
  %413 = vmatprep.mubr.bf16.mxu0 0
  %414 = vmatmul.mubr.bf16.gmra.mrb[0].mxu0 %v344
  %v415 = vpop.f32.mrb[0].mxu0
  %v416 = vadd.f32 %v320, %v415
  %v417 = vpop.f32.mrb[0].mxu0
  %v418 = vadd.f32 %v324, %v417
  %v419 = vpop.f32.mrb[0].mxu0
  %v420 = vadd.f32 %v320, %v419
  %v421 = vpop.f32.mrb[0].mxu0
  %v422 = vadd.f32 %v324, %v421
  %423 = vmatprep.mubr.bf16.mxu0 0
  %424 = vmatmul.mubr.bf16.gmra.mrb[0].mxu0 %v347
  %v425 = vpop.f32.mrb[0].mxu0
  %v426 = vadd.f32 %v320, %v425
  %v427 = vpop.f32.mrb[0].mxu0
  %v428 = vadd.f32 %v324, %v427
  %v429 = vpop.f32.mrb[0].mxu0
  %v430 = vadd.f32 %v320, %v429
  %v431 = vpop.f32.mrb[0].mxu0
  %v432 = vadd.f32 %v324, %v431
  %433 = vmatprep.mubr.bf16.mxu0 0
  %434 = vmatmul.mubr.bf16.gmra.mrb[0].mxu0 %v350
  %v435 = vpop.f32.mrb[0].mxu0
  %v436 = vadd.f32 %v320, %v435
  %v437 = vpop.f32.mrb[0].mxu0
  %v438 = vadd.f32 %v324, %v437
  %v439 = vpop.f32.mrb[0].mxu0
  %v440 = vadd.f32 %v320, %v439
  %v441 = vpop.f32.mrb[0].mxu0
  %v442 = vadd.f32 %v324, %v441
  %443 = vmatprep.mubr.bf16.mxu0 0
  %444 = vmatmul.mubr.bf16.gmra.mrb[0].mxu0 %v353
  %v445 = vpop.f32.mrb[0].mxu0
  %v446 = vadd.f32 %v320, %v445
  %v447 = vpop.f32.mrb[0].mxu0
  %v448 = vadd.f32 %v324, %v447
  %v449 = vpop.f32.mrb[0].mxu0
  %v450 = vadd.f32 %v320, %v449
  %v451 = vpop.f32.mrb[0].mxu0
  %v452 = vadd.f32 %v324, %v451
  %453 = vmatprep.mubr.bf16.mxu0 0
  %454 = vmatmul.mubr.bf16.gmra.mrb[0].mxu0 %v356
  %v455 = vpop.f32.mrb[0].mxu0
  %v456 = vadd.f32 %v320, %v455
  %v457 = vpop.f32.mrb[0].mxu0
  %v458 = vadd.f32 %v324, %v457
  %v459 = vpop.f32.mrb[0].mxu0
  %v460 = vadd.f32 %v320, %v459
  %v461 = vpop.f32.mrb[0].mxu0
  %v462 = vadd.f32 %v324, %v461
  %463 = vmatprep.mubr.bf16.mxu0 0
  %464 = vmatmul.mubr.bf16.gmra.mrb[0].mxu0 %v359
  %v465 = vpop.f32.mrb[0].mxu0
  %v466 = vadd.f32 %v320, %v465
  %v467 = vpop.f32.mrb[0].mxu0
  %v468 = vadd.f32 %v324, %v467
  %v469 = vpop.f32.mrb[0].mxu0
  %v470 = vadd.f32 %v320, %v469
  %v471 = vpop.f32.mrb[0].mxu0
  %v472 = vadd.f32 %v324, %v471
  %473 = vdwg.mxu0
  %474 = vst [vmem:[#allocation2] sm:$0xff] %v396
  %475 = vst [vmem:[#allocation2 + $0x8] sm:$0xff] %v400
  %476 = vst [vmem:[#allocation2 + $0x10] sm:$0xff] %v406
  %477 = vst [vmem:[#allocation2 + $0x18] sm:$0xff] %v410
  %478 = vst [vmem:[#allocation2 + $0x20] sm:$0xff] %v416
  %479 = vst [vmem:[#allocation2 + $0x28] sm:$0xff] %v420
  %480 = vst [vmem:[#allocation2 + $0x30] sm:$0xff] %v426
  %481 = vst [vmem:[#allocation2 + $0x38] sm:$0xff] %v430
  %482 = vst [vmem:[#allocation2 + $0x40] sm:$0xff] %v436
  %483 = vst [vmem:[#allocation2 + $0x48] sm:$0xff] %v440
  %484 = vst [vmem:[#allocation2 + $0x50] sm:$0xff] %v446
  %485 = vst [vmem:[#allocation2 + $0x58] sm:$0xff] %v450
  %486 = vst [vmem:[#allocation2 + $0x60] sm:$0xff] %v456
  %487 = vst [vmem:[#allocation2 + $0x68] sm:$0xff] %v460
  %488 = vst [vmem:[#allocation2 + $0x70] sm:$0xff] %v466
  %489 = vst [vmem:[#allocation2 + $0x78] sm:$0xff] %v470
  %490 = vst [vmem:[#allocation3] sm:$0xff] %v398
  %491 = vst [vmem:[#allocation3 + $0x8] sm:$0xff] %v402
  %492 = vst [vmem:[#allocation3 + $0x10] sm:$0xff] %v408
  %493 = vst [vmem:[#allocation3 + $0x18] sm:$0xff] %v412
  %494 = vst [vmem:[#allocation3 + $0x20] sm:$0xff] %v418
  %495 = vst [vmem:[#allocation3 + $0x28] sm:$0xff] %v422
  %496 = vst [vmem:[#allocation3 + $0x30] sm:$0xff] %v428
  %497 = vst [vmem:[#allocation3 + $0x38] sm:$0xff] %v432
  %498 = vst [vmem:[#allocation3 + $0x40] sm:$0xff] %v438
  %499 = vst [vmem:[#allocation3 + $0x48] sm:$0xff] %v442
  %500 = vst [vmem:[#allocation3 + $0x50] sm:$0xff] %v448
  %501 = vst [vmem:[#allocation3 + $0x58] sm:$0xff] %v452
  %502 = vst [vmem:[#allocation3 + $0x60] sm:$0xff] %v458
  %503 = vst [vmem:[#allocation3 + $0x68] sm:$0xff] %v462
  %504 = vst [vmem:[#allocation3 + $0x70] sm:$0xff] %v468
  %505 = vst [vmem:[#allocation3 + $0x78] sm:$0xff] %v472
  %v506 = vld [vmem:[%s5] sm:$0xf]
  %v507 = vld [vmem:[%s5 + $0x4] sm:$0xf]
  %v508 = vld [vmem:[%s5 + $0x8] sm:$0xf]
  %v509 = vld [vmem:[%s5 + $0xc] sm:$0xf]
  %v510 = vld [vmem:[%s6] sm:$0xf]
  %v511 = vld [vmem:[%s6 + $0x4] sm:$0xf]
  %v512 = vld [vmem:[%s6 + $0x8] sm:$0xf]
  %v513 = vld [vmem:[%s6 + $0xc] sm:$0xf]
  %v514 = vld [vmem:[#allocation2] sm:$0xff]
  %v515 = vld [vmem:[#allocation2 + $0x8] sm:$0xff]
  %v520 = vunpack.c.l.b16 %v506
  %v521 = vunpack.c.l.b16 %v507
  %v522 = vunpack.c.l.b16 %v508
  %v523 = vunpack.c.l.b16 %v509
  %v524 = vpack.c.b16 %v521, %v520
  %v525 = vpack.c.b16 %v523, %v522
  %vm528 = vcmask 261120
  %v530 = vsel %vm528, 0, 0
  %532 = vmatprep.subr.bf16.mxu0 0
  %533 = vmatpush1.bf16.msra.mxu0 %v524
  %534 = vmatprep.subr.bf16.mxu0 0
  %535 = vmatpush1.bf16.msra.mxu0 %v525
  %536 = vmatprep.subr.bf16.mxu0 0
  %537 = vmatpush1.bf16.msra.mxu0 0
  %538 = vmatprep.subr.bf16.mxu0 0
  %539 = vmatpush1.bf16.msra.mxu0 0
  %540 = vmatprep.subr.bf16.mxu0 0
  %541 = vmatpush1.bf16.msra.mxu0 0
  %542 = vmatprep.subr.bf16.mxu0 0
  %543 = vmatpush1.bf16.msra.mxu0 0
  %544 = vmatprep.subr.bf16.mxu0 0
  %545 = vmatpush1.bf16.msra.mxu0 0
  %546 = vmatprep.subr.bf16.mxu0 0
  %547 = vmatpush1.bf16.msra.mxu0 0
  %548 = vmatprep.subr.bf16.mxu0 0
  %549 = vmatpush1.bf16.msra.mxu0 0
  %550 = vmatprep.subr.bf16.mxu0 0
  %551 = vmatpush1.bf16.msra.mxu0 0
  %552 = vmatprep.subr.bf16.mxu0 0
  %553 = vmatpush1.bf16.msra.mxu0 0
  %554 = vmatprep.subr.bf16.mxu0 0
  %555 = vmatpush1.bf16.msra.mxu0 0
  %556 = vmatprep.subr.bf16.mxu0 0
  %557 = vmatpush1.bf16.msra.mxu0 0
  %558 = vmatprep.subr.bf16.mxu0 0
  %559 = vmatpush1.bf16.msra.mxu0 0
  %560 = vmatprep.subr.bf16.mxu0 0
  %561 = vmatpush1.bf16.msra.mxu0 0
  %562 = vmatprep.subr.bf16.mxu0 0
  %563 = vmatpush1.bf16.msra.mxu0 0
  %564 = vmatprep.mubr.bf16.mxu0 0
  %565 = vmatmul.mubr.bf16.gmra.mrb[0].mxu0 %v530
  %v566 = vpop.f32.mrb[0].mxu0
  %v567 = vadd.f32 0.0, %v566
  %v568 = vpop.f32.mrb[0].mxu0
  %v569 = vpop.f32.mrb[0].mxu0
  %v570 = vadd.f32 0.0, %v569
  %v571 = vpop.f32.mrb[0].mxu0
  %572 = vdwg.mxu0
  %v573 = vadd.f32 %v514, %v567
  %v574 = vadd.f32 %v515, %v570
  %s575 = scalar_lea.vmem [#allocation3], 112
  %v576 = vld [vmem:[%s575] sm:$0xff]
  %v577 = vld [vmem:[%s575 + $0x8] sm:$0xff]
  %v582 = vunpack.c.l.b16 %v510
  %v583 = vunpack.c.l.b16 %v511
  %v584 = vunpack.c.l.b16 %v512
  %v585 = vunpack.c.l.b16 %v513
  %v586 = vpack.c.b16 %v583, %v582
  %v587 = vpack.c.b16 %v585, %v584
  %590 = vmatprep.subr.bf16.mxu0 0
  %591 = vmatpush1.bf16.msra.mxu0 %v586
  %592 = vmatprep.subr.bf16.mxu0 0
  %593 = vmatpush1.bf16.msra.mxu0 %v587
  %594 = vmatprep.subr.bf16.mxu0 0
  %595 = vmatpush1.bf16.msra.mxu0 0
  %596 = vmatprep.subr.bf16.mxu0 0
  %597 = vmatpush1.bf16.msra.mxu0 0
  %598 = vmatprep.subr.bf16.mxu0 0
  %599 = vmatpush1.bf16.msra.mxu0 0
  %600 = vmatprep.subr.bf16.mxu0 0
  %601 = vmatpush1.bf16.msra.mxu0 0
  %602 = vmatprep.subr.bf16.mxu0 0
  %603 = vmatpush1.bf16.msra.mxu0 0
  %604 = vmatprep.subr.bf16.mxu0 0
  %605 = vmatpush1.bf16.msra.mxu0 0
  %606 = vmatprep.subr.bf16.mxu0 0
  %607 = vmatpush1.bf16.msra.mxu0 0
  %608 = vmatprep.subr.bf16.mxu0 0
  %609 = vmatpush1.bf16.msra.mxu0 0
  %610 = vmatprep.subr.bf16.mxu0 0
  %611 = vmatpush1.bf16.msra.mxu0 0
  %612 = vmatprep.subr.bf16.mxu0 0
  %613 = vmatpush1.bf16.msra.mxu0 0
  %614 = vmatprep.subr.bf16.mxu0 0
  %615 = vmatpush1.bf16.msra.mxu0 0
  %616 = vmatprep.subr.bf16.mxu0 0
  %617 = vmatpush1.bf16.msra.mxu0 0
  %618 = vmatprep.subr.bf16.mxu0 0
  %619 = vmatpush1.bf16.msra.mxu0 0
  %620 = vmatprep.subr.bf16.mxu0 0
  %621 = vmatpush1.bf16.msra.mxu0 0
  %622 = vmatprep.mubr.bf16.mxu0 0
  %623 = vmatmul.mubr.bf16.gmra.mrb[0].mxu0 %v530
  %v624 = vpop.f32.mrb[0].mxu0
  %v625 = vadd.f32 0.0, %v624
  %v626 = vpop.f32.mrb[0].mxu0
  %v627 = vpop.f32.mrb[0].mxu0
  %v628 = vadd.f32 0.0, %v627
  %v629 = vpop.f32.mrb[0].mxu0
  %630 = vdwg.mxu0
  %v631 = vadd.f32 %v576, %v625
  %v632 = vadd.f32 %v577, %v628
  %v633 = vxor.u32 %v573, 2147483648
  %v634 = vxor.u32 %v574, 2147483648
  %v635 = vmul.f32 %v633, 1.442695
  %v636 = vpow.pop %v635
  %v637 = vmul.f32 %v634, 1.442695
  %v638 = vpow.pop %v637
  %v639 = vadd.f32 %v636, 1.0
  %v640 = vadd.f32 %v638, 1.0
  %v641 = vrcp.pop %v639
  %v642 = vmul.f32 1.0, %v641
  %v643 = vrcp.pop %v640
  %v644 = vmul.f32 1.0, %v643
  %v645 = vtanh.pop %v573
  %v646 = vtanh.pop %v574
  %v647 = vmul.f32 %v642, 0.0
  %v648 = vmul.f32 %v644, 0.0
  %651 = vrot.lane.b32.xlu0 %v645, 32
  %v652 = vpop.permute.xlu0 %651
  %653 = vrot.lane.b32.xlu0 %v646, 32
  %v654 = vpop.permute.xlu0 %653
  %v657 = vmul.f32 %v642, %v652
  %v658 = vmul.f32 %v644, %v654
  %661 = vrot.lane.b32.xlu0 %v657, 32
  %v662 = vpop.permute.xlu0 %661
  %663 = vrot.lane.b32.xlu0 %v658, 32
  %v664 = vpop.permute.xlu0 %663
  %v667 = vadd.f32 %v647, %v662
  %v668 = vadd.f32 %v648, %v664
  %v669 = vtanh.pop %v667
  %v670 = vtanh.pop %v668
  %673 = vrot.lane.b32.xlu0 %v669, 32
  %v674 = vpop.permute.xlu0 %673
  %675 = vrot.lane.b32.xlu0 %v670, 32
  %v676 = vpop.permute.xlu0 %675
  %v679 = vmul.f32 %v642, %v674
  %v680 = vmul.f32 %v644, %v676
  %v681 = vxor.u32 %v631, 2147483648
  %v682 = vxor.u32 %v632, 2147483648
  %v683 = vmul.f32 %v681, 1.442695
  %v684 = vpow.pop %v683
  %v685 = vmul.f32 %v682, 1.442695
  %v686 = vpow.pop %v685
  %v687 = vadd.f32 %v684, 1.0
  %v688 = vadd.f32 %v686, 1.0
  %v689 = vrcp.pop %v687
  %v690 = vmul.f32 1.0, %v689
  %v691 = vrcp.pop %v688
  %v692 = vmul.f32 1.0, %v691
  %v693 = vtanh.pop %v631
  %v694 = vtanh.pop %v632
  %v695 = vmul.f32 %v690, 0.0
  %v696 = vmul.f32 %v692, 0.0
  %699 = vrot.lane.b32.xlu0 %v693, 32
  %v700 = vpop.permute.xlu0 %699
  %701 = vrot.lane.b32.xlu0 %v694, 32
  %v702 = vpop.permute.xlu0 %701
  %v705 = vmul.f32 %v690, %v700
  %v706 = vmul.f32 %v692, %v702
  %709 = vrot.lane.b32.xlu0 %v705, 32
  %v710 = vpop.permute.xlu0 %709
  %711 = vrot.lane.b32.xlu0 %v706, 32
  %v712 = vpop.permute.xlu0 %711
  %v715 = vadd.f32 %v695, %v710
  %v716 = vadd.f32 %v696, %v712
  %v717 = vtanh.pop %v715
  %v718 = vtanh.pop %v716
  %721 = vrot.lane.b32.xlu0 %v717, 32
  %v722 = vpop.permute.xlu0 %721
  %723 = vrot.lane.b32.xlu0 %v718, 32
  %v724 = vpop.permute.xlu0 %723
  %v727 = vmul.f32 %v690, %v722
  %v728 = vmul.f32 %v692, %v724
  %v729 = vpack.c.bf16 %v680, %v679
  %731 = vrot.lane.b32.xlu0 %v729, 64
  %v732 = vpop.permute.xlu0 %731
  %734 = vst.msk [vmem:[#allocation4] sm:$0xff] %vm528, %v732
  %v735 = vpack.c.bf16 %v728, %v727
  %737 = vrot.lane.b32.xlu0 %v735, 96
  %v738 = vpop.permute.xlu0 %737
  %s740 = scalar_lea.vmem [#allocation4], 56
  %vm741 = vcmask 523520
  %742 = vst.msk [vmem:[%s740] sm:$0xff] %vm741, %v738
  %s743 = scalar_lea.vmem [#allocation2], 16
  %v744 = vld [vmem:[%s743] sm:$0xff]
  %v745 = vld [vmem:[%s743 + $0x8] sm:$0xff]
  %v747 = vsel %vm528, %v732, 0
  %749 = vmatprep.subr.bf16.mxu0 0
  %750 = vmatpush1.bf16.msra.mxu0 %v524
  %751 = vmatprep.subr.bf16.mxu0 0
  %752 = vmatpush1.bf16.msra.mxu0 %v525
  %753 = vmatprep.subr.bf16.mxu0 0
  %754 = vmatpush1.bf16.msra.mxu0 0
  %755 = vmatprep.subr.bf16.mxu0 0
  %756 = vmatpush1.bf16.msra.mxu0 0
  %757 = vmatprep.subr.bf16.mxu0 0
  %758 = vmatpush1.bf16.msra.mxu0 0
  %759 = vmatprep.subr.bf16.mxu0 0
  %760 = vmatpush1.bf16.msra.mxu0 0
  %761 = vmatprep.subr.bf16.mxu0 0
  %762 = vmatpush1.bf16.msra.mxu0 0
  %763 = vmatprep.subr.bf16.mxu0 0
  %764 = vmatpush1.bf16.msra.mxu0 0
  %765 = vmatprep.subr.bf16.mxu0 0
  %766 = vmatpush1.bf16.msra.mxu0 0
  %767 = vmatprep.subr.bf16.mxu0 0
  %768 = vmatpush1.bf16.msra.mxu0 0
  %769 = vmatprep.subr.bf16.mxu0 0
  %770 = vmatpush1.bf16.msra.mxu0 0
  %771 = vmatprep.subr.bf16.mxu0 0
  %772 = vmatpush1.bf16.msra.mxu0 0
  %773 = vmatprep.subr.bf16.mxu0 0
  %774 = vmatpush1.bf16.msra.mxu0 0
  %775 = vmatprep.subr.bf16.mxu0 0
  %776 = vmatpush1.bf16.msra.mxu0 0
  %777 = vmatprep.subr.bf16.mxu0 0
  %778 = vmatpush1.bf16.msra.mxu0 0
  %779 = vmatprep.subr.bf16.mxu0 0
  %780 = vmatpush1.bf16.msra.mxu0 0
  %781 = vmatprep.mubr.bf16.mxu0 0
  %782 = vmatmul.mubr.bf16.gmra.mrb[0].mxu0 %v747
  %v783 = vpop.f32.mrb[0].mxu0
  %v784 = vadd.f32 0.0, %v783
  %v785 = vpop.f32.mrb[0].mxu0
  %v786 = vpop.f32.mrb[0].mxu0
  %v787 = vadd.f32 0.0, %v786
  %v788 = vpop.f32.mrb[0].mxu0
  %789 = vdwg.mxu0
  %v790 = vadd.f32 %v744, %v784
  %v791 = vadd.f32 %v745, %v787
  %s792 = scalar_lea.vmem [#allocation3], 96
  %v793 = vld [vmem:[%s792] sm:$0xff]
  %v794 = vld [vmem:[%s792 + $0x8] sm:$0xff]
  %795 = vrot.lane.b32.xlu0 %v735, 64
  %v796 = vpop.permute.xlu0 %795
  %v798 = vsel %vm528, %v796, 0
  %800 = vmatprep.subr.bf16.mxu0 0
  %801 = vmatpush1.bf16.msra.mxu0 %v586
  %802 = vmatprep.subr.bf16.mxu0 0
  %803 = vmatpush1.bf16.msra.mxu0 %v587
  %804 = vmatprep.subr.bf16.mxu0 0
  %805 = vmatpush1.bf16.msra.mxu0 0
  %806 = vmatprep.subr.bf16.mxu0 0
  %807 = vmatpush1.bf16.msra.mxu0 0
  %808 = vmatprep.subr.bf16.mxu0 0
  %809 = vmatpush1.bf16.msra.mxu0 0
  %810 = vmatprep.subr.bf16.mxu0 0
  %811 = vmatpush1.bf16.msra.mxu0 0
  %812 = vmatprep.subr.bf16.mxu0 0
  %813 = vmatpush1.bf16.msra.mxu0 0
  %814 = vmatprep.subr.bf16.mxu0 0
  %815 = vmatpush1.bf16.msra.mxu0 0
  %816 = vmatprep.subr.bf16.mxu0 0
  %817 = vmatpush1.bf16.msra.mxu0 0
  %818 = vmatprep.subr.bf16.mxu0 0
  %819 = vmatpush1.bf16.msra.mxu0 0
  %820 = vmatprep.subr.bf16.mxu0 0
  %821 = vmatpush1.bf16.msra.mxu0 0
  %822 = vmatprep.subr.bf16.mxu0 0
  %823 = vmatpush1.bf16.msra.mxu0 0
  %824 = vmatprep.subr.bf16.mxu0 0
  %825 = vmatpush1.bf16.msra.mxu0 0
  %826 = vmatprep.subr.bf16.mxu0 0
  %827 = vmatpush1.bf16.msra.mxu0 0
  %828 = vmatprep.subr.bf16.mxu0 0
  %829 = vmatpush1.bf16.msra.mxu0 0
  %830 = vmatprep.subr.bf16.mxu0 0
  %831 = vmatpush1.bf16.msra.mxu0 0
  %832 = vmatprep.mubr.bf16.mxu0 0
  %833 = vmatmul.mubr.bf16.gmra.mrb[0].mxu0 %v798
  %v834 = vpop.f32.mrb[0].mxu0
  %v835 = vadd.f32 0.0, %v834
  %v836 = vpop.f32.mrb[0].mxu0
  %v837 = vpop.f32.mrb[0].mxu0
  %v838 = vadd.f32 0.0, %v837
  %v839 = vpop.f32.mrb[0].mxu0
  %840 = vdwg.mxu0
  %v841 = vadd.f32 %v793, %v835
  %v842 = vadd.f32 %v794, %v838
  %v843 = vxor.u32 %v790, 2147483648
  %v844 = vxor.u32 %v791, 2147483648
  %v845 = vmul.f32 %v843, 1.442695
  %v846 = vpow.pop %v845
  %v847 = vmul.f32 %v844, 1.442695
  %v848 = vpow.pop %v847
  %v849 = vadd.f32 %v846, 1.0
  %v850 = vadd.f32 %v848, 1.0
  %v851 = vrcp.pop %v849
  %v852 = vmul.f32 1.0, %v851
  %v853 = vrcp.pop %v850
  %v854 = vmul.f32 1.0, %v853
  %v855 = vtanh.pop %v790
  %v856 = vtanh.pop %v791
  %v857 = vmul.f32 %v852, %v667
  %v858 = vmul.f32 %v854, %v668
  %861 = vrot.lane.b32.xlu0 %v855, 32
  %v862 = vpop.permute.xlu0 %861
  %863 = vrot.lane.b32.xlu0 %v856, 32
  %v864 = vpop.permute.xlu0 %863
  %v867 = vmul.f32 %v852, %v862
  %v868 = vmul.f32 %v854, %v864
  %871 = vrot.lane.b32.xlu0 %v867, 32
  %v872 = vpop.permute.xlu0 %871
  %873 = vrot.lane.b32.xlu0 %v868, 32
  %v874 = vpop.permute.xlu0 %873
  %v877 = vadd.f32 %v857, %v872
  %v878 = vadd.f32 %v858, %v874
  %v879 = vtanh.pop %v877
  %v880 = vtanh.pop %v878
  %883 = vrot.lane.b32.xlu0 %v879, 32
  %v884 = vpop.permute.xlu0 %883
  %885 = vrot.lane.b32.xlu0 %v880, 32
  %v886 = vpop.permute.xlu0 %885
  %v889 = vmul.f32 %v852, %v884
  %v890 = vmul.f32 %v854, %v886
  %v891 = vxor.u32 %v841, 2147483648
  %v892 = vxor.u32 %v842, 2147483648
  %v893 = vmul.f32 %v891, 1.442695
  %v894 = vpow.pop %v893
  %v895 = vmul.f32 %v892, 1.442695
  %v896 = vpow.pop %v895
  %v897 = vadd.f32 %v894, 1.0
  %v898 = vadd.f32 %v896, 1.0
  %v899 = vrcp.pop %v897
  %v900 = vmul.f32 1.0, %v899
  %v901 = vrcp.pop %v898
  %v902 = vmul.f32 1.0, %v901
  %v903 = vtanh.pop %v841
  %v904 = vtanh.pop %v842
  %v905 = vmul.f32 %v900, %v715
  %v906 = vmul.f32 %v902, %v716
  %909 = vrot.lane.b32.xlu0 %v903, 32
  %v910 = vpop.permute.xlu0 %909
  %911 = vrot.lane.b32.xlu0 %v904, 32
  %v912 = vpop.permute.xlu0 %911
  %v915 = vmul.f32 %v900, %v910
  %v916 = vmul.f32 %v902, %v912
  %919 = vrot.lane.b32.xlu0 %v915, 32
  %v920 = vpop.permute.xlu0 %919
  %921 = vrot.lane.b32.xlu0 %v916, 32
  %v922 = vpop.permute.xlu0 %921
  %v925 = vadd.f32 %v905, %v920
  %v926 = vadd.f32 %v906, %v922
  %v927 = vtanh.pop %v925
  %v928 = vtanh.pop %v926
  %931 = vrot.lane.b32.xlu0 %v927, 32
  %v932 = vpop.permute.xlu0 %931
  %933 = vrot.lane.b32.xlu0 %v928, 32
  %v934 = vpop.permute.xlu0 %933
  %v937 = vmul.f32 %v900, %v932
  %v938 = vmul.f32 %v902, %v934
  %v939 = vpack.c.bf16 %v890, %v889
  %941 = vrot.lane.b32.xlu0 %v939, 64
  %v942 = vpop.permute.xlu0 %941
  %s944 = scalar_lea.vmem [#allocation4], 8
  %945 = vst.msk [vmem:[%s944] sm:$0xff] %vm528, %v942
  %v946 = vpack.c.bf16 %v938, %v937
  %948 = vrot.lane.b32.xlu0 %v946, 96
  %v949 = vpop.permute.xlu0 %948
  %s951 = scalar_lea.vmem [#allocation4], 48
  %952 = vst.msk [vmem:[%s951] sm:$0xff] %vm741, %v949
  %s953 = scalar_lea.vmem [#allocation2], 32
  %v954 = vld [vmem:[%s953] sm:$0xff]
  %v955 = vld [vmem:[%s953 + $0x8] sm:$0xff]
  %v957 = vsel %vm528, %v942, 0
  %959 = vmatprep.subr.bf16.mxu0 0
  %960 = vmatpush1.bf16.msra.mxu0 %v524
  %961 = vmatprep.subr.bf16.mxu0 0
  %962 = vmatpush1.bf16.msra.mxu0 %v525
  %963 = vmatprep.subr.bf16.mxu0 0
  %964 = vmatpush1.bf16.msra.mxu0 0
  %965 = vmatprep.subr.bf16.mxu0 0
  %966 = vmatpush1.bf16.msra.mxu0 0
  %967 = vmatprep.subr.bf16.mxu0 0
  %968 = vmatpush1.bf16.msra.mxu0 0
  %969 = vmatprep.subr.bf16.mxu0 0
  %970 = vmatpush1.bf16.msra.mxu0 0
  %971 = vmatprep.subr.bf16.mxu0 0
  %972 = vmatpush1.bf16.msra.mxu0 0
  %973 = vmatprep.subr.bf16.mxu0 0
  %974 = vmatpush1.bf16.msra.mxu0 0
  %975 = vmatprep.subr.bf16.mxu0 0
  %976 = vmatpush1.bf16.msra.mxu0 0
  %977 = vmatprep.subr.bf16.mxu0 0
  %978 = vmatpush1.bf16.msra.mxu0 0
  %979 = vmatprep.subr.bf16.mxu0 0
  %980 = vmatpush1.bf16.msra.mxu0 0
  %981 = vmatprep.subr.bf16.mxu0 0
  %982 = vmatpush1.bf16.msra.mxu0 0
  %983 = vmatprep.subr.bf16.mxu0 0
  %984 = vmatpush1.bf16.msra.mxu0 0
  %985 = vmatprep.subr.bf16.mxu0 0
  %986 = vmatpush1.bf16.msra.mxu0 0
  %987 = vmatprep.subr.bf16.mxu0 0
  %988 = vmatpush1.bf16.msra.mxu0 0
  %989 = vmatprep.subr.bf16.mxu0 0
  %990 = vmatpush1.bf16.msra.mxu0 0
  %991 = vmatprep.mubr.bf16.mxu0 0
  %992 = vmatmul.mubr.bf16.gmra.mrb[0].mxu0 %v957
  %v993 = vpop.f32.mrb[0].mxu0
  %v994 = vadd.f32 0.0, %v993
  %v995 = vpop.f32.mrb[0].mxu0
  %v996 = vpop.f32.mrb[0].mxu0
  %v997 = vadd.f32 0.0, %v996
  %v998 = vpop.f32.mrb[0].mxu0
  %999 = vdwg.mxu0
  %v1000 = vadd.f32 %v954, %v994
  %v1001 = vadd.f32 %v955, %v997
  %s1002 = scalar_lea.vmem [#allocation3], 80
  %v1003 = vld [vmem:[%s1002] sm:$0xff]
  %v1004 = vld [vmem:[%s1002 + $0x8] sm:$0xff]
  %1005 = vrot.lane.b32.xlu0 %v946, 64
  %v1006 = vpop.permute.xlu0 %1005
  %v1008 = vsel %vm528, %v1006, 0
  %1010 = vmatprep.subr.bf16.mxu0 0
  %1011 = vmatpush1.bf16.msra.mxu0 %v586
  %1012 = vmatprep.subr.bf16.mxu0 0
  %1013 = vmatpush1.bf16.msra.mxu0 %v587
  %1014 = vmatprep.subr.bf16.mxu0 0
  %1015 = vmatpush1.bf16.msra.mxu0 0
  %1016 = vmatprep.subr.bf16.mxu0 0
  %1017 = vmatpush1.bf16.msra.mxu0 0
  %1018 = vmatprep.subr.bf16.mxu0 0
  %1019 = vmatpush1.bf16.msra.mxu0 0
  %1020 = vmatprep.subr.bf16.mxu0 0
  %1021 = vmatpush1.bf16.msra.mxu0 0
  %1022 = vmatprep.subr.bf16.mxu0 0
  %1023 = vmatpush1.bf16.msra.mxu0 0
  %1024 = vmatprep.subr.bf16.mxu0 0
  %1025 = vmatpush1.bf16.msra.mxu0 0
  %1026 = vmatprep.subr.bf16.mxu0 0
  %1027 = vmatpush1.bf16.msra.mxu0 0
  %1028 = vmatprep.subr.bf16.mxu0 0
  %1029 = vmatpush1.bf16.msra.mxu0 0
  %1030 = vmatprep.subr.bf16.mxu0 0
  %1031 = vmatpush1.bf16.msra.mxu0 0
  %1032 = vmatprep.subr.bf16.mxu0 0
  %1033 = vmatpush1.bf16.msra.mxu0 0
  %1034 = vmatprep.subr.bf16.mxu0 0
  %1035 = vmatpush1.bf16.msra.mxu0 0
  %1036 = vmatprep.subr.bf16.mxu0 0
  %1037 = vmatpush1.bf16.msra.mxu0 0
  %1038 = vmatprep.subr.bf16.mxu0 0
  %1039 = vmatpush1.bf16.msra.mxu0 0
  %1040 = vmatprep.subr.bf16.mxu0 0
  %1041 = vmatpush1.bf16.msra.mxu0 0
  %1042 = vmatprep.mubr.bf16.mxu0 0
  %1043 = vmatmul.mubr.bf16.gmra.mrb[0].mxu0 %v1008
  %v1044 = vpop.f32.mrb[0].mxu0
  %v1045 = vadd.f32 0.0, %v1044
  %v1046 = vpop.f32.mrb[0].mxu0
  %v1047 = vpop.f32.mrb[0].mxu0
  %v1048 = vadd.f32 0.0, %v1047
  %v1049 = vpop.f32.mrb[0].mxu0
  %1050 = vdwg.mxu0
  %v1051 = vadd.f32 %v1003, %v1045
  %v1052 = vadd.f32 %v1004, %v1048
  %v1053 = vxor.u32 %v1000, 2147483648
  %v1054 = vxor.u32 %v1001, 2147483648
  %v1055 = vmul.f32 %v1053, 1.442695
  %v1056 = vpow.pop %v1055
  %v1057 = vmul.f32 %v1054, 1.442695
  %v1058 = vpow.pop %v1057
  %v1059 = vadd.f32 %v1056, 1.0
  %v1060 = vadd.f32 %v1058, 1.0
  %v1061 = vrcp.pop %v1059
  %v1062 = vmul.f32 1.0, %v1061
  %v1063 = vrcp.pop %v1060
  %v1064 = vmul.f32 1.0, %v1063
  %v1065 = vtanh.pop %v1000
  %v1066 = vtanh.pop %v1001
  %v1067 = vmul.f32 %v1062, %v877
  %v1068 = vmul.f32 %v1064, %v878
  %1071 = vrot.lane.b32.xlu0 %v1065, 32
  %v1072 = vpop.permute.xlu0 %1071
  %1073 = vrot.lane.b32.xlu0 %v1066, 32
  %v1074 = vpop.permute.xlu0 %1073
  %v1077 = vmul.f32 %v1062, %v1072
  %v1078 = vmul.f32 %v1064, %v1074
  %1081 = vrot.lane.b32.xlu0 %v1077, 32
  %v1082 = vpop.permute.xlu0 %1081
  %1083 = vrot.lane.b32.xlu0 %v1078, 32
  %v1084 = vpop.permute.xlu0 %1083
  %v1087 = vadd.f32 %v1067, %v1082
  %v1088 = vadd.f32 %v1068, %v1084
  %v1089 = vtanh.pop %v1087
  %v1090 = vtanh.pop %v1088
  %1093 = vrot.lane.b32.xlu0 %v1089, 32
  %v1094 = vpop.permute.xlu0 %1093
  %1095 = vrot.lane.b32.xlu0 %v1090, 32
  %v1096 = vpop.permute.xlu0 %1095
  %v1099 = vmul.f32 %v1062, %v1094
  %v1100 = vmul.f32 %v1064, %v1096
  %v1101 = vxor.u32 %v1051, 2147483648
  %v1102 = vxor.u32 %v1052, 2147483648
  %v1103 = vmul.f32 %v1101, 1.442695
  %v1104 = vpow.pop %v1103
  %v1105 = vmul.f32 %v1102, 1.442695
  %v1106 = vpow.pop %v1105
  %v1107 = vadd.f32 %v1104, 1.0
  %v1108 = vadd.f32 %v1106, 1.0
  %v1109 = vrcp.pop %v1107
  %v1110 = vmul.f32 1.0, %v1109
  %v1111 = vrcp.pop %v1108
  %v1112 = vmul.f32 1.0, %v1111
  %v1113 = vtanh.pop %v1051
  %v1114 = vtanh.pop %v1052
  %v1115 = vmul.f32 %v1110, %v925
  %v1116 = vmul.f32 %v1112, %v926
  %1119 = vrot.lane.b32.xlu0 %v1113, 32
  %v1120 = vpop.permute.xlu0 %1119
  %1121 = vrot.lane.b32.xlu0 %v1114, 32
  %v1122 = vpop.permute.xlu0 %1121
  %v1125 = vmul.f32 %v1110, %v1120
  %v1126 = vmul.f32 %v1112, %v1122
  %1129 = vrot.lane.b32.xlu0 %v1125, 32
  %v1130 = vpop.permute.xlu0 %1129
  %1131 = vrot.lane.b32.xlu0 %v1126, 32
  %v1132 = vpop.permute.xlu0 %1131
  %v1135 = vadd.f32 %v1115, %v1130
  %v1136 = vadd.f32 %v1116, %v1132
  %v1137 = vtanh.pop %v1135
  %v1138 = vtanh.pop %v1136
  %1141 = vrot.lane.b32.xlu0 %v1137, 32
  %v1142 = vpop.permute.xlu0 %1141
  %1143 = vrot.lane.b32.xlu0 %v1138, 32
  %v1144 = vpop.permute.xlu0 %1143
  %v1147 = vmul.f32 %v1110, %v1142
  %v1148 = vmul.f32 %v1112, %v1144
  %v1149 = vpack.c.bf16 %v1100, %v1099
  %1151 = vrot.lane.b32.xlu0 %v1149, 64
  %v1152 = vpop.permute.xlu0 %1151
  %s1154 = scalar_lea.vmem [#allocation4], 16
  %1155 = vst.msk [vmem:[%s1154] sm:$0xff] %vm528, %v1152
  %v1156 = vpack.c.bf16 %v1148, %v1147
  %1158 = vrot.lane.b32.xlu0 %v1156, 96
  %v1159 = vpop.permute.xlu0 %1158
  %s1161 = scalar_lea.vmem [#allocation4], 40
  %1162 = vst.msk [vmem:[%s1161] sm:$0xff] %vm741, %v1159
  %s1163 = scalar_lea.vmem [#allocation2], 48
  %v1164 = vld [vmem:[%s1163] sm:$0xff]
  %v1165 = vld [vmem:[%s1163 + $0x8] sm:$0xff]
  %v1167 = vsel %vm528, %v1152, 0
  %1169 = vmatprep.subr.bf16.mxu0 0
  %1170 = vmatpush1.bf16.msra.mxu0 %v524
  %1171 = vmatprep.subr.bf16.mxu0 0
  %1172 = vmatpush1.bf16.msra.mxu0 %v525
  %1173 = vmatprep.subr.bf16.mxu0 0
  %1174 = vmatpush1.bf16.msra.mxu0 0
  %1175 = vmatprep.subr.bf16.mxu0 0
  %1176 = vmatpush1.bf16.msra.mxu0 0
  %1177 = vmatprep.subr.bf16.mxu0 0
  %1178 = vmatpush1.bf16.msra.mxu0 0
  %1179 = vmatprep.subr.bf16.mxu0 0
  %1180 = vmatpush1.bf16.msra.mxu0 0
  %1181 = vmatprep.subr.bf16.mxu0 0
  %1182 = vmatpush1.bf16.msra.mxu0 0
  %1183 = vmatprep.subr.bf16.mxu0 0
  %1184 = vmatpush1.bf16.msra.mxu0 0
  %1185 = vmatprep.subr.bf16.mxu0 0
  %1186 = vmatpush1.bf16.msra.mxu0 0
  %1187 = vmatprep.subr.bf16.mxu0 0
  %1188 = vmatpush1.bf16.msra.mxu0 0
  %1189 = vmatprep.subr.bf16.mxu0 0
  %1190 = vmatpush1.bf16.msra.mxu0 0
  %1191 = vmatprep.subr.bf16.mxu0 0
  %1192 = vmatpush1.bf16.msra.mxu0 0
  %1193 = vmatprep.subr.bf16.mxu0 0
  %1194 = vmatpush1.bf16.msra.mxu0 0
  %1195 = vmatprep.subr.bf16.mxu0 0
  %1196 = vmatpush1.bf16.msra.mxu0 0
  %1197 = vmatprep.subr.bf16.mxu0 0
  %1198 = vmatpush1.bf16.msra.mxu0 0
  %1199 = vmatprep.subr.bf16.mxu0 0
  %1200 = vmatpush1.bf16.msra.mxu0 0
  %1201 = vmatprep.mubr.bf16.mxu0 0
  %1202 = vmatmul.mubr.bf16.gmra.mrb[0].mxu0 %v1167
  %v1203 = vpop.f32.mrb[0].mxu0
  %v1204 = vadd.f32 0.0, %v1203
  %v1205 = vpop.f32.mrb[0].mxu0
  %v1206 = vpop.f32.mrb[0].mxu0
  %v1207 = vadd.f32 0.0, %v1206
  %v1208 = vpop.f32.mrb[0].mxu0
  %1209 = vdwg.mxu0
  %v1210 = vadd.f32 %v1164, %v1204
  %v1211 = vadd.f32 %v1165, %v1207
  %s1212 = scalar_lea.vmem [#allocation3], 64
  %v1213 = vld [vmem:[%s1212] sm:$0xff]
  %v1214 = vld [vmem:[%s1212 + $0x8] sm:$0xff]
  %1215 = vrot.lane.b32.xlu0 %v1156, 64
  %v1216 = vpop.permute.xlu0 %1215
  %v1218 = vsel %vm528, %v1216, 0
  %1220 = vmatprep.subr.bf16.mxu0 0
  %1221 = vmatpush1.bf16.msra.mxu0 %v586
  %1222 = vmatprep.subr.bf16.mxu0 0
  %1223 = vmatpush1.bf16.msra.mxu0 %v587
  %1224 = vmatprep.subr.bf16.mxu0 0
  %1225 = vmatpush1.bf16.msra.mxu0 0
  %1226 = vmatprep.subr.bf16.mxu0 0
  %1227 = vmatpush1.bf16.msra.mxu0 0
  %1228 = vmatprep.subr.bf16.mxu0 0
  %1229 = vmatpush1.bf16.msra.mxu0 0
  %1230 = vmatprep.subr.bf16.mxu0 0
  %1231 = vmatpush1.bf16.msra.mxu0 0
  %1232 = vmatprep.subr.bf16.mxu0 0
  %1233 = vmatpush1.bf16.msra.mxu0 0
  %1234 = vmatprep.subr.bf16.mxu0 0
  %1235 = vmatpush1.bf16.msra.mxu0 0
  %1236 = vmatprep.subr.bf16.mxu0 0
  %1237 = vmatpush1.bf16.msra.mxu0 0
  %1238 = vmatprep.subr.bf16.mxu0 0
  %1239 = vmatpush1.bf16.msra.mxu0 0
  %1240 = vmatprep.subr.bf16.mxu0 0
  %1241 = vmatpush1.bf16.msra.mxu0 0
  %1242 = vmatprep.subr.bf16.mxu0 0
  %1243 = vmatpush1.bf16.msra.mxu0 0
  %1244 = vmatprep.subr.bf16.mxu0 0
  %1245 = vmatpush1.bf16.msra.mxu0 0
  %1246 = vmatprep.subr.bf16.mxu0 0
  %1247 = vmatpush1.bf16.msra.mxu0 0
  %1248 = vmatprep.subr.bf16.mxu0 0
  %1249 = vmatpush1.bf16.msra.mxu0 0
  %1250 = vmatprep.subr.bf16.mxu0 0
  %1251 = vmatpush1.bf16.msra.mxu0 0
  %1252 = vmatprep.mubr.bf16.mxu0 0
  %1253 = vmatmul.mubr.bf16.gmra.mrb[0].mxu0 %v1218
  %v1254 = vpop.f32.mrb[0].mxu0
  %v1255 = vadd.f32 0.0, %v1254
  %v1256 = vpop.f32.mrb[0].mxu0
  %v1257 = vpop.f32.mrb[0].mxu0
  %v1258 = vadd.f32 0.0, %v1257
  %v1259 = vpop.f32.mrb[0].mxu0
  %1260 = vdwg.mxu0
  %v1261 = vadd.f32 %v1213, %v1255
  %v1262 = vadd.f32 %v1214, %v1258
  %v1263 = vxor.u32 %v1210, 2147483648
  %v1264 = vxor.u32 %v1211, 2147483648
  %v1265 = vmul.f32 %v1263, 1.442695
  %v1266 = vpow.pop %v1265
  %v1267 = vmul.f32 %v1264, 1.442695
  %v1268 = vpow.pop %v1267
  %v1269 = vadd.f32 %v1266, 1.0
  %v1270 = vadd.f32 %v1268, 1.0
  %v1271 = vrcp.pop %v1269
  %v1272 = vmul.f32 1.0, %v1271
  %v1273 = vrcp.pop %v1270
  %v1274 = vmul.f32 1.0, %v1273
  %v1275 = vtanh.pop %v1210
  %v1276 = vtanh.pop %v1211
  %v1277 = vmul.f32 %v1272, %v1087
  %v1278 = vmul.f32 %v1274, %v1088
  %1281 = vrot.lane.b32.xlu0 %v1275, 32
  %v1282 = vpop.permute.xlu0 %1281
  %1283 = vrot.lane.b32.xlu0 %v1276, 32
  %v1284 = vpop.permute.xlu0 %1283
  %v1287 = vmul.f32 %v1272, %v1282
  %v1288 = vmul.f32 %v1274, %v1284
  %1291 = vrot.lane.b32.xlu0 %v1287, 32
  %v1292 = vpop.permute.xlu0 %1291
  %1293 = vrot.lane.b32.xlu0 %v1288, 32
  %v1294 = vpop.permute.xlu0 %1293
  %v1297 = vadd.f32 %v1277, %v1292
  %v1298 = vadd.f32 %v1278, %v1294
  %v1299 = vtanh.pop %v1297
  %v1300 = vtanh.pop %v1298
  %1303 = vrot.lane.b32.xlu0 %v1299, 32
  %v1304 = vpop.permute.xlu0 %1303
  %1305 = vrot.lane.b32.xlu0 %v1300, 32
  %v1306 = vpop.permute.xlu0 %1305
  %v1309 = vmul.f32 %v1272, %v1304
  %v1310 = vmul.f32 %v1274, %v1306
  %v1311 = vxor.u32 %v1261, 2147483648
  %v1312 = vxor.u32 %v1262, 2147483648
  %v1313 = vmul.f32 %v1311, 1.442695
  %v1314 = vpow.pop %v1313
  %v1315 = vmul.f32 %v1312, 1.442695
  %v1316 = vpow.pop %v1315
  %v1317 = vadd.f32 %v1314, 1.0
  %v1318 = vadd.f32 %v1316, 1.0
  %v1319 = vrcp.pop %v1317
  %v1320 = vmul.f32 1.0, %v1319
  %v1321 = vrcp.pop %v1318
  %v1322 = vmul.f32 1.0, %v1321
  %v1323 = vtanh.pop %v1261
  %v1324 = vtanh.pop %v1262
  %v1325 = vmul.f32 %v1320, %v1135
  %v1326 = vmul.f32 %v1322, %v1136
  %1329 = vrot.lane.b32.xlu0 %v1323, 32
  %v1330 = vpop.permute.xlu0 %1329
  %1331 = vrot.lane.b32.xlu0 %v1324, 32
  %v1332 = vpop.permute.xlu0 %1331
  %v1335 = vmul.f32 %v1320, %v1330
  %v1336 = vmul.f32 %v1322, %v1332
  %1339 = vrot.lane.b32.xlu0 %v1335, 32
  %v1340 = vpop.permute.xlu0 %1339
  %1341 = vrot.lane.b32.xlu0 %v1336, 32
  %v1342 = vpop.permute.xlu0 %1341
  %v1345 = vadd.f32 %v1325, %v1340
  %v1346 = vadd.f32 %v1326, %v1342
  %v1347 = vtanh.pop %v1345
  %v1348 = vtanh.pop %v1346
  %1351 = vrot.lane.b32.xlu0 %v1347, 32
  %v1352 = vpop.permute.xlu0 %1351
  %1353 = vrot.lane.b32.xlu0 %v1348, 32
  %v1354 = vpop.permute.xlu0 %1353
  %v1357 = vmul.f32 %v1320, %v1352
  %v1358 = vmul.f32 %v1322, %v1354
  %v1359 = vpack.c.bf16 %v1310, %v1309
  %1361 = vrot.lane.b32.xlu0 %v1359, 64
  %v1362 = vpop.permute.xlu0 %1361
  %s1364 = scalar_lea.vmem [#allocation4], 24
  %1365 = vst.msk [vmem:[%s1364] sm:$0xff] %vm528, %v1362
  %v1366 = vpack.c.bf16 %v1358, %v1357
  %1368 = vrot.lane.b32.xlu0 %v1366, 96
  %v1369 = vpop.permute.xlu0 %1368
  %s1371 = scalar_lea.vmem [#allocation4], 32
  %1372 = vst.msk [vmem:[%s1371] sm:$0xff] %vm741, %v1369
  %s1373 = scalar_lea.vmem [#allocation2], 64
  %v1374 = vld [vmem:[%s1373] sm:$0xff]
  %v1375 = vld [vmem:[%s1373 + $0x8] sm:$0xff]
  %v1377 = vsel %vm528, %v1362, 0
  %1379 = vmatprep.subr.bf16.mxu0 0
  %1380 = vmatpush1.bf16.msra.mxu0 %v524
  %1381 = vmatprep.subr.bf16.mxu0 0
  %1382 = vmatpush1.bf16.msra.mxu0 %v525
  %1383 = vmatprep.subr.bf16.mxu0 0
  %1384 = vmatpush1.bf16.msra.mxu0 0
  %1385 = vmatprep.subr.bf16.mxu0 0
  %1386 = vmatpush1.bf16.msra.mxu0 0
  %1387 = vmatprep.subr.bf16.mxu0 0
  %1388 = vmatpush1.bf16.msra.mxu0 0
  %1389 = vmatprep.subr.bf16.mxu0 0
  %1390 = vmatpush1.bf16.msra.mxu0 0
  %1391 = vmatprep.subr.bf16.mxu0 0
  %1392 = vmatpush1.bf16.msra.mxu0 0
  %1393 = vmatprep.subr.bf16.mxu0 0
  %1394 = vmatpush1.bf16.msra.mxu0 0
  %1395 = vmatprep.subr.bf16.mxu0 0
  %1396 = vmatpush1.bf16.msra.mxu0 0
  %1397 = vmatprep.subr.bf16.mxu0 0
  %1398 = vmatpush1.bf16.msra.mxu0 0
  %1399 = vmatprep.subr.bf16.mxu0 0
  %1400 = vmatpush1.bf16.msra.mxu0 0
  %1401 = vmatprep.subr.bf16.mxu0 0
  %1402 = vmatpush1.bf16.msra.mxu0 0
  %1403 = vmatprep.subr.bf16.mxu0 0
  %1404 = vmatpush1.bf16.msra.mxu0 0
  %1405 = vmatprep.subr.bf16.mxu0 0
  %1406 = vmatpush1.bf16.msra.mxu0 0
  %1407 = vmatprep.subr.bf16.mxu0 0
  %1408 = vmatpush1.bf16.msra.mxu0 0
  %1409 = vmatprep.subr.bf16.mxu0 0
  %1410 = vmatpush1.bf16.msra.mxu0 0
  %1411 = vmatprep.mubr.bf16.mxu0 0
  %1412 = vmatmul.mubr.bf16.gmra.mrb[0].mxu0 %v1377
  %v1413 = vpop.f32.mrb[0].mxu0
  %v1414 = vadd.f32 0.0, %v1413
  %v1415 = vpop.f32.mrb[0].mxu0
  %v1416 = vpop.f32.mrb[0].mxu0
  %v1417 = vadd.f32 0.0, %v1416
  %v1418 = vpop.f32.mrb[0].mxu0
  %1419 = vdwg.mxu0
  %v1420 = vadd.f32 %v1374, %v1414
  %v1421 = vadd.f32 %v1375, %v1417
  %s1422 = scalar_lea.vmem [#allocation3], 48
  %v1423 = vld [vmem:[%s1422] sm:$0xff]
  %v1424 = vld [vmem:[%s1422 + $0x8] sm:$0xff]
  %1425 = vrot.lane.b32.xlu0 %v1366, 64
  %v1426 = vpop.permute.xlu0 %1425
  %v1428 = vsel %vm528, %v1426, 0
  %1430 = vmatprep.subr.bf16.mxu0 0
  %1431 = vmatpush1.bf16.msra.mxu0 %v586
  %1432 = vmatprep.subr.bf16.mxu0 0
  %1433 = vmatpush1.bf16.msra.mxu0 %v587
  %1434 = vmatprep.subr.bf16.mxu0 0
  %1435 = vmatpush1.bf16.msra.mxu0 0
  %1436 = vmatprep.subr.bf16.mxu0 0
  %1437 = vmatpush1.bf16.msra.mxu0 0
  %1438 = vmatprep.subr.bf16.mxu0 0
  %1439 = vmatpush1.bf16.msra.mxu0 0
  %1440 = vmatprep.subr.bf16.mxu0 0
  %1441 = vmatpush1.bf16.msra.mxu0 0
  %1442 = vmatprep.subr.bf16.mxu0 0
  %1443 = vmatpush1.bf16.msra.mxu0 0
  %1444 = vmatprep.subr.bf16.mxu0 0
  %1445 = vmatpush1.bf16.msra.mxu0 0
  %1446 = vmatprep.subr.bf16.mxu0 0
  %1447 = vmatpush1.bf16.msra.mxu0 0
  %1448 = vmatprep.subr.bf16.mxu0 0
  %1449 = vmatpush1.bf16.msra.mxu0 0
  %1450 = vmatprep.subr.bf16.mxu0 0
  %1451 = vmatpush1.bf16.msra.mxu0 0
  %1452 = vmatprep.subr.bf16.mxu0 0
  %1453 = vmatpush1.bf16.msra.mxu0 0
  %1454 = vmatprep.subr.bf16.mxu0 0
  %1455 = vmatpush1.bf16.msra.mxu0 0
  %1456 = vmatprep.subr.bf16.mxu0 0
  %1457 = vmatpush1.bf16.msra.mxu0 0
  %1458 = vmatprep.subr.bf16.mxu0 0
  %1459 = vmatpush1.bf16.msra.mxu0 0
  %1460 = vmatprep.subr.bf16.mxu0 0
  %1461 = vmatpush1.bf16.msra.mxu0 0
  %1462 = vmatprep.mubr.bf16.mxu0 0
  %1463 = vmatmul.mubr.bf16.gmra.mrb[0].mxu0 %v1428
  %v1464 = vpop.f32.mrb[0].mxu0
  %v1465 = vadd.f32 0.0, %v1464
  %v1466 = vpop.f32.mrb[0].mxu0
  %v1467 = vpop.f32.mrb[0].mxu0
  %v1468 = vadd.f32 0.0, %v1467
  %v1469 = vpop.f32.mrb[0].mxu0
  %1470 = vdwg.mxu0
  %v1471 = vadd.f32 %v1423, %v1465
  %v1472 = vadd.f32 %v1424, %v1468
  %v1473 = vxor.u32 %v1420, 2147483648
  %v1474 = vxor.u32 %v1421, 2147483648
  %v1475 = vmul.f32 %v1473, 1.442695
  %v1476 = vpow.pop %v1475
  %v1477 = vmul.f32 %v1474, 1.442695
  %v1478 = vpow.pop %v1477
  %v1479 = vadd.f32 %v1476, 1.0
  %v1480 = vadd.f32 %v1478, 1.0
  %v1481 = vrcp.pop %v1479
  %v1482 = vmul.f32 1.0, %v1481
  %v1483 = vrcp.pop %v1480
  %v1484 = vmul.f32 1.0, %v1483
  %v1485 = vtanh.pop %v1420
  %v1486 = vtanh.pop %v1421
  %v1487 = vmul.f32 %v1482, %v1297
  %v1488 = vmul.f32 %v1484, %v1298
  %1491 = vrot.lane.b32.xlu0 %v1485, 32
  %v1492 = vpop.permute.xlu0 %1491
  %1493 = vrot.lane.b32.xlu0 %v1486, 32
  %v1494 = vpop.permute.xlu0 %1493
  %v1497 = vmul.f32 %v1482, %v1492
  %v1498 = vmul.f32 %v1484, %v1494
  %1501 = vrot.lane.b32.xlu0 %v1497, 32
  %v1502 = vpop.permute.xlu0 %1501
  %1503 = vrot.lane.b32.xlu0 %v1498, 32
  %v1504 = vpop.permute.xlu0 %1503
  %v1507 = vadd.f32 %v1487, %v1502
  %v1508 = vadd.f32 %v1488, %v1504
  %v1509 = vtanh.pop %v1507
  %v1510 = vtanh.pop %v1508
  %1513 = vrot.lane.b32.xlu0 %v1509, 32
  %v1514 = vpop.permute.xlu0 %1513
  %1515 = vrot.lane.b32.xlu0 %v1510, 32
  %v1516 = vpop.permute.xlu0 %1515
  %v1519 = vmul.f32 %v1482, %v1514
  %v1520 = vmul.f32 %v1484, %v1516
  %v1521 = vxor.u32 %v1471, 2147483648
  %v1522 = vxor.u32 %v1472, 2147483648
  %v1523 = vmul.f32 %v1521, 1.442695
  %v1524 = vpow.pop %v1523
  %v1525 = vmul.f32 %v1522, 1.442695
  %v1526 = vpow.pop %v1525
  %v1527 = vadd.f32 %v1524, 1.0
  %v1528 = vadd.f32 %v1526, 1.0
  %v1529 = vrcp.pop %v1527
  %v1530 = vmul.f32 1.0, %v1529
  %v1531 = vrcp.pop %v1528
  %v1532 = vmul.f32 1.0, %v1531
  %v1533 = vtanh.pop %v1471
  %v1534 = vtanh.pop %v1472
  %v1535 = vmul.f32 %v1530, %v1345
  %v1536 = vmul.f32 %v1532, %v1346
  %1539 = vrot.lane.b32.xlu0 %v1533, 32
  %v1540 = vpop.permute.xlu0 %1539
  %1541 = vrot.lane.b32.xlu0 %v1534, 32
  %v1542 = vpop.permute.xlu0 %1541
  %v1545 = vmul.f32 %v1530, %v1540
  %v1546 = vmul.f32 %v1532, %v1542
  %1549 = vrot.lane.b32.xlu0 %v1545, 32
  %v1550 = vpop.permute.xlu0 %1549
  %1551 = vrot.lane.b32.xlu0 %v1546, 32
  %v1552 = vpop.permute.xlu0 %1551
  %v1555 = vadd.f32 %v1535, %v1550
  %v1556 = vadd.f32 %v1536, %v1552
  %v1557 = vtanh.pop %v1555
  %v1558 = vtanh.pop %v1556
  %1561 = vrot.lane.b32.xlu0 %v1557, 32
  %v1562 = vpop.permute.xlu0 %1561
  %1563 = vrot.lane.b32.xlu0 %v1558, 32
  %v1564 = vpop.permute.xlu0 %1563
  %v1567 = vmul.f32 %v1530, %v1562
  %v1568 = vmul.f32 %v1532, %v1564
  %v1569 = vpack.c.bf16 %v1520, %v1519
  %1571 = vrot.lane.b32.xlu0 %v1569, 64
  %v1572 = vpop.permute.xlu0 %1571
  %1574 = vst.msk [vmem:[%s1371] sm:$0xff] %vm528, %v1572
  %v1575 = vpack.c.bf16 %v1568, %v1567
  %1577 = vrot.lane.b32.xlu0 %v1575, 96
  %v1578 = vpop.permute.xlu0 %1577
  %1580 = vst.msk [vmem:[%s1364] sm:$0xff] %vm741, %v1578
  %s1581 = scalar_lea.vmem [#allocation2], 80
  %v1582 = vld [vmem:[%s1581] sm:$0xff]
  %v1583 = vld [vmem:[%s1581 + $0x8] sm:$0xff]
  %v1585 = vsel %vm528, %v1572, 0
  %1587 = vmatprep.subr.bf16.mxu0 0
  %1588 = vmatpush1.bf16.msra.mxu0 %v524
  %1589 = vmatprep.subr.bf16.mxu0 0
  %1590 = vmatpush1.bf16.msra.mxu0 %v525
  %1591 = vmatprep.subr.bf16.mxu0 0
  %1592 = vmatpush1.bf16.msra.mxu0 0
  %1593 = vmatprep.subr.bf16.mxu0 0
  %1594 = vmatpush1.bf16.msra.mxu0 0
  %1595 = vmatprep.subr.bf16.mxu0 0
  %1596 = vmatpush1.bf16.msra.mxu0 0
  %1597 = vmatprep.subr.bf16.mxu0 0
  %1598 = vmatpush1.bf16.msra.mxu0 0
  %1599 = vmatprep.subr.bf16.mxu0 0
  %1600 = vmatpush1.bf16.msra.mxu0 0
  %1601 = vmatprep.subr.bf16.mxu0 0
  %1602 = vmatpush1.bf16.msra.mxu0 0
  %1603 = vmatprep.subr.bf16.mxu0 0
  %1604 = vmatpush1.bf16.msra.mxu0 0
  %1605 = vmatprep.subr.bf16.mxu0 0
  %1606 = vmatpush1.bf16.msra.mxu0 0
  %1607 = vmatprep.subr.bf16.mxu0 0
  %1608 = vmatpush1.bf16.msra.mxu0 0
  %1609 = vmatprep.subr.bf16.mxu0 0
  %1610 = vmatpush1.bf16.msra.mxu0 0
  %1611 = vmatprep.subr.bf16.mxu0 0
  %1612 = vmatpush1.bf16.msra.mxu0 0
  %1613 = vmatprep.subr.bf16.mxu0 0
  %1614 = vmatpush1.bf16.msra.mxu0 0
  %1615 = vmatprep.subr.bf16.mxu0 0
  %1616 = vmatpush1.bf16.msra.mxu0 0
  %1617 = vmatprep.subr.bf16.mxu0 0
  %1618 = vmatpush1.bf16.msra.mxu0 0
  %1619 = vmatprep.mubr.bf16.mxu0 0
  %1620 = vmatmul.mubr.bf16.gmra.mrb[0].mxu0 %v1585
  %v1621 = vpop.f32.mrb[0].mxu0
  %v1622 = vadd.f32 0.0, %v1621
  %v1623 = vpop.f32.mrb[0].mxu0
  %v1624 = vpop.f32.mrb[0].mxu0
  %v1625 = vadd.f32 0.0, %v1624
  %v1626 = vpop.f32.mrb[0].mxu0
  %1627 = vdwg.mxu0
  %v1628 = vadd.f32 %v1582, %v1622
  %v1629 = vadd.f32 %v1583, %v1625
  %s1630 = scalar_lea.vmem [#allocation3], 32
  %v1631 = vld [vmem:[%s1630] sm:$0xff]
  %v1632 = vld [vmem:[%s1630 + $0x8] sm:$0xff]
  %1633 = vrot.lane.b32.xlu0 %v1575, 64
  %v1634 = vpop.permute.xlu0 %1633
  %v1636 = vsel %vm528, %v1634, 0
  %1638 = vmatprep.subr.bf16.mxu0 0
  %1639 = vmatpush1.bf16.msra.mxu0 %v586
  %1640 = vmatprep.subr.bf16.mxu0 0
  %1641 = vmatpush1.bf16.msra.mxu0 %v587
  %1642 = vmatprep.subr.bf16.mxu0 0
  %1643 = vmatpush1.bf16.msra.mxu0 0
  %1644 = vmatprep.subr.bf16.mxu0 0
  %1645 = vmatpush1.bf16.msra.mxu0 0
  %1646 = vmatprep.subr.bf16.mxu0 0
  %1647 = vmatpush1.bf16.msra.mxu0 0
  %1648 = vmatprep.subr.bf16.mxu0 0
  %1649 = vmatpush1.bf16.msra.mxu0 0
  %1650 = vmatprep.subr.bf16.mxu0 0
  %1651 = vmatpush1.bf16.msra.mxu0 0
  %1652 = vmatprep.subr.bf16.mxu0 0
  %1653 = vmatpush1.bf16.msra.mxu0 0
  %1654 = vmatprep.subr.bf16.mxu0 0
  %1655 = vmatpush1.bf16.msra.mxu0 0
  %1656 = vmatprep.subr.bf16.mxu0 0
  %1657 = vmatpush1.bf16.msra.mxu0 0
  %1658 = vmatprep.subr.bf16.mxu0 0
  %1659 = vmatpush1.bf16.msra.mxu0 0
  %1660 = vmatprep.subr.bf16.mxu0 0
  %1661 = vmatpush1.bf16.msra.mxu0 0
  %1662 = vmatprep.subr.bf16.mxu0 0
  %1663 = vmatpush1.bf16.msra.mxu0 0
  %1664 = vmatprep.subr.bf16.mxu0 0
  %1665 = vmatpush1.bf16.msra.mxu0 0
  %1666 = vmatprep.subr.bf16.mxu0 0
  %1667 = vmatpush1.bf16.msra.mxu0 0
  %1668 = vmatprep.subr.bf16.mxu0 0
  %1669 = vmatpush1.bf16.msra.mxu0 0
  %1670 = vmatprep.mubr.bf16.mxu0 0
  %1671 = vmatmul.mubr.bf16.gmra.mrb[0].mxu0 %v1636
  %v1672 = vpop.f32.mrb[0].mxu0
  %v1673 = vadd.f32 0.0, %v1672
  %v1674 = vpop.f32.mrb[0].mxu0
  %v1675 = vpop.f32.mrb[0].mxu0
  %v1676 = vadd.f32 0.0, %v1675
  %v1677 = vpop.f32.mrb[0].mxu0
  %1678 = vdwg.mxu0
  %v1679 = vadd.f32 %v1631, %v1673
  %v1680 = vadd.f32 %v1632, %v1676
  %v1681 = vxor.u32 %v1628, 2147483648
  %v1682 = vxor.u32 %v1629, 2147483648
  %v1683 = vmul.f32 %v1681, 1.442695
  %v1684 = vpow.pop %v1683
  %v1685 = vmul.f32 %v1682, 1.442695
  %v1686 = vpow.pop %v1685
  %v1687 = vadd.f32 %v1684, 1.0
  %v1688 = vadd.f32 %v1686, 1.0
  %v1689 = vrcp.pop %v1687
  %v1690 = vmul.f32 1.0, %v1689
  %v1691 = vrcp.pop %v1688
  %v1692 = vmul.f32 1.0, %v1691
  %v1693 = vtanh.pop %v1628
  %v1694 = vtanh.pop %v1629
  %v1695 = vmul.f32 %v1690, %v1507
  %v1696 = vmul.f32 %v1692, %v1508
  %1699 = vrot.lane.b32.xlu0 %v1693, 32
  %v1700 = vpop.permute.xlu0 %1699
  %1701 = vrot.lane.b32.xlu0 %v1694, 32
  %v1702 = vpop.permute.xlu0 %1701
  %v1705 = vmul.f32 %v1690, %v1700
  %v1706 = vmul.f32 %v1692, %v1702
  %1709 = vrot.lane.b32.xlu0 %v1705, 32
  %v1710 = vpop.permute.xlu0 %1709
  %1711 = vrot.lane.b32.xlu0 %v1706, 32
  %v1712 = vpop.permute.xlu0 %1711
  %v1715 = vadd.f32 %v1695, %v1710
  %v1716 = vadd.f32 %v1696, %v1712
  %v1717 = vtanh.pop %v1715
  %v1718 = vtanh.pop %v1716
  %1721 = vrot.lane.b32.xlu0 %v1717, 32
  %v1722 = vpop.permute.xlu0 %1721
  %1723 = vrot.lane.b32.xlu0 %v1718, 32
  %v1724 = vpop.permute.xlu0 %1723
  %v1727 = vmul.f32 %v1690, %v1722
  %v1728 = vmul.f32 %v1692, %v1724
  %v1729 = vxor.u32 %v1679, 2147483648
  %v1730 = vxor.u32 %v1680, 2147483648
  %v1731 = vmul.f32 %v1729, 1.442695
  %v1732 = vpow.pop %v1731
  %v1733 = vmul.f32 %v1730, 1.442695
  %v1734 = vpow.pop %v1733
  %v1735 = vadd.f32 %v1732, 1.0
  %v1736 = vadd.f32 %v1734, 1.0
  %v1737 = vrcp.pop %v1735
  %v1738 = vmul.f32 1.0, %v1737
  %v1739 = vrcp.pop %v1736
  %v1740 = vmul.f32 1.0, %v1739
  %v1741 = vtanh.pop %v1679
  %v1742 = vtanh.pop %v1680
  %v1743 = vmul.f32 %v1738, %v1555
  %v1744 = vmul.f32 %v1740, %v1556
  %1747 = vrot.lane.b32.xlu0 %v1741, 32
  %v1748 = vpop.permute.xlu0 %1747
  %1749 = vrot.lane.b32.xlu0 %v1742, 32
  %v1750 = vpop.permute.xlu0 %1749
  %v1753 = vmul.f32 %v1738, %v1748
  %v1754 = vmul.f32 %v1740, %v1750
  %1757 = vrot.lane.b32.xlu0 %v1753, 32
  %v1758 = vpop.permute.xlu0 %1757
  %1759 = vrot.lane.b32.xlu0 %v1754, 32
  %v1760 = vpop.permute.xlu0 %1759
  %v1763 = vadd.f32 %v1743, %v1758
  %v1764 = vadd.f32 %v1744, %v1760
  %v1765 = vtanh.pop %v1763
  %v1766 = vtanh.pop %v1764
  %1769 = vrot.lane.b32.xlu0 %v1765, 32
  %v1770 = vpop.permute.xlu0 %1769
  %1771 = vrot.lane.b32.xlu0 %v1766, 32
  %v1772 = vpop.permute.xlu0 %1771
  %v1775 = vmul.f32 %v1738, %v1770
  %v1776 = vmul.f32 %v1740, %v1772
  %v1777 = vpack.c.bf16 %v1728, %v1727
  %1779 = vrot.lane.b32.xlu0 %v1777, 64
  %v1780 = vpop.permute.xlu0 %1779
  %1782 = vst.msk [vmem:[%s1161] sm:$0xff] %vm528, %v1780
  %v1783 = vpack.c.bf16 %v1776, %v1775
  %1785 = vrot.lane.b32.xlu0 %v1783, 96
  %v1786 = vpop.permute.xlu0 %1785
  %1788 = vst.msk [vmem:[%s1154] sm:$0xff] %vm741, %v1786
  %s1789 = scalar_lea.vmem [#allocation2], 96
  %v1790 = vld [vmem:[%s1789] sm:$0xff]
  %v1791 = vld [vmem:[%s1789 + $0x8] sm:$0xff]
  %v1793 = vsel %vm528, %v1780, 0
  %1795 = vmatprep.subr.bf16.mxu0 0
  %1796 = vmatpush1.bf16.msra.mxu0 %v524
  %1797 = vmatprep.subr.bf16.mxu0 0
  %1798 = vmatpush1.bf16.msra.mxu0 %v525
  %1799 = vmatprep.subr.bf16.mxu0 0
  %1800 = vmatpush1.bf16.msra.mxu0 0
  %1801 = vmatprep.subr.bf16.mxu0 0
  %1802 = vmatpush1.bf16.msra.mxu0 0
  %1803 = vmatprep.subr.bf16.mxu0 0
  %1804 = vmatpush1.bf16.msra.mxu0 0
  %1805 = vmatprep.subr.bf16.mxu0 0
  %1806 = vmatpush1.bf16.msra.mxu0 0
  %1807 = vmatprep.subr.bf16.mxu0 0
  %1808 = vmatpush1.bf16.msra.mxu0 0
  %1809 = vmatprep.subr.bf16.mxu0 0
  %1810 = vmatpush1.bf16.msra.mxu0 0
  %1811 = vmatprep.subr.bf16.mxu0 0
  %1812 = vmatpush1.bf16.msra.mxu0 0
  %1813 = vmatprep.subr.bf16.mxu0 0
  %1814 = vmatpush1.bf16.msra.mxu0 0
  %1815 = vmatprep.subr.bf16.mxu0 0
  %1816 = vmatpush1.bf16.msra.mxu0 0
  %1817 = vmatprep.subr.bf16.mxu0 0
  %1818 = vmatpush1.bf16.msra.mxu0 0
  %1819 = vmatprep.subr.bf16.mxu0 0
  %1820 = vmatpush1.bf16.msra.mxu0 0
  %1821 = vmatprep.subr.bf16.mxu0 0
  %1822 = vmatpush1.bf16.msra.mxu0 0
  %1823 = vmatprep.subr.bf16.mxu0 0
  %1824 = vmatpush1.bf16.msra.mxu0 0
  %1825 = vmatprep.subr.bf16.mxu0 0
  %1826 = vmatpush1.bf16.msra.mxu0 0
  %1827 = vmatprep.mubr.bf16.mxu0 0
  %1828 = vmatmul.mubr.bf16.gmra.mrb[0].mxu0 %v1793
  %v1829 = vpop.f32.mrb[0].mxu0
  %v1830 = vadd.f32 0.0, %v1829
  %v1831 = vpop.f32.mrb[0].mxu0
  %v1832 = vpop.f32.mrb[0].mxu0
  %v1833 = vadd.f32 0.0, %v1832
  %v1834 = vpop.f32.mrb[0].mxu0
  %1835 = vdwg.mxu0
  %v1836 = vadd.f32 %v1790, %v1830
  %v1837 = vadd.f32 %v1791, %v1833
  %s1838 = scalar_lea.vmem [#allocation3], 16
  %v1839 = vld [vmem:[%s1838] sm:$0xff]
  %v1840 = vld [vmem:[%s1838 + $0x8] sm:$0xff]
  %1841 = vrot.lane.b32.xlu0 %v1783, 64
  %v1842 = vpop.permute.xlu0 %1841
  %v1844 = vsel %vm528, %v1842, 0
  %1846 = vmatprep.subr.bf16.mxu0 0
  %1847 = vmatpush1.bf16.msra.mxu0 %v586
  %1848 = vmatprep.subr.bf16.mxu0 0
  %1849 = vmatpush1.bf16.msra.mxu0 %v587
  %1850 = vmatprep.subr.bf16.mxu0 0
  %1851 = vmatpush1.bf16.msra.mxu0 0
  %1852 = vmatprep.subr.bf16.mxu0 0
  %1853 = vmatpush1.bf16.msra.mxu0 0
  %1854 = vmatprep.subr.bf16.mxu0 0
  %1855 = vmatpush1.bf16.msra.mxu0 0
  %1856 = vmatprep.subr.bf16.mxu0 0
  %1857 = vmatpush1.bf16.msra.mxu0 0
  %1858 = vmatprep.subr.bf16.mxu0 0
  %1859 = vmatpush1.bf16.msra.mxu0 0
  %1860 = vmatprep.subr.bf16.mxu0 0
  %1861 = vmatpush1.bf16.msra.mxu0 0
  %1862 = vmatprep.subr.bf16.mxu0 0
  %1863 = vmatpush1.bf16.msra.mxu0 0
  %1864 = vmatprep.subr.bf16.mxu0 0
  %1865 = vmatpush1.bf16.msra.mxu0 0
  %1866 = vmatprep.subr.bf16.mxu0 0
  %1867 = vmatpush1.bf16.msra.mxu0 0
  %1868 = vmatprep.subr.bf16.mxu0 0
  %1869 = vmatpush1.bf16.msra.mxu0 0
  %1870 = vmatprep.subr.bf16.mxu0 0
  %1871 = vmatpush1.bf16.msra.mxu0 0
  %1872 = vmatprep.subr.bf16.mxu0 0
  %1873 = vmatpush1.bf16.msra.mxu0 0
  %1874 = vmatprep.subr.bf16.mxu0 0
  %1875 = vmatpush1.bf16.msra.mxu0 0
  %1876 = vmatprep.subr.bf16.mxu0 0
  %1877 = vmatpush1.bf16.msra.mxu0 0
  %1878 = vmatprep.mubr.bf16.mxu0 0
  %1879 = vmatmul.mubr.bf16.gmra.mrb[0].mxu0 %v1844
  %v1880 = vpop.f32.mrb[0].mxu0
  %v1881 = vadd.f32 0.0, %v1880
  %v1882 = vpop.f32.mrb[0].mxu0
  %v1883 = vpop.f32.mrb[0].mxu0
  %v1884 = vadd.f32 0.0, %v1883
  %v1885 = vpop.f32.mrb[0].mxu0
  %1886 = vdwg.mxu0
  %v1887 = vadd.f32 %v1839, %v1881
  %v1888 = vadd.f32 %v1840, %v1884
  %v1889 = vxor.u32 %v1836, 2147483648
  %v1890 = vxor.u32 %v1837, 2147483648
  %v1891 = vmul.f32 %v1889, 1.442695
  %v1892 = vpow.pop %v1891
  %v1893 = vmul.f32 %v1890, 1.442695
  %v1894 = vpow.pop %v1893
  %v1895 = vadd.f32 %v1892, 1.0
  %v1896 = vadd.f32 %v1894, 1.0
  %v1897 = vrcp.pop %v1895
  %v1898 = vmul.f32 1.0, %v1897
  %v1899 = vrcp.pop %v1896
  %v1900 = vmul.f32 1.0, %v1899
  %v1901 = vtanh.pop %v1836
  %v1902 = vtanh.pop %v1837
  %v1903 = vmul.f32 %v1898, %v1715
  %v1904 = vmul.f32 %v1900, %v1716
  %1907 = vrot.lane.b32.xlu0 %v1901, 32
  %v1908 = vpop.permute.xlu0 %1907
  %1909 = vrot.lane.b32.xlu0 %v1902, 32
  %v1910 = vpop.permute.xlu0 %1909
  %v1913 = vmul.f32 %v1898, %v1908
  %v1914 = vmul.f32 %v1900, %v1910
  %1917 = vrot.lane.b32.xlu0 %v1913, 32
  %v1918 = vpop.permute.xlu0 %1917
  %1919 = vrot.lane.b32.xlu0 %v1914, 32
  %v1920 = vpop.permute.xlu0 %1919
  %v1923 = vadd.f32 %v1903, %v1918
  %v1924 = vadd.f32 %v1904, %v1920
  %v1925 = vtanh.pop %v1923
  %v1926 = vtanh.pop %v1924
  %1929 = vrot.lane.b32.xlu0 %v1925, 32
  %v1930 = vpop.permute.xlu0 %1929
  %1931 = vrot.lane.b32.xlu0 %v1926, 32
  %v1932 = vpop.permute.xlu0 %1931
  %v1935 = vmul.f32 %v1898, %v1930
  %v1936 = vmul.f32 %v1900, %v1932
  %v1937 = vxor.u32 %v1887, 2147483648
  %v1938 = vxor.u32 %v1888, 2147483648
  %v1939 = vmul.f32 %v1937, 1.442695
  %v1940 = vpow.pop %v1939
  %v1941 = vmul.f32 %v1938, 1.442695
  %v1942 = vpow.pop %v1941
  %v1943 = vadd.f32 %v1940, 1.0
  %v1944 = vadd.f32 %v1942, 1.0
  %v1945 = vrcp.pop %v1943
  %v1946 = vmul.f32 1.0, %v1945
  %v1947 = vrcp.pop %v1944
  %v1948 = vmul.f32 1.0, %v1947
  %v1949 = vtanh.pop %v1887
  %v1950 = vtanh.pop %v1888
  %v1951 = vmul.f32 %v1946, %v1763
  %v1952 = vmul.f32 %v1948, %v1764
  %1955 = vrot.lane.b32.xlu0 %v1949, 32
  %v1956 = vpop.permute.xlu0 %1955
  %1957 = vrot.lane.b32.xlu0 %v1950, 32
  %v1958 = vpop.permute.xlu0 %1957
  %v1961 = vmul.f32 %v1946, %v1956
  %v1962 = vmul.f32 %v1948, %v1958
  %1965 = vrot.lane.b32.xlu0 %v1961, 32
  %v1966 = vpop.permute.xlu0 %1965
  %1967 = vrot.lane.b32.xlu0 %v1962, 32
  %v1968 = vpop.permute.xlu0 %1967
  %v1971 = vadd.f32 %v1951, %v1966
  %v1972 = vadd.f32 %v1952, %v1968
  %v1973 = vtanh.pop %v1971
  %v1974 = vtanh.pop %v1972
  %1977 = vrot.lane.b32.xlu0 %v1973, 32
  %v1978 = vpop.permute.xlu0 %1977
  %1979 = vrot.lane.b32.xlu0 %v1974, 32
  %v1980 = vpop.permute.xlu0 %1979
  %v1983 = vmul.f32 %v1946, %v1978
  %v1984 = vmul.f32 %v1948, %v1980
  %v1985 = vpack.c.bf16 %v1936, %v1935
  %1987 = vrot.lane.b32.xlu0 %v1985, 64
  %v1988 = vpop.permute.xlu0 %1987
  %1990 = vst.msk [vmem:[%s951] sm:$0xff] %vm528, %v1988
  %v1991 = vpack.c.bf16 %v1984, %v1983
  %1993 = vrot.lane.b32.xlu0 %v1991, 96
  %v1994 = vpop.permute.xlu0 %1993
  %1996 = vst.msk [vmem:[%s944] sm:$0xff] %vm741, %v1994
  %s1997 = scalar_lea.vmem [#allocation2], 112
  %v1998 = vld [vmem:[%s1997] sm:$0xff]
  %v1999 = vld [vmem:[%s1997 + $0x8] sm:$0xff]
  %v2001 = vsel %vm528, %v1988, 0
  %2003 = vmatprep.subr.bf16.mxu0 0
  %2004 = vmatpush1.bf16.msra.mxu0 %v524
  %2005 = vmatprep.subr.bf16.mxu0 0
  %2006 = vmatpush1.bf16.msra.mxu0 %v525
  %2007 = vmatprep.subr.bf16.mxu0 0
  %2008 = vmatpush1.bf16.msra.mxu0 0
  %2009 = vmatprep.subr.bf16.mxu0 0
  %2010 = vmatpush1.bf16.msra.mxu0 0
  %2011 = vmatprep.subr.bf16.mxu0 0
  %2012 = vmatpush1.bf16.msra.mxu0 0
  %2013 = vmatprep.subr.bf16.mxu0 0
  %2014 = vmatpush1.bf16.msra.mxu0 0
  %2015 = vmatprep.subr.bf16.mxu0 0
  %2016 = vmatpush1.bf16.msra.mxu0 0
  %2017 = vmatprep.subr.bf16.mxu0 0
  %2018 = vmatpush1.bf16.msra.mxu0 0
  %2019 = vmatprep.subr.bf16.mxu0 0
  %2020 = vmatpush1.bf16.msra.mxu0 0
  %2021 = vmatprep.subr.bf16.mxu0 0
  %2022 = vmatpush1.bf16.msra.mxu0 0
  %2023 = vmatprep.subr.bf16.mxu0 0
  %2024 = vmatpush1.bf16.msra.mxu0 0
  %2025 = vmatprep.subr.bf16.mxu0 0
  %2026 = vmatpush1.bf16.msra.mxu0 0
  %2027 = vmatprep.subr.bf16.mxu0 0
  %2028 = vmatpush1.bf16.msra.mxu0 0
  %2029 = vmatprep.subr.bf16.mxu0 0
  %2030 = vmatpush1.bf16.msra.mxu0 0
  %2031 = vmatprep.subr.bf16.mxu0 0
  %2032 = vmatpush1.bf16.msra.mxu0 0
  %2033 = vmatprep.subr.bf16.mxu0 0
  %2034 = vmatpush1.bf16.msra.mxu0 0
  %2035 = vmatprep.mubr.bf16.mxu0 0
  %2036 = vmatmul.mubr.bf16.gmra.mrb[0].mxu0 %v2001
  %v2037 = vpop.f32.mrb[0].mxu0
  %v2038 = vadd.f32 0.0, %v2037
  %v2039 = vpop.f32.mrb[0].mxu0
  %v2040 = vpop.f32.mrb[0].mxu0
  %v2041 = vadd.f32 0.0, %v2040
  %v2042 = vpop.f32.mrb[0].mxu0
  %2043 = vdwg.mxu0
  %v2044 = vadd.f32 %v1998, %v2038
  %v2045 = vadd.f32 %v1999, %v2041
  %v2046 = vld [vmem:[#allocation3] sm:$0xff]
  %v2047 = vld [vmem:[#allocation3 + $0x8] sm:$0xff]
  %2048 = vrot.lane.b32.xlu0 %v1991, 64
  %v2049 = vpop.permute.xlu0 %2048
  %v2051 = vsel %vm528, %v2049, 0
  %2053 = vmatprep.subr.bf16.mxu0 0
  %2054 = vmatpush1.bf16.msra.mxu0 %v586
  %2055 = vmatprep.subr.bf16.mxu0 0
  %2056 = vmatpush1.bf16.msra.mxu0 %v587
  %2057 = vmatprep.subr.bf16.mxu0 0
  %2058 = vmatpush1.bf16.msra.mxu0 0
  %2059 = vmatprep.subr.bf16.mxu0 0
  %2060 = vmatpush1.bf16.msra.mxu0 0
  %2061 = vmatprep.subr.bf16.mxu0 0
  %2062 = vmatpush1.bf16.msra.mxu0 0
  %2063 = vmatprep.subr.bf16.mxu0 0
  %2064 = vmatpush1.bf16.msra.mxu0 0
  %2065 = vmatprep.subr.bf16.mxu0 0
  %2066 = vmatpush1.bf16.msra.mxu0 0
  %2067 = vmatprep.subr.bf16.mxu0 0
  %2068 = vmatpush1.bf16.msra.mxu0 0
  %2069 = vmatprep.subr.bf16.mxu0 0
  %2070 = vmatpush1.bf16.msra.mxu0 0
  %2071 = vmatprep.subr.bf16.mxu0 0
  %2072 = vmatpush1.bf16.msra.mxu0 0
  %2073 = vmatprep.subr.bf16.mxu0 0
  %2074 = vmatpush1.bf16.msra.mxu0 0
  %2075 = vmatprep.subr.bf16.mxu0 0
  %2076 = vmatpush1.bf16.msra.mxu0 0
  %2077 = vmatprep.subr.bf16.mxu0 0
  %2078 = vmatpush1.bf16.msra.mxu0 0
  %2079 = vmatprep.subr.bf16.mxu0 0
  %2080 = vmatpush1.bf16.msra.mxu0 0
  %2081 = vmatprep.subr.bf16.mxu0 0
  %2082 = vmatpush1.bf16.msra.mxu0 0
  %2083 = vmatprep.subr.bf16.mxu0 0
  %2084 = vmatpush1.bf16.msra.mxu0 0
  %2085 = vmatprep.mubr.bf16.mxu0 0
  %2086 = vmatmul.mubr.bf16.gmra.mrb[0].mxu0 %v2051
  %v2087 = vpop.f32.mrb[0].mxu0
  %v2088 = vadd.f32 0.0, %v2087
  %v2089 = vpop.f32.mrb[0].mxu0
  %v2090 = vpop.f32.mrb[0].mxu0
  %v2091 = vadd.f32 0.0, %v2090
  %v2092 = vpop.f32.mrb[0].mxu0
  %2093 = vdwg.mxu0
  %v2094 = vadd.f32 %v2046, %v2088
  %v2095 = vadd.f32 %v2047, %v2091
  %v2096 = vxor.u32 %v2044, 2147483648
  %v2097 = vxor.u32 %v2045, 2147483648
  %v2098 = vmul.f32 %v2096, 1.442695
  %v2099 = vpow.pop %v2098
  %v2100 = vmul.f32 %v2097, 1.442695
  %v2101 = vpow.pop %v2100
  %v2102 = vadd.f32 %v2099, 1.0
  %v2103 = vadd.f32 %v2101, 1.0
  %v2104 = vrcp.pop %v2102
  %v2105 = vmul.f32 1.0, %v2104
  %v2106 = vrcp.pop %v2103
  %v2107 = vmul.f32 1.0, %v2106
  %v2108 = vtanh.pop %v2044
  %v2109 = vtanh.pop %v2045
  %v2110 = vmul.f32 %v2105, %v1923
  %v2111 = vmul.f32 %v2107, %v1924
  %2114 = vrot.lane.b32.xlu0 %v2108, 32
  %v2115 = vpop.permute.xlu0 %2114
  %2116 = vrot.lane.b32.xlu0 %v2109, 32
  %v2117 = vpop.permute.xlu0 %2116
  %v2120 = vmul.f32 %v2105, %v2115
  %v2121 = vmul.f32 %v2107, %v2117
  %2124 = vrot.lane.b32.xlu0 %v2120, 32
  %v2125 = vpop.permute.xlu0 %2124
  %2126 = vrot.lane.b32.xlu0 %v2121, 32
  %v2127 = vpop.permute.xlu0 %2126
  %v2130 = vadd.f32 %v2110, %v2125
  %v2131 = vadd.f32 %v2111, %v2127
  %v2132 = vtanh.pop %v2130
  %v2133 = vtanh.pop %v2131
  %2136 = vrot.lane.b32.xlu0 %v2132, 32
  %v2137 = vpop.permute.xlu0 %2136
  %2138 = vrot.lane.b32.xlu0 %v2133, 32
  %v2139 = vpop.permute.xlu0 %2138
  %v2142 = vmul.f32 %v2105, %v2137
  %v2143 = vmul.f32 %v2107, %v2139
  %v2144 = vxor.u32 %v2094, 2147483648
  %v2145 = vxor.u32 %v2095, 2147483648
  %v2146 = vmul.f32 %v2144, 1.442695
  %v2147 = vpow.pop %v2146
  %v2148 = vmul.f32 %v2145, 1.442695
  %v2149 = vpow.pop %v2148
  %v2150 = vadd.f32 %v2147, 1.0
  %v2151 = vadd.f32 %v2149, 1.0
  %v2152 = vrcp.pop %v2150
  %v2153 = vmul.f32 1.0, %v2152
  %v2154 = vrcp.pop %v2151
  %v2155 = vmul.f32 1.0, %v2154
  %v2156 = vtanh.pop %v2094
  %v2157 = vtanh.pop %v2095
  %v2158 = vmul.f32 %v2153, %v1971
  %v2159 = vmul.f32 %v2155, %v1972
  %2162 = vrot.lane.b32.xlu0 %v2156, 32
  %v2163 = vpop.permute.xlu0 %2162
  %2164 = vrot.lane.b32.xlu0 %v2157, 32
  %v2165 = vpop.permute.xlu0 %2164
  %v2168 = vmul.f32 %v2153, %v2163
  %v2169 = vmul.f32 %v2155, %v2165
  %2172 = vrot.lane.b32.xlu0 %v2168, 32
  %v2173 = vpop.permute.xlu0 %2172
  %2174 = vrot.lane.b32.xlu0 %v2169, 32
  %v2175 = vpop.permute.xlu0 %2174
  %v2178 = vadd.f32 %v2158, %v2173
  %v2179 = vadd.f32 %v2159, %v2175
  %v2180 = vtanh.pop %v2178
  %v2181 = vtanh.pop %v2179
  %2184 = vrot.lane.b32.xlu0 %v2180, 32
  %v2185 = vpop.permute.xlu0 %2184
  %2186 = vrot.lane.b32.xlu0 %v2181, 32
  %v2187 = vpop.permute.xlu0 %2186
  %v2190 = vmul.f32 %v2153, %v2185
  %v2191 = vmul.f32 %v2155, %v2187
  %v2192 = vpack.c.bf16 %v2143, %v2142
  %2194 = vrot.lane.b32.xlu0 %v2192, 64
  %v2195 = vpop.permute.xlu0 %2194
  %2197 = vst.msk [vmem:[%s740] sm:$0xff] %vm528, %v2195
  %v2198 = vpack.c.bf16 %v2191, %v2190
  %2200 = vrot.lane.b32.xlu0 %v2198, 96
  %v2201 = vpop.permute.xlu0 %2200
  %2203 = vst.msk [vmem:[#allocation4] sm:$0xff] %vm741, %v2201
  %v2204 = vld [vmem:[#allocation4] sm:$0xff]
  %v2205 = vld [vmem:[#allocation4 + $0x8] sm:$0xff]
  %v2206 = vld [vmem:[#allocation4 + $0x10] sm:$0xff]
  %v2207 = vld [vmem:[#allocation4 + $0x18] sm:$0xff]
  %v2208 = vld [vmem:[#allocation4 + $0x20] sm:$0xff]
  %v2209 = vld [vmem:[#allocation4 + $0x28] sm:$0xff]
  %v2210 = vld [vmem:[#allocation4 + $0x30] sm:$0xff]
  %v2211 = vld [vmem:[#allocation4 + $0x38] sm:$0xff]
  %v2212 = vld [vmem:[%s7] sm:$0xf]
  %v2213 = vld [vmem:[%s7 + $0x4] sm:$0xf]
  %v2214 = vld [vmem:[%s7 + $0x8] sm:$0xf]
  %v2215 = vld [vmem:[%s7 + $0xc] sm:$0xf]
  %v2216 = vld [vmem:[%s7 + $0x10] sm:$0xf]
  %v2217 = vld [vmem:[%s7 + $0x14] sm:$0xf]
  %v2218 = vld [vmem:[%s7 + $0x18] sm:$0xf]
  %v2219 = vld [vmem:[%s7 + $0x1c] sm:$0xf]
  %v2228 = vunpack.c.l.b16 %v2212
  %v2229 = vunpack.c.l.b16 %v2213
  %v2230 = vunpack.c.l.b16 %v2214
  %v2231 = vunpack.c.l.b16 %v2215
  %v2232 = vunpack.c.l.b16 %v2216
  %v2233 = vunpack.c.l.b16 %v2217
  %v2234 = vunpack.c.l.b16 %v2218
  %v2235 = vunpack.c.l.b16 %v2219
  %v2236 = vpack.c.b16 %v2229, %v2228
  %v2237 = vpack.c.b16 %v2231, %v2230
  %v2238 = vpack.c.b16 %v2233, %v2232
  %v2239 = vpack.c.b16 %v2235, %v2234
  %vm2244 = vcmask 523264
  %v2246 = vsel %vm2244, %v2204, 0
  %v2249 = vsel %vm2244, %v2205, 0
  %v2252 = vsel %vm2244, %v2206, 0
  %v2255 = vsel %vm2244, %v2207, 0
  %v2258 = vsel %vm2244, %v2208, 0
  %v2261 = vsel %vm2244, %v2209, 0
  %v2264 = vsel %vm2244, %v2210, 0
  %v2267 = vsel %vm2244, %v2211, 0
  %2269 = vmatprep.subr.bf16.mxu0 0
  %2270 = vmatpush1.bf16.msra.mxu0 %v2236
  %2271 = vmatprep.subr.bf16.mxu0 0
  %2272 = vmatpush1.bf16.msra.mxu0 %v2237
  %2273 = vmatprep.subr.bf16.mxu0 0
  %2274 = vmatpush1.bf16.msra.mxu0 %v2238
  %2275 = vmatprep.subr.bf16.mxu0 0
  %2276 = vmatpush1.bf16.msra.mxu0 %v2239
  %2277 = vmatprep.subr.bf16.mxu0 0
  %2278 = vmatpush1.bf16.msra.mxu0 0
  %2279 = vmatprep.subr.bf16.mxu0 0
  %2280 = vmatpush1.bf16.msra.mxu0 0
  %2281 = vmatprep.subr.bf16.mxu0 0
  %2282 = vmatpush1.bf16.msra.mxu0 0
  %2283 = vmatprep.subr.bf16.mxu0 0
  %2284 = vmatpush1.bf16.msra.mxu0 0
  %2285 = vmatprep.subr.bf16.mxu0 0
  %2286 = vmatpush1.bf16.msra.mxu0 0
  %2287 = vmatprep.subr.bf16.mxu0 0
  %2288 = vmatpush1.bf16.msra.mxu0 0
  %2289 = vmatprep.subr.bf16.mxu0 0
  %2290 = vmatpush1.bf16.msra.mxu0 0
  %2291 = vmatprep.subr.bf16.mxu0 0
  %2292 = vmatpush1.bf16.msra.mxu0 0
  %2293 = vmatprep.subr.bf16.mxu0 0
  %2294 = vmatpush1.bf16.msra.mxu0 0
  %2295 = vmatprep.subr.bf16.mxu0 0
  %2296 = vmatpush1.bf16.msra.mxu0 0
  %2297 = vmatprep.subr.bf16.mxu0 0
  %2298 = vmatpush1.bf16.msra.mxu0 0
  %2299 = vmatprep.subr.bf16.mxu0 0
  %2300 = vmatpush1.bf16.msra.mxu0 0
  %2301 = vmatprep.mubr.bf16.mxu0 0
  %2302 = vmatmul.mubr.bf16.gmra.mrb[0].mxu0 %v2246
  %v2303 = vpop.f32.mrb[0].mxu0
  %v2304 = vadd.f32 0.0, %v2303
  %v2305 = vpop.f32.mrb[0].mxu0
  %v2306 = vpop.f32.mrb[0].mxu0
  %v2307 = vadd.f32 0.0, %v2306
  %v2308 = vpop.f32.mrb[0].mxu0
  %2309 = vmatprep.mubr.bf16.mxu0 0
  %2310 = vmatmul.mubr.bf16.gmra.mrb[0].mxu0 %v2249
  %v2311 = vpop.f32.mrb[0].mxu0
  %v2312 = vadd.f32 0.0, %v2311
  %v2313 = vpop.f32.mrb[0].mxu0
  %v2314 = vpop.f32.mrb[0].mxu0
  %v2315 = vadd.f32 0.0, %v2314
  %v2316 = vpop.f32.mrb[0].mxu0
  %2317 = vmatprep.mubr.bf16.mxu0 0
  %2318 = vmatmul.mubr.bf16.gmra.mrb[0].mxu0 %v2252
  %v2319 = vpop.f32.mrb[0].mxu0
  %v2320 = vadd.f32 0.0, %v2319
  %v2321 = vpop.f32.mrb[0].mxu0
  %v2322 = vpop.f32.mrb[0].mxu0
  %v2323 = vadd.f32 0.0, %v2322
  %v2324 = vpop.f32.mrb[0].mxu0
  %2325 = vmatprep.mubr.bf16.mxu0 0
  %2326 = vmatmul.mubr.bf16.gmra.mrb[0].mxu0 %v2255
  %v2327 = vpop.f32.mrb[0].mxu0
  %v2328 = vadd.f32 0.0, %v2327
  %v2329 = vpop.f32.mrb[0].mxu0
  %v2330 = vpop.f32.mrb[0].mxu0
  %v2331 = vadd.f32 0.0, %v2330
  %v2332 = vpop.f32.mrb[0].mxu0
  %2333 = vmatprep.mubr.bf16.mxu0 0
  %2334 = vmatmul.mubr.bf16.gmra.mrb[0].mxu0 %v2258
  %v2335 = vpop.f32.mrb[0].mxu0
  %v2336 = vadd.f32 0.0, %v2335
  %v2337 = vpop.f32.mrb[0].mxu0
  %v2338 = vpop.f32.mrb[0].mxu0
  %v2339 = vadd.f32 0.0, %v2338
  %v2340 = vpop.f32.mrb[0].mxu0
  %2341 = vmatprep.mubr.bf16.mxu0 0
  %2342 = vmatmul.mubr.bf16.gmra.mrb[0].mxu0 %v2261
  %v2343 = vpop.f32.mrb[0].mxu0
  %v2344 = vadd.f32 0.0, %v2343
  %v2345 = vpop.f32.mrb[0].mxu0
  %v2346 = vpop.f32.mrb[0].mxu0
  %v2347 = vadd.f32 0.0, %v2346
  %v2348 = vpop.f32.mrb[0].mxu0
  %2349 = vmatprep.mubr.bf16.mxu0 0
  %2350 = vmatmul.mubr.bf16.gmra.mrb[0].mxu0 %v2264
  %v2351 = vpop.f32.mrb[0].mxu0
  %v2352 = vadd.f32 0.0, %v2351
  %v2353 = vpop.f32.mrb[0].mxu0
  %v2354 = vpop.f32.mrb[0].mxu0
  %v2355 = vadd.f32 0.0, %v2354
  %v2356 = vpop.f32.mrb[0].mxu0
  %2357 = vmatprep.mubr.bf16.mxu0 0
  %2358 = vmatmul.mubr.bf16.gmra.mrb[0].mxu0 %v2267
  %v2359 = vpop.f32.mrb[0].mxu0
  %v2360 = vadd.f32 0.0, %v2359
  %v2361 = vpop.f32.mrb[0].mxu0
  %v2362 = vpop.f32.mrb[0].mxu0
  %v2363 = vadd.f32 0.0, %v2362
  %v2364 = vpop.f32.mrb[0].mxu0
  %2365 = vdwg.mxu0
  %v2366 = vld [vmem:[%s8] sm:$0x1]
  %v2368 = vlaneseq
  %v2369 = vshrl.u32 %v2368, 7
  %v2370 = vsub.s32 0, %v2369
  %v2371 = vrot.slane %v2366, %v2370
  %v2373 = vadd.f32 %v2304, %v2371
  %v2374 = vadd.f32 %v2307, %v2371
  %v2375 = vadd.f32 %v2312, %v2371
  %v2376 = vadd.f32 %v2315, %v2371
  %v2377 = vadd.f32 %v2320, %v2371
  %v2378 = vadd.f32 %v2323, %v2371
  %v2379 = vadd.f32 %v2328, %v2371
  %v2380 = vadd.f32 %v2331, %v2371
  %v2381 = vadd.f32 %v2336, %v2371
  %v2382 = vadd.f32 %v2339, %v2371
  %v2383 = vadd.f32 %v2344, %v2371
  %v2384 = vadd.f32 %v2347, %v2371
  %v2385 = vadd.f32 %v2352, %v2371
  %v2386 = vadd.f32 %v2355, %v2371
  %v2387 = vadd.f32 %v2360, %v2371
  %v2388 = vadd.f32 %v2363, %v2371
  %v2389 = vld [vmem:[%s0] sm:$0xff]
  %v2390 = vld [vmem:[%s0 + $0x8] sm:$0xff]
  %v2391 = vld [vmem:[%s0 + $0x10] sm:$0xff]
  %v2392 = vld [vmem:[%s0 + $0x18] sm:$0xff]
  %v2393 = vld [vmem:[%s0 + $0x20] sm:$0xff]
  %v2394 = vld [vmem:[%s0 + $0x28] sm:$0xff]
  %v2395 = vld [vmem:[%s0 + $0x30] sm:$0xff]
  %v2396 = vld [vmem:[%s0 + $0x38] sm:$0xff]
  %v2397 = vld [vmem:[%s0 + $0x40] sm:$0xff]
  %v2398 = vld [vmem:[%s0 + $0x48] sm:$0xff]
  %v2399 = vld [vmem:[%s0 + $0x50] sm:$0xff]
  %v2400 = vld [vmem:[%s0 + $0x58] sm:$0xff]
  %v2401 = vld [vmem:[%s0 + $0x60] sm:$0xff]
  %v2402 = vld [vmem:[%s0 + $0x68] sm:$0xff]
  %v2403 = vld [vmem:[%s0 + $0x70] sm:$0xff]
  %v2404 = vld [vmem:[%s0 + $0x78] sm:$0xff]
  %v2405 = vadd.f32 %v2373, %v2389
  %v2406 = vadd.f32 %v2374, %v2390
  %v2407 = vadd.f32 %v2375, %v2391
  %v2408 = vadd.f32 %v2376, %v2392
  %v2409 = vadd.f32 %v2377, %v2393
  %v2410 = vadd.f32 %v2378, %v2394
  %v2411 = vadd.f32 %v2379, %v2395
  %v2412 = vadd.f32 %v2380, %v2396
  %v2413 = vadd.f32 %v2381, %v2397
  %v2414 = vadd.f32 %v2382, %v2398
  %v2415 = vadd.f32 %v2383, %v2399
  %v2416 = vadd.f32 %v2384, %v2400
  %v2417 = vadd.f32 %v2385, %v2401
  %v2418 = vadd.f32 %v2386, %v2402
  %v2419 = vadd.f32 %v2387, %v2403
  %v2420 = vadd.f32 %v2388, %v2404
  %2421 = vst.msk [vmem:[%s9] sm:$0xff] %vm49, %v2405
  %2422 = vst.msk [vmem:[%s9 + $0x8] sm:$0xff] %vm49, %v2406
  %2423 = vst.msk [vmem:[%s9 + $0x10] sm:$0xff] %vm49, %v2407
  %2424 = vst.msk [vmem:[%s9 + $0x18] sm:$0xff] %vm49, %v2408
  %2425 = vst.msk [vmem:[%s9 + $0x20] sm:$0xff] %vm49, %v2409
  %2426 = vst.msk [vmem:[%s9 + $0x28] sm:$0xff] %vm49, %v2410
  %2427 = vst.msk [vmem:[%s9 + $0x30] sm:$0xff] %vm49, %v2411
  %2428 = vst.msk [vmem:[%s9 + $0x38] sm:$0xff] %vm49, %v2412
  %2429 = vst.msk [vmem:[%s9 + $0x40] sm:$0xff] %vm49, %v2413
  %2430 = vst.msk [vmem:[%s9 + $0x48] sm:$0xff] %vm49, %v2414
  %2431 = vst.msk [vmem:[%s9 + $0x50] sm:$0xff] %vm49, %v2415
  %2432 = vst.msk [vmem:[%s9 + $0x58] sm:$0xff] %vm49, %v2416
  %2433 = vst.msk [vmem:[%s9 + $0x60] sm:$0xff] %vm49, %v2417
  %2434 = vst.msk [vmem:[%s9 + $0x68] sm:$0xff] %vm49, %v2418
  %2435 = vst.msk [vmem:[%s9 + $0x70] sm:$0xff] %vm49, %v2419
  %2436 = vst.msk [vmem:[%s9 + $0x78] sm:$0xff] %vm49, %v2420
  // Predicated region
  $region38: #{residual_rnn_forward.1} parent=0 // pred_check
    _
  $region39: #{residual_rnn_forward.1} parent=0 // pred_check_branch
    %2438 = sbr.rel (0) target = $region41
  $region40: #{residual_rnn_forward.1} parent=0 // pred_region
    _
  $region41: #{residual_rnn_forward.1} parent=0 // pred_fallthru
    _
  // Predicated region
  $region42: #{residual_rnn_forward.1} parent=0 // pred_check
    _
  $region43: #{residual_rnn_forward.1} parent=0 // pred_check_branch
    %2440 = sbr.rel (0) target = $region45
  $region44: #{residual_rnn_forward.1} parent=0 // pred_region
    _
  $region45: #{residual_rnn_forward.1} parent=0 // pred_fallthru
    _

</llo_original>
